<compile_context>
chip_gen: v6e
topology: v6e:2x2x1
jax: 0.10.0
libtpu: 0.0.40
codegen_flags: <defaults>
</compile_context>

<pallas_src>
import functools

import jax
import jax.numpy as jnp
from jax import lax
from jax.experimental import pallas as pl
from jax.experimental.pallas import tpu as pltpu

EPS = 1e-5                     # nn.BatchNorm2d default eps
LANE = 128                     # output channels padded to a lane multiple
TM_MAX = 1024                  # max row tile
A_BLOCK_BYTES = 2 * 1024 * 1024  # cap on the (bm, K) bf16 A tile


def _round_up(x, m):
    return (x + m - 1) // m * m


def _pick_bm(M, K):
    """Largest row tile (fewest grid steps) with the bf16 A tile <= ~2 MiB."""
    cap = max(128, min(TM_MAX, A_BLOCK_BYTES // (2 * K)))
    cap = (cap // 128) * 128
    return min(cap, _round_up(M, 8))


# ----------------------------- Pallas kernels ------------------------------

def _matmul_stats_kernel(a_ref, b_ref, y_ref, st_ref):
    """bf16 x bf16 -> f32 acc; store bf16 y plus packed per-tile stats.

    st block layout: row 0 = column sums, rows 1.. = column sums of squares.
    """
    acc = jnp.dot(a_ref[0], b_ref[0], preferred_element_type=jnp.float32)
    y_ref[0] = acc.astype(y_ref.dtype)
    s = jnp.sum(acc, axis=0, keepdims=True)            # (1, Np)
    q = jnp.sum(acc * acc, axis=0, keepdims=True)      # (1, Np)
    shp = st_ref.shape[1:]                             # (8, Np)
    rid = lax.broadcasted_iota(jnp.int32, shp, 0)
    st_ref[0] = jnp.where(rid == 0,
                          jnp.broadcast_to(s, shp),
                          jnp.broadcast_to(q, shp))


def _matmul_tanh_kernel(a_ref, b_ref, y_ref):
    acc = jnp.dot(a_ref[0], b_ref[0], preferred_element_type=jnp.float32)
    y_ref[0] = jnp.tanh(acc).astype(y_ref.dtype)


def _mosaic_params():
    return pltpu.CompilerParams(
        dimension_semantics=("parallel", "parallel"),
        vmem_limit_bytes=32 * 1024 * 1024)


def pallas_matmul_stats(a, b, bm):
    """a: (P, Mp, K) bf16, b: (P, K, Np) bf16 ->
       y (P, Mp, Np) bf16, stats (P, nt*8, Np) f32 (row0=sum, row1=sumsq)."""
    P, Mp, K = a.shape
    Np = b.shape[2]
    nt = Mp // bm
    return pl.pallas_call(
        _matmul_stats_kernel,
        out_shape=(jax.ShapeDtypeStruct((P, Mp, Np), jnp.bfloat16),
                   jax.ShapeDtypeStruct((P, nt * 8, Np), jnp.float32)),
        grid_spec=pltpu.PrefetchScalarGridSpec(
            num_scalar_prefetch=0,
            grid=(P, nt),
            in_specs=[pl.BlockSpec((1, bm, K), lambda p, i: (p, i, 0)),
                      pl.BlockSpec((1, K, Np), lambda p, i: (p, 0, 0))],
            out_specs=(pl.BlockSpec((1, bm, Np), lambda p, i: (p, i, 0)),
                       pl.BlockSpec((1, 8, Np), lambda p, i: (p, i, 0)))),
        compiler_params=_mosaic_params(),
    )(a, b)


def pallas_matmul_tanh(a, b, bm):
    """a: (P, Mp, K) bf16, b: (P, K, Np) bf16 -> tanh(a @ b) bf16 (P, Mp, Np)."""
    P, Mp, K = a.shape
    Np = b.shape[2]
    nt = Mp // bm
    return pl.pallas_call(
        _matmul_tanh_kernel,
        out_shape=jax.ShapeDtypeStruct((P, Mp, Np), jnp.bfloat16),
        grid_spec=pltpu.PrefetchScalarGridSpec(
            num_scalar_prefetch=0,
            grid=(P, nt),
            in_specs=[pl.BlockSpec((1, bm, K), lambda p, i: (p, i, 0)),
                      pl.BlockSpec((1, K, Np), lambda p, i: (p, 0, 0))],
            out_specs=pl.BlockSpec((1, bm, Np), lambda p, i: (p, i, 0))),
        compiler_params=_mosaic_params(),
    )(a, b)


# ------------------------------ XLA glue ------------------------------------
# ConvTranspose2d(4, stride=2, pad=1):  out[2oh+qh, 2ow+qw] only touches the
# 2x2 kernel taps kh = 3 - qh - 2*dh, kw = 3 - qw - 2*dw (dh, dw in {0,1}),
# applied to xpad[oh+qh+dh, ow+qw+dw] where xpad is x zero-padded by 1.

def parity_patches(x):
    """x: (N, H, W, C) NHWC -> (4, N*H*W, 4*C) bf16, parity q = 2*qh + qw."""
    N, H, W, C = x.shape
    xp = jnp.pad(x, ((0, 0), (1, 1), (1, 1), (0, 0)))
    groups = []
    for qh in range(2):
        for qw in range(2):
            taps = [xp[:, qh + dh:qh + dh + H, qw + dw:qw + dw + W, :]
                    for dh in range(2) for dw in range(2)]
            p = jnp.stack(taps, axis=3)                 # (N, H, W, 4, C)
            groups.append(p.reshape(N * H * W, 4 * C))
    return jnp.stack(groups, axis=0)


def parity_weight_matrices(w, n_pad):
    """(Cin, Cout, 4, 4) -> (4, 4*Cin, n_pad) bf16; rows ordered (dh, dw, ci)."""
    Cin, Cout, K, _ = w.shape
    mats = []
    for qh in range(2):
        for qw in range(2):
            taps = [w[:, :, 3 - qh - 2 * dh, 3 - qw - 2 * dw]
                    for dh in range(2) for dw in range(2)]
            m = jnp.stack(taps, axis=0).reshape(4 * Cin, Cout)
            mats.append(jnp.pad(m, ((0, 0), (0, n_pad - Cout))))
    return jnp.stack(mats, axis=0).astype(jnp.bfloat16)


def layer0_weight_matrix(w, n_pad):
    """(nz, Cout, 4, 4) -> (1, nz, n_pad) bf16, columns ordered (kh, kw, co)."""
    nzc, Cout, K, _ = w.shape
    m = w.transpose(0, 2, 3, 1).reshape(nzc, K * K * Cout)
    m = jnp.pad(m, ((0, 0), (0, n_pad - K * K * Cout)))
    return m[None].astype(jnp.bfloat16)


def pack_params(params):
    """Hoisted weight preprocessing (reorder/pad/bf16) — run once, eagerly."""
    ws = params["w"]
    n_layers = len(ws)
    bmats, gammas, betas, couts = [], [], [], []
    for li, w in enumerate(ws):
        Cout = w.shape[1]
        couts.append(Cout)
        if li == 0:
            bmats.append(layer0_weight_matrix(w, _round_up(16 * Cout, LANE)))
        else:
            bmats.append(parity_weight_matrices(w, _round_up(Cout, LANE)))
        if li < n_layers - 1:
            gammas.append(params["gamma"][li])
            betas.append(params["beta"][li])
    return {"b": bmats, "gamma": gammas, "beta": betas}, tuple(couts)


def _bn_relu(y, tot, tot2, count, gamma, beta):
    """Training-mode BN (biased var from fused kernel stats) + ReLU in jnp,
    so XLA fuses it into the following pad / patch gather."""
    mean = tot / count
    var = jnp.maximum(tot2 / count - mean * mean, 0.0)
    scale = gamma * lax.rsqrt(var + EPS)
    shift = beta - mean * scale
    return jnp.maximum(y * scale + shift, 0.0)


def generator_forward(z, packed, couts):
    """z: (N, nz, 1, 1) f32 -> (N, nc, 64, 64) f32 in [-1, 1]."""
    N = z.shape[0]
    n_layers = len(packed["b"])

    # ---- layer 0: ConvTranspose(nz, C0, 4, 1, 0) on a 1x1 input = one matmul
    C0 = couts[0]
    b0 = packed["b"][0]                                   # (1, nz, ncols0)
    a0 = z.reshape(N, -1).astype(jnp.bfloat16)            # (N, nz)
    bm0 = _round_up(N, 8)
    a0 = jnp.pad(a0, ((0, bm0 - N), (0, 0)))[None]        # (1, bm0, nz)
    y0, st0 = pallas_matmul_stats(a0, b0, bm0)
    ncols0 = 16 * C0
    tot = st0[0, 0, :ncols0].reshape(16, C0).sum(axis=0)
    tot2 = st0[0, 1, :ncols0].reshape(16, C0).sum(axis=0)
    yv = y0[0, :N, :ncols0].astype(jnp.float32).reshape(N, 4, 4, C0)
    x = _bn_relu(yv, tot, tot2, 16.0 * N,
                 packed["gamma"][0], packed["beta"][0]).astype(jnp.bfloat16)

    # ---- layers 1..: ConvTranspose(Cin, Cout, 4, 2, 1) via parity decomposition
    for li in range(1, n_layers):
        Cout = couts[li]
        bq = packed["b"][li]                              # (4, 4*Cin, Np)
        Np = bq.shape[2]
        Nb, H, W, Cin = x.shape
        M = Nb * H * W
        Kq = 4 * Cin
        patches = parity_patches(x)                       # (4, M, Kq) bf16
        bm = _pick_bm(M, Kq)
        Mp = _round_up(M, bm)
        if Mp != M:
            patches = jnp.pad(patches, ((0, 0), (0, Mp - M), (0, 0)))

        if li == n_layers - 1:
            y = pallas_matmul_tanh(patches, bq, bm)       # (4, Mp, Np) bf16
            yv = y[:, :M, :Cout].astype(jnp.float32)
            out = yv.reshape(2, 2, Nb, H, W, Cout)
            # (qh, qw, n, oh, ow, c) -> (n, c, 2oh+qh, 2ow+qw)  [NCHW]
            out = out.transpose(2, 5, 3, 0, 4, 1).reshape(Nb, Cout, 2 * H, 2 * W)
            return out

        y, st = pallas_matmul_stats(patches, bq, bm)      # y (4, Mp, Np) bf16
        nt = Mp // bm
        stv = st.reshape(4, nt, 8, Np)
        tot = stv[:, :, 0, :Cout].sum(axis=(0, 1))        # zero pad rows add 0
        tot2 = stv[:, :, 1, :Cout].sum(axis=(0, 1))
        yv = y[:, :M, :Cout].astype(jnp.float32)
        xv = _bn_relu(yv, tot, tot2, 4.0 * M,
                      packed["gamma"][li], packed["beta"][li]).astype(jnp.bfloat16)
        # (qh, qw, n, oh, ow, c) -> (n, 2oh+qh, 2ow+qw, c)  [NHWC for next layer]
        x = xv.reshape(2, 2, Nb, H, W, Cout).transpose(2, 3, 0, 4, 1, 5)
        x = x.reshape(Nb, 2 * H, 2 * W, Cout)
    return None


def generator_forward_ref(z, params):
    """Independent pure-JAX f32 reference (lax transposed conv + training BN)."""
    x = z
    n_layers = len(params["w"])
    for li in range(n_layers):
        w = params["w"][li].astype(jnp.float32)
        K = w.shape[2]
        stride, pad = (1, 0) if li == 0 else (2, 1)
        y = lax.conv_general_dilated(
            x, jnp.flip(w, (2, 3)),
            window_strides=(1, 1),
            padding=[(K - 1 - pad, K - 1 - pad)] * 2,
            lhs_dilation=(stride, stride),
            dimension_numbers=("NCHW", "IOHW", "NCHW"))
        if li == n_layers - 1:
            x = jnp.tanh(y)
        else:
            mean = jnp.mean(y, axis=(0, 2, 3), keepdims=True)
            var = jnp.var(y, axis=(0, 2, 3), keepdims=True)
            yn = (y - mean) * lax.rsqrt(var + EPS)
            yn = yn * params["gamma"][li][None, :, None, None] \
                 + params["beta"][li][None, :, None, None]
            x = jnp.maximum(yn, 0.0)
    return x


def init_params(key, nz, nc, ngf):
    chans = [nz, ngf * 8, ngf * 4, ngf * 2, ngf, nc]
    ws, gammas, betas = [], [], []
    for i in range(5):
        key, k1, k2, k3 = jax.random.split(key, 4)
        cin, cout = chans[i], chans[i + 1]
        ws.append(0.02 * jax.random.normal(k1, (cin, cout, 4, 4), jnp.float32))
        if i < 4:  # BN only on the first 4 blocks
            gammas.append(1.0 + 0.1 * jax.random.normal(k2, (cout,), jnp.float32))
            betas.append(0.1 * jax.random.normal(k3, (cout,), jnp.float32))
    return {"w": ws, "gamma": gammas, "beta": betas}


if __name__ == "__main__":
    nz, nc, ngf, batch = 8, 3, 8, 2
    key = jax.random.PRNGKey(0)
    kp, kz = jax.random.split(key)
    params = init_params(kp, nz, nc, ngf)
    z = jax.random.normal(kz, (batch, nz, 1, 1), jnp.float32)

    packed, couts = pack_params(params)           # weight prep hoisted out of jit
    fwd = jax.jit(functools.partial(generator_forward, couts=couts))
    out = jax.block_until_ready(fwd(z, packed))
    assert out.shape == (batch, nc, 64, 64), out.shape
    assert bool(jnp.all(jnp.isfinite(out)))

    ref = generator_forward_ref(z, params)
    assert bool(jnp.allclose(out, ref, atol=5e-2, rtol=5e-2)), \
        float(jnp.max(jnp.abs(out - ref)))

    print("KERNEL_OK")
</pallas_src>

<mosaic_0001>
module attributes {stable_mosaic.version = 11 : i64} {
  func.func @_matmul_stats_kernel(%arg0: i32, %arg1: i32, %arg2: memref<1x8x8xbf16, #tpu.memory_space<vmem>>, %arg3: memref<1x8x1024xbf16, #tpu.memory_space<vmem>>, %arg4: memref<1x8x1024xbf16, #tpu.memory_space<vmem>>, %arg5: memref<1x8x1024xf32, #tpu.memory_space<vmem>>) attributes {dimension_semantics = [#tpu.dimension_semantics<parallel>, #tpu.dimension_semantics<parallel>], iteration_bounds = array<i64: 1, 1>, scalar_prefetch = 0 : i64, scratch_operands = 0 : i64, tpu.core_type = #tpu.core_type<tc>, window_params = [{transform_indices = @transform_0, window_bounds = array<i64: 1, 8, 8>}, {transform_indices = @transform_1, window_bounds = array<i64: 1, 8, 1024>}, {transform_indices = @transform_2, window_bounds = array<i64: 1, 8, 1024>}, {transform_indices = @transform_3, window_bounds = array<i64: 1, 8, 1024>}]} {
    %c0 = arith.constant 0 : index
    %c0_0 = arith.constant 0 : index
    %c0_1 = arith.constant 0 : index
    %0 = vector.load %arg2[%c0, %c0_0, %c0_1] : memref<1x8x8xbf16, #tpu.memory_space<vmem>>, vector<1x8x8xbf16>
    %1 = vector.shape_cast %0 : vector<1x8x8xbf16> to vector<8x8xbf16>
    %c0_2 = arith.constant 0 : index
    %c0_3 = arith.constant 0 : index
    %c0_4 = arith.constant 0 : index
    %2 = vector.load %arg3[%c0_2, %c0_3, %c0_4] : memref<1x8x1024xbf16, #tpu.memory_space<vmem>>, vector<1x8x1024xbf16>
    %3 = vector.shape_cast %2 : vector<1x8x1024xbf16> to vector<8x1024xbf16>
    %cst = arith.constant dense<0.000000e+00> : vector<8x1024xf32>
    %4 = tpu.matmul %1, %3, %cst {dimension_numbers = #tpu.dot_dimension_numbers<[1], [0], [0], [1], [0, 0, 1, 1], [], []>} : vector<8x8xbf16>, vector<8x1024xbf16>, vector<8x1024xf32> -> vector<8x1024xf32>
    %5 = arith.truncf %4 : vector<8x1024xf32> to vector<8x1024xbf16>
    %c0_5 = arith.constant 0 : index
    %c0_6 = arith.constant 0 : index
    %c0_7 = arith.constant 0 : index
    %6 = vector.load %arg4[%c0_5, %c0_6, %c0_7] : memref<1x8x1024xbf16, #tpu.memory_space<vmem>>, vector<1x8x1024xbf16>
    %7 = vector.shape_cast %6 : vector<1x8x1024xbf16> to vector<8x1024xbf16>
    %8 = vector.shape_cast %5 : vector<8x1024xbf16> to vector<1x8x1024xbf16>
    tpu.vector_store %arg4[%c0_5, %c0_6, %c0_7], %8 {strides = array<i32>} : memref<1x8x1024xbf16, #tpu.memory_space<vmem>>, vector<1x8x1024xbf16>,
    %cst_8 = arith.constant dense<0.000000e+00> : vector<1024xf32>
    %9 = vector.multi_reduction <add>, %4, %cst_8 [0] : vector<8x1024xf32> to vector<1024xf32>
    %10 = vector.shape_cast %9 : vector<1024xf32> to vector<1x1024xf32>
    %11 = arith.mulf %4, %4 : vector<8x1024xf32>
    %cst_9 = arith.constant dense<0.000000e+00> : vector<1024xf32>
    %12 = vector.multi_reduction <add>, %11, %cst_9 [0] : vector<8x1024xf32> to vector<1024xf32>
    %13 = vector.shape_cast %12 : vector<1024xf32> to vector<1x1024xf32>
    %14 = tpu.iota {dimensions = array<i32: 0>} : vector<8x1024xi32>
    %c0_i32 = arith.constant 0 : i32
    %15 = vector.broadcast %c0_i32 : i32 to vector<8x1024xi32>
    %16 = arith.cmpi eq, %14, %15 : vector<8x1024xi32>
    %17 = vector.shape_cast %10 : vector<1x1024xf32> to vector<1x1024xf32>
    %18 = vector.broadcast %17 : vector<1x1024xf32> to vector<8x1024xf32>
    %19 = vector.shape_cast %13 : vector<1x1024xf32> to vector<1x1024xf32>
    %20 = vector.broadcast %19 : vector<1x1024xf32> to vector<8x1024xf32>
    %21 = arith.select %16, %18, %20 : vector<8x1024xi1>, vector<8x1024xf32>
    %c0_10 = arith.constant 0 : index
    %c0_11 = arith.constant 0 : index
    %c0_12 = arith.constant 0 : index
    %22 = vector.load %arg5[%c0_10, %c0_11, %c0_12] : memref<1x8x1024xf32, #tpu.memory_space<vmem>>, vector<1x8x1024xf32>
    %23 = vector.shape_cast %22 : vector<1x8x1024xf32> to vector<8x1024xf32>
    %24 = vector.shape_cast %21 : vector<8x1024xf32> to vector<1x8x1024xf32>
    tpu.vector_store %arg5[%c0_10, %c0_11, %c0_12], %24 {strides = array<i32>} : memref<1x8x1024xf32, #tpu.memory_space<vmem>>, vector<1x8x1024xf32>,
    return
  }
  func.func @transform_0(%arg0: i32, %arg1: i32) -> (i32, i32, i32) {
    %c0_i32 = arith.constant 0 : i32
    %c0_i32_0 = arith.constant 0 : i32
    return %arg0, %arg1, %c0_i32 : i32, i32, i32
  }
  func.func @transform_1(%arg0: i32, %arg1: i32) -> (i32, i32, i32) {
    %c0_i32 = arith.constant 0 : i32
    %c0_i32_0 = arith.constant 0 : i32
    %c0_i32_1 = arith.constant 0 : i32
    return %arg0, %c0_i32, %c0_i32_0 : i32, i32, i32
  }
  func.func @transform_2(%arg0: i32, %arg1: i32) -> (i32, i32, i32) {
    %c0_i32 = arith.constant 0 : i32
    %c0_i32_0 = arith.constant 0 : i32
    return %arg0, %arg1, %c0_i32 : i32, i32, i32
  }
  func.func @transform_3(%arg0: i32, %arg1: i32) -> (i32, i32, i32) {
    %c0_i32 = arith.constant 0 : i32
    %c0_i32_0 = arith.constant 0 : i32
    return %arg0, %arg1, %c0_i32 : i32, i32, i32
  }
}

module attributes {stable_mosaic.version = 11 : i64} {
  func.func @_matmul_stats_kernel(%arg0: i32, %arg1: i32, %arg2: memref<1x32x256xbf16, #tpu.memory_space<vmem>>, %arg3: memref<1x256x128xbf16, #tpu.memory_space<vmem>>, %arg4: memref<1x32x128xbf16, #tpu.memory_space<vmem>>, %arg5: memref<1x8x128xf32, #tpu.memory_space<vmem>>) attributes {dimension_semantics = [#tpu.dimension_semantics<parallel>, #tpu.dimension_semantics<parallel>], iteration_bounds = array<i64: 4, 1>, scalar_prefetch = 0 : i64, scratch_operands = 0 : i64, tpu.core_type = #tpu.core_type<tc>, window_params = [{transform_indices = @transform_0, window_bounds = array<i64: 1, 32, 256>}, {transform_indices = @transform_1, window_bounds = array<i64: 1, 256, 128>}, {transform_indices = @transform_2, window_bounds = array<i64: 1, 32, 128>}, {transform_indices = @transform_3, window_bounds = array<i64: 1, 8, 128>}]} {
    %c0 = arith.constant 0 : index
    %c0_0 = arith.constant 0 : index
    %c0_1 = arith.constant 0 : index
    %0 = vector.load %arg2[%c0, %c0_0, %c0_1] : memref<1x32x256xbf16, #tpu.memory_space<vmem>>, vector<1x32x256xbf16>
    %1 = vector.shape_cast %0 : vector<1x32x256xbf16> to vector<32x256xbf16>
    %c0_2 = arith.constant 0 : index
    %c0_3 = arith.constant 0 : index
    %c0_4 = arith.constant 0 : index
    %2 = vector.load %arg3[%c0_2, %c0_3, %c0_4] : memref<1x256x128xbf16, #tpu.memory_space<vmem>>, vector<1x256x128xbf16>
    %3 = vector.shape_cast %2 : vector<1x256x128xbf16> to vector<256x128xbf16>
    %cst = arith.constant dense<0.000000e+00> : vector<32x128xf32>
    %4 = tpu.matmul %1, %3, %cst {dimension_numbers = #tpu.dot_dimension_numbers<[1], [0], [0], [1], [0, 0, 1, 1], [], []>} : vector<32x256xbf16>, vector<256x128xbf16>, vector<32x128xf32> -> vector<32x128xf32>
    %5 = arith.truncf %4 : vector<32x128xf32> to vector<32x128xbf16>
    %c0_5 = arith.constant 0 : index
    %c0_6 = arith.constant 0 : index
    %c0_7 = arith.constant 0 : index
    %6 = vector.load %arg4[%c0_5, %c0_6, %c0_7] : memref<1x32x128xbf16, #tpu.memory_space<vmem>>, vector<1x32x128xbf16>
    %7 = vector.shape_cast %6 : vector<1x32x128xbf16> to vector<32x128xbf16>
    %8 = vector.shape_cast %5 : vector<32x128xbf16> to vector<1x32x128xbf16>
    tpu.vector_store %arg4[%c0_5, %c0_6, %c0_7], %8 {strides = array<i32>} : memref<1x32x128xbf16, #tpu.memory_space<vmem>>, vector<1x32x128xbf16>,
    %cst_8 = arith.constant dense<0.000000e+00> : vector<128xf32>
    %9 = vector.multi_reduction <add>, %4, %cst_8 [0] : vector<32x128xf32> to vector<128xf32>
    %10 = vector.shape_cast %9 : vector<128xf32> to vector<1x128xf32>
    %11 = arith.mulf %4, %4 : vector<32x128xf32>
    %cst_9 = arith.constant dense<0.000000e+00> : vector<128xf32>
    %12 = vector.multi_reduction <add>, %11, %cst_9 [0] : vector<32x128xf32> to vector<128xf32>
    %13 = vector.shape_cast %12 : vector<128xf32> to vector<1x128xf32>
    %14 = tpu.iota {dimensions = array<i32: 0>} : vector<8x128xi32>
    %c0_i32 = arith.constant 0 : i32
    %15 = vector.broadcast %c0_i32 : i32 to vector<8x128xi32>
    %16 = arith.cmpi eq, %14, %15 : vector<8x128xi32>
    %17 = vector.shape_cast %10 : vector<1x128xf32> to vector<1x128xf32>
    %18 = vector.broadcast %17 : vector<1x128xf32> to vector<8x128xf32>
    %19 = vector.shape_cast %13 : vector<1x128xf32> to vector<1x128xf32>
    %20 = vector.broadcast %19 : vector<1x128xf32> to vector<8x128xf32>
    %21 = arith.select %16, %18, %20 : vector<8x128xi1>, vector<8x128xf32>
    %c0_10 = arith.constant 0 : index
    %c0_11 = arith.constant 0 : index
    %c0_12 = arith.constant 0 : index
    %22 = vector.load %arg5[%c0_10, %c0_11, %c0_12] : memref<1x8x128xf32, #tpu.memory_space<vmem>>, vector<1x8x128xf32>
    %23 = vector.shape_cast %22 : vector<1x8x128xf32> to vector<8x128xf32>
    %24 = vector.shape_cast %21 : vector<8x128xf32> to vector<1x8x128xf32>
    tpu.vector_store %arg5[%c0_10, %c0_11, %c0_12], %24 {strides = array<i32>} : memref<1x8x128xf32, #tpu.memory_space<vmem>>, vector<1x8x128xf32>,
    return
  }
  func.func @transform_0(%arg0: i32, %arg1: i32) -> (i32, i32, i32) {
    %c0_i32 = arith.constant 0 : i32
    %c0_i32_0 = arith.constant 0 : i32
    return %arg0, %arg1, %c0_i32 : i32, i32, i32
  }
  func.func @transform_1(%arg0: i32, %arg1: i32) -> (i32, i32, i32) {
    %c0_i32 = arith.constant 0 : i32
    %c0_i32_0 = arith.constant 0 : i32
    %c0_i32_1 = arith.constant 0 : i32
    return %arg0, %c0_i32, %c0_i32_0 : i32, i32, i32
  }
  func.func @transform_2(%arg0: i32, %arg1: i32) -> (i32, i32, i32) {
    %c0_i32 = arith.constant 0 : i32
    %c0_i32_0 = arith.constant 0 : i32
    return %arg0, %arg1, %c0_i32 : i32, i32, i32
  }
  func.func @transform_3(%arg0: i32, %arg1: i32) -> (i32, i32, i32) {
    %c0_i32 = arith.constant 0 : i32
    %c0_i32_0 = arith.constant 0 : i32
    return %arg0, %arg1, %c0_i32 : i32, i32, i32
  }
}

module attributes {stable_mosaic.version = 11 : i64} {
  func.func @_matmul_stats_kernel(%arg0: i32, %arg1: i32, %arg2: memref<1x128x128xbf16, #tpu.memory_space<vmem>>, %arg3: memref<1x128x128xbf16, #tpu.memory_space<vmem>>, %arg4: memref<1x128x128xbf16, #tpu.memory_space<vmem>>, %arg5: memref<1x8x128xf32, #tpu.memory_space<vmem>>) attributes {dimension_semantics = [#tpu.dimension_semantics<parallel>, #tpu.dimension_semantics<parallel>], iteration_bounds = array<i64: 4, 1>, scalar_prefetch = 0 : i64, scratch_operands = 0 : i64, tpu.core_type = #tpu.core_type<tc>, window_params = [{transform_indices = @transform_0, window_bounds = array<i64: 1, 128, 128>}, {transform_indices = @transform_1, window_bounds = array<i64: 1, 128, 128>}, {transform_indices = @transform_2, window_bounds = array<i64: 1, 128, 128>}, {transform_indices = @transform_3, window_bounds = array<i64: 1, 8, 128>}]} {
    %c0 = arith.constant 0 : index
    %c0_0 = arith.constant 0 : index
    %c0_1 = arith.constant 0 : index
    %0 = vector.load %arg2[%c0, %c0_0, %c0_1] : memref<1x128x128xbf16, #tpu.memory_space<vmem>>, vector<1x128x128xbf16>
    %1 = vector.shape_cast %0 : vector<1x128x128xbf16> to vector<128x128xbf16>
    %c0_2 = arith.constant 0 : index
    %c0_3 = arith.constant 0 : index
    %c0_4 = arith.constant 0 : index
    %2 = vector.load %arg3[%c0_2, %c0_3, %c0_4] : memref<1x128x128xbf16, #tpu.memory_space<vmem>>, vector<1x128x128xbf16>
    %3 = vector.shape_cast %2 : vector<1x128x128xbf16> to vector<128x128xbf16>
    %cst = arith.constant dense<0.000000e+00> : vector<128x128xf32>
    %4 = tpu.matmul %1, %3, %cst {dimension_numbers = #tpu.dot_dimension_numbers<[1], [0], [0], [1], [0, 0, 1, 1], [], []>} : vector<128x128xbf16>, vector<128x128xbf16>, vector<128x128xf32> -> vector<128x128xf32>
    %5 = arith.truncf %4 : vector<128x128xf32> to vector<128x128xbf16>
    %c0_5 = arith.constant 0 : index
    %c0_6 = arith.constant 0 : index
    %c0_7 = arith.constant 0 : index
    %6 = vector.load %arg4[%c0_5, %c0_6, %c0_7] : memref<1x128x128xbf16, #tpu.memory_space<vmem>>, vector<1x128x128xbf16>
    %7 = vector.shape_cast %6 : vector<1x128x128xbf16> to vector<128x128xbf16>
    %8 = vector.shape_cast %5 : vector<128x128xbf16> to vector<1x128x128xbf16>
    tpu.vector_store %arg4[%c0_5, %c0_6, %c0_7], %8 {strides = array<i32>} : memref<1x128x128xbf16, #tpu.memory_space<vmem>>, vector<1x128x128xbf16>,
    %cst_8 = arith.constant dense<0.000000e+00> : vector<128xf32>
    %9 = vector.multi_reduction <add>, %4, %cst_8 [0] : vector<128x128xf32> to vector<128xf32>
    %10 = vector.shape_cast %9 : vector<128xf32> to vector<1x128xf32>
    %11 = arith.mulf %4, %4 : vector<128x128xf32>
    %cst_9 = arith.constant dense<0.000000e+00> : vector<128xf32>
    %12 = vector.multi_reduction <add>, %11, %cst_9 [0] : vector<128x128xf32> to vector<128xf32>
    %13 = vector.shape_cast %12 : vector<128xf32> to vector<1x128xf32>
    %14 = tpu.iota {dimensions = array<i32: 0>} : vector<8x128xi32>
    %c0_i32 = arith.constant 0 : i32
    %15 = vector.broadcast %c0_i32 : i32 to vector<8x128xi32>
    %16 = arith.cmpi eq, %14, %15 : vector<8x128xi32>
    %17 = vector.shape_cast %10 : vector<1x128xf32> to vector<1x128xf32>
    %18 = vector.broadcast %17 : vector<1x128xf32> to vector<8x128xf32>
    %19 = vector.shape_cast %13 : vector<1x128xf32> to vector<1x128xf32>
    %20 = vector.broadcast %19 : vector<1x128xf32> to vector<8x128xf32>
    %21 = arith.select %16, %18, %20 : vector<8x128xi1>, vector<8x128xf32>
    %c0_10 = arith.constant 0 : index
    %c0_11 = arith.constant 0 : index
    %c0_12 = arith.constant 0 : index
    %22 = vector.load %arg5[%c0_10, %c0_11, %c0_12] : memref<1x8x128xf32, #tpu.memory_space<vmem>>, vector<1x8x128xf32>
    %23 = vector.shape_cast %22 : vector<1x8x128xf32> to vector<8x128xf32>
    %24 = vector.shape_cast %21 : vector<8x128xf32> to vector<1x8x128xf32>
    tpu.vector_store %arg5[%c0_10, %c0_11, %c0_12], %24 {strides = array<i32>} : memref<1x8x128xf32, #tpu.memory_space<vmem>>, vector<1x8x128xf32>,
    return
  }
  func.func @transform_0(%arg0: i32, %arg1: i32) -> (i32, i32, i32) {
    %c0_i32 = arith.constant 0 : i32
    %c0_i32_0 = arith.constant 0 : i32
    return %arg0, %arg1, %c0_i32 : i32, i32, i32
  }
  func.func @transform_1(%arg0: i32, %arg1: i32) -> (i32, i32, i32) {
    %c0_i32 = arith.constant 0 : i32
    %c0_i32_0 = arith.constant 0 : i32
    %c0_i32_1 = arith.constant 0 : i32
    return %arg0, %c0_i32, %c0_i32_0 : i32, i32, i32
  }
  func.func @transform_2(%arg0: i32, %arg1: i32) -> (i32, i32, i32) {
    %c0_i32 = arith.constant 0 : i32
    %c0_i32_0 = arith.constant 0 : i32
    return %arg0, %arg1, %c0_i32 : i32, i32, i32
  }
  func.func @transform_3(%arg0: i32, %arg1: i32) -> (i32, i32, i32) {
    %c0_i32 = arith.constant 0 : i32
    %c0_i32_0 = arith.constant 0 : i32
    return %arg0, %arg1, %c0_i32 : i32, i32, i32
  }
}

module attributes {stable_mosaic.version = 11 : i64} {
  func.func @_matmul_stats_kernel(%arg0: i32, %arg1: i32, %arg2: memref<1x512x64xbf16, #tpu.memory_space<vmem>>, %arg3: memref<1x64x128xbf16, #tpu.memory_space<vmem>>, %arg4: memref<1x512x128xbf16, #tpu.memory_space<vmem>>, %arg5: memref<1x8x128xf32, #tpu.memory_space<vmem>>) attributes {dimension_semantics = [#tpu.dimension_semantics<parallel>, #tpu.dimension_semantics<parallel>], iteration_bounds = array<i64: 4, 1>, scalar_prefetch = 0 : i64, scratch_operands = 0 : i64, tpu.core_type = #tpu.core_type<tc>, window_params = [{transform_indices = @transform_0, window_bounds = array<i64: 1, 512, 64>}, {transform_indices = @transform_1, window_bounds = array<i64: 1, 64, 128>}, {transform_indices = @transform_2, window_bounds = array<i64: 1, 512, 128>}, {transform_indices = @transform_3, window_bounds = array<i64: 1, 8, 128>}]} {
    %c0 = arith.constant 0 : index
    %c0_0 = arith.constant 0 : index
    %c0_1 = arith.constant 0 : index
    %0 = vector.load %arg2[%c0, %c0_0, %c0_1] : memref<1x512x64xbf16, #tpu.memory_space<vmem>>, vector<1x512x64xbf16>
    %1 = vector.shape_cast %0 : vector<1x512x64xbf16> to vector<512x64xbf16>
    %c0_2 = arith.constant 0 : index
    %c0_3 = arith.constant 0 : index
    %c0_4 = arith.constant 0 : index
    %2 = vector.load %arg3[%c0_2, %c0_3, %c0_4] : memref<1x64x128xbf16, #tpu.memory_space<vmem>>, vector<1x64x128xbf16>
    %3 = vector.shape_cast %2 : vector<1x64x128xbf16> to vector<64x128xbf16>
    %cst = arith.constant dense<0.000000e+00> : vector<512x128xf32>
    %4 = tpu.matmul %1, %3, %cst {dimension_numbers = #tpu.dot_dimension_numbers<[1], [0], [0], [1], [0, 0, 1, 1], [], []>} : vector<512x64xbf16>, vector<64x128xbf16>, vector<512x128xf32> -> vector<512x128xf32>
    %5 = arith.truncf %4 : vector<512x128xf32> to vector<512x128xbf16>
    %c0_5 = arith.constant 0 : index
    %c0_6 = arith.constant 0 : index
    %c0_7 = arith.constant 0 : index
    %6 = vector.load %arg4[%c0_5, %c0_6, %c0_7] : memref<1x512x128xbf16, #tpu.memory_space<vmem>>, vector<1x512x128xbf16>
    %7 = vector.shape_cast %6 : vector<1x512x128xbf16> to vector<512x128xbf16>
    %8 = vector.shape_cast %5 : vector<512x128xbf16> to vector<1x512x128xbf16>
    tpu.vector_store %arg4[%c0_5, %c0_6, %c0_7], %8 {strides = array<i32>} : memref<1x512x128xbf16, #tpu.memory_space<vmem>>, vector<1x512x128xbf16>,
    %cst_8 = arith.constant dense<0.000000e+00> : vector<128xf32>
    %9 = vector.multi_reduction <add>, %4, %cst_8 [0] : vector<512x128xf32> to vector<128xf32>
    %10 = vector.shape_cast %9 : vector<128xf32> to vector<1x128xf32>
    %11 = arith.mulf %4, %4 : vector<512x128xf32>
    %cst_9 = arith.constant dense<0.000000e+00> : vector<128xf32>
    %12 = vector.multi_reduction <add>, %11, %cst_9 [0] : vector<512x128xf32> to vector<128xf32>
    %13 = vector.shape_cast %12 : vector<128xf32> to vector<1x128xf32>
    %14 = tpu.iota {dimensions = array<i32: 0>} : vector<8x128xi32>
    %c0_i32 = arith.constant 0 : i32
    %15 = vector.broadcast %c0_i32 : i32 to vector<8x128xi32>
    %16 = arith.cmpi eq, %14, %15 : vector<8x128xi32>
    %17 = vector.shape_cast %10 : vector<1x128xf32> to vector<1x128xf32>
    %18 = vector.broadcast %17 : vector<1x128xf32> to vector<8x128xf32>
    %19 = vector.shape_cast %13 : vector<1x128xf32> to vector<1x128xf32>
    %20 = vector.broadcast %19 : vector<1x128xf32> to vector<8x128xf32>
    %21 = arith.select %16, %18, %20 : vector<8x128xi1>, vector<8x128xf32>
    %c0_10 = arith.constant 0 : index
    %c0_11 = arith.constant 0 : index
    %c0_12 = arith.constant 0 : index
    %22 = vector.load %arg5[%c0_10, %c0_11, %c0_12] : memref<1x8x128xf32, #tpu.memory_space<vmem>>, vector<1x8x128xf32>
    %23 = vector.shape_cast %22 : vector<1x8x128xf32> to vector<8x128xf32>
    %24 = vector.shape_cast %21 : vector<8x128xf32> to vector<1x8x128xf32>
    tpu.vector_store %arg5[%c0_10, %c0_11, %c0_12], %24 {strides = array<i32>} : memref<1x8x128xf32, #tpu.memory_space<vmem>>, vector<1x8x128xf32>,
    return
  }
  func.func @transform_0(%arg0: i32, %arg1: i32) -> (i32, i32, i32) {
    %c0_i32 = arith.constant 0 : i32
    %c0_i32_0 = arith.constant 0 : i32
    return %arg0, %arg1, %c0_i32 : i32, i32, i32
  }
  func.func @transform_1(%arg0: i32, %arg1: i32) -> (i32, i32, i32) {
    %c0_i32 = arith.constant 0 : i32
    %c0_i32_0 = arith.constant 0 : i32
    %c0_i32_1 = arith.constant 0 : i32
    return %arg0, %c0_i32, %c0_i32_0 : i32, i32, i32
  }
  func.func @transform_2(%arg0: i32, %arg1: i32) -> (i32, i32, i32) {
    %c0_i32 = arith.constant 0 : i32
    %c0_i32_0 = arith.constant 0 : i32
    return %arg0, %arg1, %c0_i32 : i32, i32, i32
  }
  func.func @transform_3(%arg0: i32, %arg1: i32) -> (i32, i32, i32) {
    %c0_i32 = arith.constant 0 : i32
    %c0_i32_0 = arith.constant 0 : i32
    return %arg0, %arg1, %c0_i32 : i32, i32, i32
  }
}

module attributes {stable_mosaic.version = 11 : i64} {
  func.func @_matmul_tanh_kernel(%arg0: i32, %arg1: i32, %arg2: memref<1x1024x32xbf16, #tpu.memory_space<vmem>>, %arg3: memref<1x32x128xbf16, #tpu.memory_space<vmem>>, %arg4: memref<1x1024x128xbf16, #tpu.memory_space<vmem>>) attributes {dimension_semantics = [#tpu.dimension_semantics<parallel>, #tpu.dimension_semantics<parallel>], iteration_bounds = array<i64: 4, 2>, scalar_prefetch = 0 : i64, scratch_operands = 0 : i64, tpu.core_type = #tpu.core_type<tc>, window_params = [{transform_indices = @transform_0, window_bounds = array<i64: 1, 1024, 32>}, {transform_indices = @transform_1, window_bounds = array<i64: 1, 32, 128>}, {transform_indices = @transform_2, window_bounds = array<i64: 1, 1024, 128>}]} {
    %c0 = arith.constant 0 : index
    %c0_0 = arith.constant 0 : index
    %c0_1 = arith.constant 0 : index
    %0 = vector.load %arg2[%c0, %c0_0, %c0_1] : memref<1x1024x32xbf16, #tpu.memory_space<vmem>>, vector<1x1024x32xbf16>
    %1 = vector.shape_cast %0 : vector<1x1024x32xbf16> to vector<1024x32xbf16>
    %c0_2 = arith.constant 0 : index
    %c0_3 = arith.constant 0 : index
    %c0_4 = arith.constant 0 : index
    %2 = vector.load %arg3[%c0_2, %c0_3, %c0_4] : memref<1x32x128xbf16, #tpu.memory_space<vmem>>, vector<1x32x128xbf16>
    %3 = vector.shape_cast %2 : vector<1x32x128xbf16> to vector<32x128xbf16>
    %cst = arith.constant dense<0.000000e+00> : vector<1024x128xf32>
    %4 = tpu.matmul %1, %3, %cst {dimension_numbers = #tpu.dot_dimension_numbers<[1], [0], [0], [1], [0, 0, 1, 1], [], []>} : vector<1024x32xbf16>, vector<32x128xbf16>, vector<1024x128xf32> -> vector<1024x128xf32>
    %5 = math.tanh %4 : vector<1024x128xf32>
    %6 = arith.truncf %5 : vector<1024x128xf32> to vector<1024x128xbf16>
    %c0_5 = arith.constant 0 : index
    %c0_6 = arith.constant 0 : index
    %c0_7 = arith.constant 0 : index
    %7 = vector.load %arg4[%c0_5, %c0_6, %c0_7] : memref<1x1024x128xbf16, #tpu.memory_space<vmem>>, vector<1x1024x128xbf16>
    %8 = vector.shape_cast %7 : vector<1x1024x128xbf16> to vector<1024x128xbf16>
    %9 = vector.shape_cast %6 : vector<1024x128xbf16> to vector<1x1024x128xbf16>
    tpu.vector_store %arg4[%c0_5, %c0_6, %c0_7], %9 {strides = array<i32>} : memref<1x1024x128xbf16, #tpu.memory_space<vmem>>, vector<1x1024x128xbf16>,
    return
  }
  func.func @transform_0(%arg0: i32, %arg1: i32) -> (i32, i32, i32) {
    %c0_i32 = arith.constant 0 : i32
    %c0_i32_0 = arith.constant 0 : i32
    return %arg0, %arg1, %c0_i32 : i32, i32, i32
  }
  func.func @transform_1(%arg0: i32, %arg1: i32) -> (i32, i32, i32) {
    %c0_i32 = arith.constant 0 : i32
    %c0_i32_0 = arith.constant 0 : i32
    %c0_i32_1 = arith.constant 0 : i32
    return %arg0, %c0_i32, %c0_i32_0 : i32, i32, i32
  }
  func.func @transform_2(%arg0: i32, %arg1: i32) -> (i32, i32, i32) {
    %c0_i32 = arith.constant 0 : i32
    %c0_i32_0 = arith.constant 0 : i32
    return %arg0, %arg1, %c0_i32 : i32, i32, i32
  }
}

</mosaic_0001>

<llo_original>
// kernel: squeeze.9
$region0: #{squeeze.9}
  %s0 = inlined_call_operand.vmem [shape: f32[1024], index: 0, kind: input, shape index: {}]
  %s1 = inlined_call_operand.vmem [shape: f32[16,64], index: 1, kind: output, shape index: {}]
  %v2 = vld [vmem:[%s0] sm:$0xff]
  %vm3 = vcmask 523264
  %4 = vst.msk [vmem:[%s1] ss:$2 sm:$0xff] %vm3, %v2
  %v5 = vld [vmem:[%s0] sm:$0xff]
  %6 = vrot.lane.b32.xlu0 %v5, 64
  %v7 = vpop.permute.xlu0 %6
  %vm8 = vcmask 523264
  %s9 = scalar_lea.vmem %s1, 1
  %10 = vst.msk [vmem:[%s9] ss:$2 sm:$0xff] %vm8, %v7

// kernel: generator_forward.5
$region0: #{generator_forward.5}
  #allocation0 [shape = 'u32[]', space=smem, size = 0x4, offset = 0x4, fixed_abs, tag = 'smem constant byte address 0x4 - core index']
  #allocation1 [shape = 'u32[144,128]{1,0:T(1,128)}', space=vmem, size = 0x12000, scoped, tag = 'internal scratch']
  %s0 = inlined_call_operand.vmem [shape: bf16[1,8,8], index: 0, kind: input, shape index: {}]
  %s1 = inlined_call_operand.hbm [shape: bf16[1,8,1024], index: 1, kind: input, shape index: {}]
  %s2 = inlined_call_operand.vmem [shape: bf16[1,8,1024], index: 2, kind: output, shape index: {0}]
  %s3 = inlined_call_operand.vmem [shape: f32[1,8,1024], index: 3, kind: output, shape index: {1}]
  %4 = xla_tuple %s2, %s3
  %s5 = sld [smem:[#allocation0]]
  $region30: #{generator_forward.5} parent=0
    _
  %s7 = ssub.s32 1, %s5
  %s8 = scalar_select 0, %s7, %s5
  $region1: #{generator_forward.5} parent=0
    #allocation2 [shape = 'u8[16384]{0}', space=vmem, size = 0x4000, scoped, tag = 'input window, operand 1, single buffered']
    #allocation3 [shape = 's32[1]{0}', space=sflag, size = 0x4, scoped, tag = 'scoped memory for generator_forward.5']
    %9 = vsyncpa [#allocation3], 0
    // Predicated region
    $region2: #{generator_forward.5} parent=1 // pred_check
      _
    $region3: #{generator_forward.5} parent=1 // pred_check_branch
      %11 = sbr.rel (0) target = $region5
    $region4: #{generator_forward.5} parent=1 // pred_region
      _
    $region5: #{generator_forward.5} parent=1 // pred_fallthru
      _
    // Predicated region
    $region6: #{generator_forward.5} parent=1 // pred_check
      _
    $region7: #{generator_forward.5} parent=1 // pred_check_branch
      %13 = sbr.rel (0) target = $region9
    $region8: #{generator_forward.5} parent=1 // pred_region
      %s15 = ssub.s32 512, 512
      %16 = vsyncadd [#allocation3], %s15
      %s18 = sshll.u32 [#allocation2], 4
      %s19 = int_to_ptr.vmem [resolvable:$true] %s18
      %21 = dma.hbm_to_vmem [thread:$0]  %s1, 512, %s19, [#allocation3]
    $region9: #{generator_forward.5} parent=1 // pred_fallthru
      _
    // Predicated region
    $region10: #{generator_forward.5} parent=1 // pred_check
      _
    $region11: #{generator_forward.5} parent=1 // pred_check_branch
      %23 = sbr.rel (0) target = $region13
    $region12: #{generator_forward.5} parent=1 // pred_region
      %24 = dma.done [#allocation3], 512
    $region13: #{generator_forward.5} parent=1 // pred_fallthru
      _
    %v26 = vld [vmem:[%s0] sm:$0xf]
    %v27 = vld [vmem:[#allocation2] sm:$0xff]
    %v28 = vld [vmem:[#allocation2 + $0x8] sm:$0xff]
    %v29 = vld [vmem:[#allocation2 + $0x10] sm:$0xff]
    %v30 = vld [vmem:[#allocation2 + $0x18] sm:$0xff]
    %v35 = vunpack.c.l.b16 %v27
    %v36 = vunpack.c.h.b16 %v27
    %v37 = vunpack.c.l.b16 %v28
    %v38 = vunpack.c.h.b16 %v28
    %v39 = vunpack.c.l.b16 %v29
    %v40 = vunpack.c.h.b16 %v29
    %v41 = vunpack.c.l.b16 %v30
    %v42 = vunpack.c.h.b16 %v30
    %v43 = vpack.c.b16 %v35, %v35
    %v44 = vpack.c.b16 %v36, %v36
    %v45 = vpack.c.b16 %v37, %v37
    %v46 = vpack.c.b16 %v38, %v38
    %v47 = vpack.c.b16 %v39, %v39
    %v48 = vpack.c.b16 %v40, %v40
    %v49 = vpack.c.b16 %v41, %v41
    %v50 = vpack.c.b16 %v42, %v42
    %vm51 = vcmask 64512
    %v53 = vsel %vm51, %v26, 0
    %vm55 = vcmask 1043456
    %v57 = vsel %vm55, %v43, 0
    %v60 = vsel %vm55, %v44, 0
    %v63 = vsel %vm55, %v45, 0
    %v66 = vsel %vm55, %v46, 0
    %v69 = vsel %vm55, %v47, 0
    %v72 = vsel %vm55, %v48, 0
    %v75 = vsel %vm55, %v49, 0
    %v78 = vsel %vm55, %v50, 0
    %80 = vmatprep.subr.bf16.mxu0 0
    %81 = vmatpush1.bf16.msra.mxu0 0
    %82 = vmatprep.subr.bf16.mxu0 0
    %83 = vmatpush1.bf16.msra.mxu0 0
    %84 = vmatprep.subr.bf16.mxu0 0
    %85 = vmatpush1.bf16.msra.mxu0 0
    %86 = vmatprep.subr.bf16.mxu0 0
    %87 = vmatpush1.bf16.msra.mxu0 0
    %88 = vmatprep.subr.bf16.mxu0 0
    %89 = vmatpush1.bf16.msra.mxu0 0
    %90 = vmatprep.subr.bf16.mxu0 0
    %91 = vmatpush1.bf16.msra.mxu0 0
    %92 = vmatprep.subr.bf16.mxu0 0
    %93 = vmatpush1.bf16.msra.mxu0 0
    %94 = vmatprep.subr.bf16.mxu0 %v60
    %95 = vmatpush1.bf16.msra.mxu0 %v57
    %96 = vmatprep.subr.bf16.mxu0 0
    %97 = vmatpush2.bf16.msra.mxu0 0
    %98 = vmatprep.subr.bf16.mxu0 0
    %99 = vmatpush2.bf16.msra.mxu0 0
    %100 = vmatprep.subr.bf16.mxu0 0
    %101 = vmatpush2.bf16.msra.mxu0 0
    %102 = vmatprep.subr.bf16.mxu0 0
    %103 = vmatpush2.bf16.msra.mxu0 0
    %104 = vmatprep.subr.bf16.mxu0 0
    %105 = vmatpush2.bf16.msra.mxu0 0
    %106 = vmatprep.subr.bf16.mxu0 0
    %107 = vmatpush2.bf16.msra.mxu0 0
    %108 = vmatprep.subr.bf16.mxu0 0
    %109 = vmatpush2.bf16.msra.mxu0 0
    %110 = vmatprep.subr.bf16.mxu0 0
    %111 = vmatpush2.bf16.msra.mxu0 0
    %112 = vmatprep.mubr.bf16.mxu0 0
    %113 = vmatmul.mubr.bf16.gmra.mxu0 %v53
    %v114 = vpop.f32.mrf.mxu0
    %v115 = vadd.f32 0.0, %v114
    %v116 = vpop.f32.mrf.mxu0
    %v117 = vadd.f32 0.0, %v116
    %v118 = vpop.f32.mrf.mxu0
    %v119 = vpop.f32.mrf.mxu0
    %120 = vdwg.mxu0
    %121 = vmatprep.subr.bf16.mxu0 0
    %122 = vmatpush1.bf16.msra.mxu0 0
    %123 = vmatprep.subr.bf16.mxu0 0
    %124 = vmatpush1.bf16.msra.mxu0 0
    %125 = vmatprep.subr.bf16.mxu0 0
    %126 = vmatpush1.bf16.msra.mxu0 0
    %127 = vmatprep.subr.bf16.mxu0 0
    %128 = vmatpush1.bf16.msra.mxu0 0
    %129 = vmatprep.subr.bf16.mxu0 0
    %130 = vmatpush1.bf16.msra.mxu0 0
    %131 = vmatprep.subr.bf16.mxu0 0
    %132 = vmatpush1.bf16.msra.mxu0 0
    %133 = vmatprep.subr.bf16.mxu0 0
    %134 = vmatpush1.bf16.msra.mxu0 0
    %135 = vmatprep.subr.bf16.mxu0 %v66
    %136 = vmatpush1.bf16.msra.mxu0 %v63
    %137 = vmatprep.subr.bf16.mxu0 0
    %138 = vmatpush2.bf16.msra.mxu0 0
    %139 = vmatprep.subr.bf16.mxu0 0
    %140 = vmatpush2.bf16.msra.mxu0 0
    %141 = vmatprep.subr.bf16.mxu0 0
    %142 = vmatpush2.bf16.msra.mxu0 0
    %143 = vmatprep.subr.bf16.mxu0 0
    %144 = vmatpush2.bf16.msra.mxu0 0
    %145 = vmatprep.subr.bf16.mxu0 0
    %146 = vmatpush2.bf16.msra.mxu0 0
    %147 = vmatprep.subr.bf16.mxu0 0
    %148 = vmatpush2.bf16.msra.mxu0 0
    %149 = vmatprep.subr.bf16.mxu0 0
    %150 = vmatpush2.bf16.msra.mxu0 0
    %151 = vmatprep.subr.bf16.mxu0 0
    %152 = vmatpush2.bf16.msra.mxu0 0
    %153 = vmatprep.mubr.bf16.mxu0 0
    %154 = vmatmul.mubr.bf16.gmra.mxu0 %v53
    %v155 = vpop.f32.mrf.mxu0
    %v156 = vadd.f32 0.0, %v155
    %v157 = vpop.f32.mrf.mxu0
    %v158 = vadd.f32 0.0, %v157
    %v159 = vpop.f32.mrf.mxu0
    %v160 = vpop.f32.mrf.mxu0
    %161 = vdwg.mxu0
    %162 = vmatprep.subr.bf16.mxu0 0
    %163 = vmatpush1.bf16.msra.mxu0 0
    %164 = vmatprep.subr.bf16.mxu0 0
    %165 = vmatpush1.bf16.msra.mxu0 0
    %166 = vmatprep.subr.bf16.mxu0 0
    %167 = vmatpush1.bf16.msra.mxu0 0
    %168 = vmatprep.subr.bf16.mxu0 0
    %169 = vmatpush1.bf16.msra.mxu0 0
    %170 = vmatprep.subr.bf16.mxu0 0
    %171 = vmatpush1.bf16.msra.mxu0 0
    %172 = vmatprep.subr.bf16.mxu0 0
    %173 = vmatpush1.bf16.msra.mxu0 0
    %174 = vmatprep.subr.bf16.mxu0 0
    %175 = vmatpush1.bf16.msra.mxu0 0
    %176 = vmatprep.subr.bf16.mxu0 %v72
    %177 = vmatpush1.bf16.msra.mxu0 %v69
    %178 = vmatprep.subr.bf16.mxu0 0
    %179 = vmatpush2.bf16.msra.mxu0 0
    %180 = vmatprep.subr.bf16.mxu0 0
    %181 = vmatpush2.bf16.msra.mxu0 0
    %182 = vmatprep.subr.bf16.mxu0 0
    %183 = vmatpush2.bf16.msra.mxu0 0
    %184 = vmatprep.subr.bf16.mxu0 0
    %185 = vmatpush2.bf16.msra.mxu0 0
    %186 = vmatprep.subr.bf16.mxu0 0
    %187 = vmatpush2.bf16.msra.mxu0 0
    %188 = vmatprep.subr.bf16.mxu0 0
    %189 = vmatpush2.bf16.msra.mxu0 0
    %190 = vmatprep.subr.bf16.mxu0 0
    %191 = vmatpush2.bf16.msra.mxu0 0
    %192 = vmatprep.subr.bf16.mxu0 0
    %193 = vmatpush2.bf16.msra.mxu0 0
    %194 = vmatprep.mubr.bf16.mxu0 0
    %195 = vmatmul.mubr.bf16.gmra.mxu0 %v53
    %v196 = vpop.f32.mrf.mxu0
    %v197 = vadd.f32 0.0, %v196
    %v198 = vpop.f32.mrf.mxu0
    %v199 = vadd.f32 0.0, %v198
    %v200 = vpop.f32.mrf.mxu0
    %v201 = vpop.f32.mrf.mxu0
    %202 = vdwg.mxu0
    %203 = vmatprep.subr.bf16.mxu0 0
    %204 = vmatpush1.bf16.msra.mxu0 0
    %205 = vmatprep.subr.bf16.mxu0 0
    %206 = vmatpush1.bf16.msra.mxu0 0
    %207 = vmatprep.subr.bf16.mxu0 0
    %208 = vmatpush1.bf16.msra.mxu0 0
    %209 = vmatprep.subr.bf16.mxu0 0
    %210 = vmatpush1.bf16.msra.mxu0 0
    %211 = vmatprep.subr.bf16.mxu0 0
    %212 = vmatpush1.bf16.msra.mxu0 0
    %213 = vmatprep.subr.bf16.mxu0 0
    %214 = vmatpush1.bf16.msra.mxu0 0
    %215 = vmatprep.subr.bf16.mxu0 0
    %216 = vmatpush1.bf16.msra.mxu0 0
    %217 = vmatprep.subr.bf16.mxu0 %v78
    %218 = vmatpush1.bf16.msra.mxu0 %v75
    %219 = vmatprep.subr.bf16.mxu0 0
    %220 = vmatpush2.bf16.msra.mxu0 0
    %221 = vmatprep.subr.bf16.mxu0 0
    %222 = vmatpush2.bf16.msra.mxu0 0
    %223 = vmatprep.subr.bf16.mxu0 0
    %224 = vmatpush2.bf16.msra.mxu0 0
    %225 = vmatprep.subr.bf16.mxu0 0
    %226 = vmatpush2.bf16.msra.mxu0 0
    %227 = vmatprep.subr.bf16.mxu0 0
    %228 = vmatpush2.bf16.msra.mxu0 0
    %229 = vmatprep.subr.bf16.mxu0 0
    %230 = vmatpush2.bf16.msra.mxu0 0
    %231 = vmatprep.subr.bf16.mxu0 0
    %232 = vmatpush2.bf16.msra.mxu0 0
    %233 = vmatprep.subr.bf16.mxu0 0
    %234 = vmatpush2.bf16.msra.mxu0 0
    %235 = vmatprep.mubr.bf16.mxu0 0
    %236 = vmatmul.mubr.bf16.gmra.mxu0 %v53
    %v237 = vpop.f32.mrf.mxu0
    %v238 = vadd.f32 0.0, %v237
    %v239 = vpop.f32.mrf.mxu0
    %v240 = vadd.f32 0.0, %v239
    %v241 = vpop.f32.mrf.mxu0
    %v242 = vpop.f32.mrf.mxu0
    %243 = vdwg.mxu0
    %v244 = vpack.c.bf16 %v115, %v115
    %v245 = vpack.c.bf16 %v117, %v117
    %v246 = vpack.c.bf16 %v156, %v156
    %v247 = vpack.c.bf16 %v158, %v158
    %v248 = vpack.c.bf16 %v197, %v197
    %v249 = vpack.c.bf16 %v199, %v199
    %v250 = vpack.c.bf16 %v238, %v238
    %v251 = vpack.c.bf16 %v240, %v240
    %v260 = vunpack.c.l.b16 %v244
    %v261 = vunpack.c.l.b16 %v245
    %v262 = vunpack.c.l.b16 %v246
    %v263 = vunpack.c.l.b16 %v247
    %v264 = vunpack.c.l.b16 %v248
    %v265 = vunpack.c.l.b16 %v249
    %v266 = vunpack.c.l.b16 %v250
    %v267 = vunpack.c.l.b16 %v251
    %v268 = vpack.c.b16 %v261, %v260
    %v269 = vpack.c.b16 %v263, %v262
    %v270 = vpack.c.b16 %v265, %v264
    %v271 = vpack.c.b16 %v267, %v266
    %276 = vst [vmem:[%s2] sm:$0xff] %v268
    %277 = vst [vmem:[%s2 + $0x8] sm:$0xff] %v269
    %278 = vst [vmem:[%s2 + $0x10] sm:$0xff] %v270
    %279 = vst [vmem:[%s2 + $0x18] sm:$0xff] %v271
    %v280 = vrot.slane %v115, 4
    %v281 = vadd.f32 %v115, %v280
    %v282 = vrot.slane %v281, 2
    %v283 = vadd.f32 %v281, %v282
    %v284 = vrot.slane %v283, 1
    %v285 = vadd.f32 %v283, %v284
    %v286 = vrot.slane %v117, 4
    %v287 = vadd.f32 %v117, %v286
    %v288 = vrot.slane %v287, 2
    %v289 = vadd.f32 %v287, %v288
    %v290 = vrot.slane %v289, 1
    %v291 = vadd.f32 %v289, %v290
    %v292 = vrot.slane %v156, 4
    %v293 = vadd.f32 %v156, %v292
    %v294 = vrot.slane %v293, 2
    %v295 = vadd.f32 %v293, %v294
    %v296 = vrot.slane %v295, 1
    %v297 = vadd.f32 %v295, %v296
    %v298 = vrot.slane %v158, 4
    %v299 = vadd.f32 %v158, %v298
    %v300 = vrot.slane %v299, 2
    %v301 = vadd.f32 %v299, %v300
    %v302 = vrot.slane %v301, 1
    %v303 = vadd.f32 %v301, %v302
    %v304 = vrot.slane %v197, 4
    %v305 = vadd.f32 %v197, %v304
    %v306 = vrot.slane %v305, 2
    %v307 = vadd.f32 %v305, %v306
    %v308 = vrot.slane %v307, 1
    %v309 = vadd.f32 %v307, %v308
    %v310 = vrot.slane %v199, 4
    %v311 = vadd.f32 %v199, %v310
    %v312 = vrot.slane %v311, 2
    %v313 = vadd.f32 %v311, %v312
    %v314 = vrot.slane %v313, 1
    %v315 = vadd.f32 %v313, %v314
    %v316 = vrot.slane %v238, 4
    %v317 = vadd.f32 %v238, %v316
    %v318 = vrot.slane %v317, 2
    %v319 = vadd.f32 %v317, %v318
    %v320 = vrot.slane %v319, 1
    %v321 = vadd.f32 %v319, %v320
    %v322 = vrot.slane %v240, 4
    %v323 = vadd.f32 %v240, %v322
    %v324 = vrot.slane %v323, 2
    %v325 = vadd.f32 %v323, %v324
    %v326 = vrot.slane %v325, 1
    %v327 = vadd.f32 %v325, %v326
    %v328 = vmul.f32 %v115, %v115
    %v329 = vmul.f32 %v117, %v117
    %v330 = vmul.f32 %v156, %v156
    %v331 = vmul.f32 %v158, %v158
    %v332 = vmul.f32 %v197, %v197
    %v333 = vmul.f32 %v199, %v199
    %v334 = vmul.f32 %v238, %v238
    %v335 = vmul.f32 %v240, %v240
    %v336 = vrot.slane %v328, 4
    %v337 = vadd.f32 %v328, %v336
    %v338 = vrot.slane %v337, 2
    %v339 = vadd.f32 %v337, %v338
    %v340 = vrot.slane %v339, 1
    %v341 = vadd.f32 %v339, %v340
    %v342 = vrot.slane %v329, 4
    %v343 = vadd.f32 %v329, %v342
    %v344 = vrot.slane %v343, 2
    %v345 = vadd.f32 %v343, %v344
    %v346 = vrot.slane %v345, 1
    %v347 = vadd.f32 %v345, %v346
    %v348 = vrot.slane %v330, 4
    %v349 = vadd.f32 %v330, %v348
    %v350 = vrot.slane %v349, 2
    %v351 = vadd.f32 %v349, %v350
    %v352 = vrot.slane %v351, 1
    %v353 = vadd.f32 %v351, %v352
    %v354 = vrot.slane %v331, 4
    %v355 = vadd.f32 %v331, %v354
    %v356 = vrot.slane %v355, 2
    %v357 = vadd.f32 %v355, %v356
    %v358 = vrot.slane %v357, 1
    %v359 = vadd.f32 %v357, %v358
    %v360 = vrot.slane %v332, 4
    %v361 = vadd.f32 %v332, %v360
    %v362 = vrot.slane %v361, 2
    %v363 = vadd.f32 %v361, %v362
    %v364 = vrot.slane %v363, 1
    %v365 = vadd.f32 %v363, %v364
    %v366 = vrot.slane %v333, 4
    %v367 = vadd.f32 %v333, %v366
    %v368 = vrot.slane %v367, 2
    %v369 = vadd.f32 %v367, %v368
    %v370 = vrot.slane %v369, 1
    %v371 = vadd.f32 %v369, %v370
    %v372 = vrot.slane %v334, 4
    %v373 = vadd.f32 %v334, %v372
    %v374 = vrot.slane %v373, 2
    %v375 = vadd.f32 %v373, %v374
    %v376 = vrot.slane %v375, 1
    %v377 = vadd.f32 %v375, %v376
    %v378 = vrot.slane %v335, 4
    %v379 = vadd.f32 %v335, %v378
    %v380 = vrot.slane %v379, 2
    %v381 = vadd.f32 %v379, %v380
    %v382 = vrot.slane %v381, 1
    %v383 = vadd.f32 %v381, %v382
    %v384 = vlaneseq
    %v385 = vshrl.u32 %v384, 7
    %vm386 = vcmp.eq.s32.totalorder %v385, 0
    %v387 = vsel %vm386, %v285, %v341
    %v388 = vsel %vm386, %v291, %v347
    %v389 = vsel %vm386, %v297, %v353
    %v390 = vsel %vm386, %v303, %v359
    %v391 = vsel %vm386, %v309, %v365
    %v392 = vsel %vm386, %v315, %v371
    %v393 = vsel %vm386, %v321, %v377
    %v394 = vsel %vm386, %v327, %v383
    %395 = vst [vmem:[%s3] sm:$0xff] %v387
    %396 = vst [vmem:[%s3 + $0x8] sm:$0xff] %v388
    %397 = vst [vmem:[%s3 + $0x10] sm:$0xff] %v389
    %398 = vst [vmem:[%s3 + $0x18] sm:$0xff] %v390
    %399 = vst [vmem:[%s3 + $0x20] sm:$0xff] %v391
    %400 = vst [vmem:[%s3 + $0x28] sm:$0xff] %v392
    %401 = vst [vmem:[%s3 + $0x30] sm:$0xff] %v393
    %402 = vst [vmem:[%s3 + $0x38] sm:$0xff] %v394
    // Predicated region
    $region14: #{generator_forward.5} parent=1 // pred_check
      _
    $region15: #{generator_forward.5} parent=1 // pred_check_branch
      %404 = sbr.rel (0) target = $region17
    $region16: #{generator_forward.5} parent=1 // pred_region
      _
    $region17: #{generator_forward.5} parent=1 // pred_fallthru
      _
    // Predicated region
    $region18: #{generator_forward.5} parent=1 // pred_check
      _
    $region19: #{generator_forward.5} parent=1 // pred_check_branch
      %406 = sbr.rel (0) target = $region21
    $region20: #{generator_forward.5} parent=1 // pred_region
      _
    $region21: #{generator_forward.5} parent=1 // pred_fallthru
      _
    // Predicated region
    $region22: #{generator_forward.5} parent=1 // pred_check
      _
    $region23: #{generator_forward.5} parent=1 // pred_check_branch
      %408 = sbr.rel (0) target = $region25
    $region24: #{generator_forward.5} parent=1 // pred_region
      _
    $region25: #{generator_forward.5} parent=1 // pred_fallthru
      _
    // Predicated region
    $region26: #{generator_forward.5} parent=1 // pred_check
      _
    $region27: #{generator_forward.5} parent=1 // pred_check_branch
      %410 = sbr.rel (0) target = $region29
    $region28: #{generator_forward.5} parent=1 // pred_region
      _
    $region29: #{generator_forward.5} parent=1 // pred_fallthru
      _
    %411 = vsyncpa [#allocation3], 1

// kernel: generator_forward.6
$region0: #{generator_forward.6}
  #allocation0 [shape = 'u32[]', space=smem, size = 0x4, offset = 0x4, fixed_abs, tag = 'smem constant byte address 0x4 - core index']
  #allocation1 [shape = 'u32[144,128]{1,0:T(1,128)}', space=vmem, size = 0x12000, scoped, tag = 'internal scratch']
  %s0 = inlined_call_operand.vmem [shape: bf16[4,32,256], index: 0, kind: input, shape index: {}]
  %s1 = inlined_call_operand.hbm [shape: bf16[4,256,128], index: 1, kind: input, shape index: {}]
  %s2 = inlined_call_operand.vmem [shape: bf16[4,32,128], index: 2, kind: output, shape index: {0}]
  %s3 = inlined_call_operand.vmem [shape: f32[4,8,128], index: 3, kind: output, shape index: {1}]
  %4 = xla_tuple %s2, %s3
  %s5 = sld [smem:[#allocation0]]
  $region53: #{generator_forward.6} parent=0
    _
  %s7 = ssub.s32 1, %s5
  %s8 = scalar_select 0, %s7, %s5
  $region1: #{generator_forward.6} parent=0
    #allocation2 [shape = 'u8[131072]{0}', space=vmem, size = 0x20000, scoped, tag = 'input window, operand 1']
    #allocation3 [shape = 's32[2]{0}', space=sflag, size = 0x8, scoped, tag = 'scoped memory for generator_forward.6']
    %9 = vsyncpa [#allocation3], 0
    %s10 = scalar_lea.sflag [#allocation3], 1
    %11 = vsyncpa %s10, 0
    loop: start=0, step=1, limit=6
    $region2: #{generator_forward.6} parent=1 // loop_pre_header
      _
    $region3: #{generator_forward.6} parent=1 // loop_header
      %s13 = sphi 0, %s17
      %p14 = scmp.ge.s32.totalorder %s13, 6
      %s20 = sphi 0, %s32
      %s21 = sphi 0, %s28
      %s22 = sphi 0, %s20
      %s23 = sphi 0, %s21
      %s24 = sphi 0, %s22
      %s25 = sphi 0, %s23
      %s37 = sphi 0, %s39
      %s40 = sphi 0, %s37
      %s41 = sphi 0, %s40
      %s57 = sphi 0, %s41
      %s63 = sphi 0, %s65
      %s66 = sphi 0, %s63
      %s67 = sphi 0, %s66
      %s83 = sphi 0, %s67
      %s91 = sphi 0, %s93
      %s94 = sphi 0, %s91
      %s95 = sphi 0, %s94
      %s111 = sphi 0, %s95
      %s119 = sphi 0, %s121
      %s122 = sphi 0, %s119
      %s123 = sphi 0, %s122
      %s139 = sphi 0, %s123
    $region4: #{generator_forward.6} parent=1 // loop_header_branch
      %16 = sbr.rel (%p14) target = $region8
    $region5: #{generator_forward.6} parent=1 // loop_body
      %s18 = ssub.s32 %s13, 1
      %s19 = ssub.s32 %s13, 2
      %s26 = sadd.s32 1, %s21
      %p27 = scmp.ge.s32.totalorder %s26, 1
      %s28 = scalar_select %p27, 0, %s26
      %s29 = sadd.s32 1, %s20
      %s30 = scalar_select %p27, %s29, %s20
      %p31 = scmp.ge.s32.totalorder %s30, 4
      %s32 = scalar_select %p31, 0, %s30
      %s33 = ssub.s32 %s20, %s32
      %s34 = ssub.s32 %s21, %s28
      %s35 = sor.u32 %s33, %s34
      %p36 = scmp.eq.s32.totalorder %s35, 0
      %s38 = sadd.s32 %s37, 1
      %s39 = scalar_select %p36, %s37, %s38
      %p42 = pneg %p36
      %p43 = scmp.eq.s32.totalorder %s13, 3
      %p44 = por %p42, %p43
      %p45 = scmp.ne.s32.totalorder %s37, %s40
      %p46 = scmp.eq.s32.totalorder %s13, 0
      %p47 = por %p45, %p46
      %p48 = scmp.ne.s32.totalorder %s37, %s40
      %p49 = scmp.eq.s32.totalorder %s18, 3
      %p50 = por %p48, %p49
      %p51 = scmp.ne.s32.totalorder %s40, %s41
      %p52 = scmp.eq.s32.totalorder %s18, 0
      %p53 = por %p51, %p52
      %p54 = scmp.ne.s32.totalorder %s40, %s41
      %p55 = scmp.eq.s32.totalorder %s19, 3
      %p56 = por %p54, %p55
      %p58 = scmp.ne.s32.totalorder %s41, %s57
      %p59 = scmp.eq.s32.totalorder %s19, 0
      %p60 = por %p58, %p59
      %s61 = ssub.s32 %s20, %s32
      %p62 = scmp.eq.s32.totalorder %s61, 0
      %s64 = sadd.s32 %s63, 1
      %s65 = scalar_select %p62, %s63, %s64
      %p68 = pneg %p62
      %p69 = scmp.eq.s32.totalorder %s13, 3
      %p70 = por %p68, %p69
      %p71 = scmp.ne.s32.totalorder %s63, %s66
      %p72 = scmp.eq.s32.totalorder %s13, 0
      %p73 = por %p71, %p72
      %p74 = scmp.ne.s32.totalorder %s63, %s66
      %p75 = scmp.eq.s32.totalorder %s18, 3
      %p76 = por %p74, %p75
      %p77 = scmp.ne.s32.totalorder %s66, %s67
      %p78 = scmp.eq.s32.totalorder %s18, 0
      %p79 = por %p77, %p78
      %p80 = scmp.ne.s32.totalorder %s66, %s67
      %p81 = scmp.eq.s32.totalorder %s19, 3
      %p82 = por %p80, %p81
      %p84 = scmp.ne.s32.totalorder %s67, %s83
      %p85 = scmp.eq.s32.totalorder %s19, 0
      %p86 = por %p84, %p85
      %s87 = ssub.s32 %s20, %s32
      %s88 = ssub.s32 %s21, %s28
      %s89 = sor.u32 %s87, %s88
      %p90 = scmp.eq.s32.totalorder %s89, 0
      %s92 = sadd.s32 %s91, 1
      %s93 = scalar_select %p90, %s91, %s92
      %p96 = pneg %p90
      %p97 = scmp.eq.s32.totalorder %s13, 3
      %p98 = por %p96, %p97
      %p99 = scmp.ne.s32.totalorder %s91, %s94
      %p100 = scmp.eq.s32.totalorder %s13, 0
      %p101 = por %p99, %p100
      %p102 = scmp.ne.s32.totalorder %s91, %s94
      %p103 = scmp.eq.s32.totalorder %s18, 3
      %p104 = por %p102, %p103
      %p105 = scmp.ne.s32.totalorder %s94, %s95
      %p106 = scmp.eq.s32.totalorder %s18, 0
      %p107 = por %p105, %p106
      %p108 = scmp.ne.s32.totalorder %s94, %s95
      %p109 = scmp.eq.s32.totalorder %s19, 3
      %p110 = por %p108, %p109
      %p112 = scmp.ne.s32.totalorder %s95, %s111
      %p113 = scmp.eq.s32.totalorder %s19, 0
      %p114 = por %p112, %p113
      %s115 = ssub.s32 %s20, %s32
      %s116 = ssub.s32 %s21, %s28
      %s117 = sor.u32 %s115, %s116
      %p118 = scmp.eq.s32.totalorder %s117, 0
      %s120 = sadd.s32 %s119, 1
      %s121 = scalar_select %p118, %s119, %s120
      %p124 = pneg %p118
      %p125 = scmp.eq.s32.totalorder %s13, 3
      %p126 = por %p124, %p125
      %p127 = scmp.ne.s32.totalorder %s119, %s122
      %p128 = scmp.eq.s32.totalorder %s13, 0
      %p129 = por %p127, %p128
      %p130 = scmp.ne.s32.totalorder %s119, %s122
      %p131 = scmp.eq.s32.totalorder %s18, 3
      %p132 = por %p130, %p131
      %p133 = scmp.ne.s32.totalorder %s122, %s123
      %p134 = scmp.eq.s32.totalorder %s18, 0
      %p135 = por %p133, %p134
      %p136 = scmp.ne.s32.totalorder %s122, %s123
      %p137 = scmp.eq.s32.totalorder %s19, 3
      %p138 = por %p136, %p137
      %p140 = scmp.ne.s32.totalorder %s123, %s139
      %p141 = scmp.eq.s32.totalorder %s19, 0
      %p142 = por %p140, %p141
      %p143 = scmp.le.s32.totalorder 1, %s13
      %p144 = scmp.lt.s32.totalorder %s13, 5
      %p145 = pnand %p143, %p144
      %p146 = pneg %p145
      // Predicated region
      $region9: #{generator_forward.6} parent=5 // pred_check
        _
      $region10: #{generator_forward.6} parent=5 // pred_check_branch
        %148 = sbr.rel (%p145) target = $region12
      $region11: #{generator_forward.6} parent=5 // pred_region
        %s149 = ssub.s32 %s13, 1
      $region12: #{generator_forward.6} parent=5 // pred_fallthru
        _
      %p150 = scmp.lt.s32.totalorder %s13, 4
      // Predicated region
      $region13: #{generator_forward.6} parent=5 // pred_check
        %p151 = pneg %p150
      $region14: #{generator_forward.6} parent=5 // pred_check_branch
        %153 = sbr.rel (%p151) target = $region16
      $region15: #{generator_forward.6} parent=5 // pred_region
        // Predicated region
        $region17: #{generator_forward.6} parent=15 // pred_check
          %p154 = pneg %p47
        $region18: #{generator_forward.6} parent=15 // pred_check_branch
          %156 = sbr.rel (%p154) target = $region20
        $region19: #{generator_forward.6} parent=15 // pred_region
          %s157 = smul.u32 4, %s21
          %p158 = scmp.lt.s32.totalorder %s20, 3
          %s159 = scalar_select %p158, %s20, 3
          %p160 = scmp.lt.s32.totalorder %s157, 3
          %s161 = scalar_select %p160, %s157, 3
          %s162 = smul.addr %s161, 2
          %s163 = smul.addr %s159, 8
          %s164 = sadd.s32 %s162, %s163
          %s165 = smul.addr %s164, 4
          %s166 = scalar_lea.vmem %s0, %s165
          %s167 = smul.u32 4, %s21
        $region20: #{generator_forward.6} parent=15 // pred_fallthru
          _
        // Predicated region
        $region21: #{generator_forward.6} parent=15 // pred_check
          %p168 = pneg %p73
        $region22: #{generator_forward.6} parent=15 // pred_check_branch
          %170 = sbr.rel (%p168) target = $region24
        $region23: #{generator_forward.6} parent=15 // pred_region
          %s171 = sand.u32 %s63, 1
          %s172 = scalar_lea.sflag [#allocation3], %s171
          %s173 = sand.u32 %s63, 1
          %s174 = smul.addr %s173, 128
          %s175 = scalar_lea.vmem [#allocation2], %s174
          %s177 = ssub.s32 2048, 2048
          %178 = vsyncadd %s172, %s177
          %s179 = smul.addr %s20, 32
          %s180 = smul.addr %s179, 64
          %s181 = scalar_lea.hbm %s1, %s180
          %s182 = sshll.u32 %s175, 4
          %s183 = int_to_ptr.vmem [resolvable:$true] %s182
          %188 = dma.hbm_to_vmem [thread:$0]  %s181, 2048, %s183, %s172, 64, 64, 4
        $region24: #{generator_forward.6} parent=15 // pred_fallthru
          _
      $region16: #{generator_forward.6} parent=5 // pred_fallthru
        _
      %p189 = scmp.le.s32.totalorder 1, %s13
      %p190 = scmp.lt.s32.totalorder %s13, 5
      %p191 = pnand %p189, %p190
      %p192 = pneg %p191
      // Predicated region
      $region25: #{generator_forward.6} parent=5 // pred_check
        _
      $region26: #{generator_forward.6} parent=5 // pred_check_branch
        %194 = sbr.rel (%p191) target = $region28
      $region27: #{generator_forward.6} parent=5 // pred_region
        %s195 = ssub.s32 %s13, 1
        %s196 = sand.u32 %s66, 1
        %s197 = scalar_lea.sflag [#allocation3], %s196
        %s198 = sand.u32 %s66, 1
        %s199 = smul.addr %s198, 128
        %s200 = scalar_lea.vmem [#allocation2], %s199
        // Predicated region
        $region29: #{generator_forward.6} parent=27 // pred_check
          %p201 = pneg %p79
        $region30: #{generator_forward.6} parent=27 // pred_check_branch
          %203 = sbr.rel (%p201) target = $region32
        $region31: #{generator_forward.6} parent=27 // pred_region
          %204 = dma.done %s197, 2048
        $region32: #{generator_forward.6} parent=27 // pred_fallthru
          _
        %s205 = smul.u32 4, %s23
        %p206 = scmp.lt.s32.totalorder %s22, 3
        %s207 = scalar_select %p206, %s22, 3
        %p208 = scmp.lt.s32.totalorder %s205, 3
        %s209 = scalar_select %p208, %s205, 3
        %s210 = smul.addr %s209, 2
        %s211 = smul.addr %s207, 8
        %s212 = sadd.s32 %s210, %s211
        %s213 = smul.addr %s212, 4
        %s214 = scalar_lea.vmem %s0, %s213
        %p215 = pneg %p53
        %p216 = pneg %p50
        %s217 = sand.u32 %s66, 1
        %s218 = scalar_lea.sflag [#allocation3], %s217
        %s219 = sand.u32 %s66, 1
        %s220 = smul.addr %s219, 128
        %s221 = scalar_lea.vmem [#allocation2], %s220
        %p222 = pneg %p79
        %p223 = pneg %p76
        %p224 = pneg %p107
        %p225 = pneg %p104
        %s226 = smul.u32 4, %s23
        %p227 = scmp.lt.s32.totalorder %s22, 3
        %s228 = scalar_select %p227, %s22, 3
        %p229 = scmp.lt.s32.totalorder %s226, 3
        %s230 = scalar_select %p229, %s226, 3
        %s231 = smul.addr %s228, 4
        %s232 = sadd.s32 %s230, %s231
        %s233 = smul.addr %s232, 4
        %s234 = scalar_lea.vmem %s2, %s233
        %p235 = pneg %p135
        %p236 = pneg %p132
        %p237 = scmp.lt.s32.totalorder %s22, 3
        %s238 = scalar_select %p237, %s22, 3
        %p239 = scmp.lt.s32.totalorder %s23, 0
        %s240 = scalar_select %p239, %s23, 0
        %s241 = sadd.s32 %s240, %s238
        %s242 = smul.addr %s241, 8
        %s243 = scalar_lea.vmem %s3, %s242
        %s244 = smul.u32 4, %s23
        %p245 = scmp.lt.s32.totalorder %s22, 3
        %s246 = scalar_select %p245, %s22, 3
        %p247 = scmp.lt.s32.totalorder %s244, 3
        %s248 = scalar_select %p247, %s244, 3
        %s249 = smul.addr %s248, 2
        %s250 = smul.addr %s246, 8
        %s251 = sadd.s32 %s249, %s250
        %s252 = smul.addr %s251, 4
        %s253 = scalar_lea.vmem %s0, %s252
        %s254 = smul.u32 4, %s23
        %s255 = smul.u32 4, %s23
        %p256 = scmp.lt.s32.totalorder %s22, 3
        %s257 = scalar_select %p256, %s22, 3
        %p258 = scmp.lt.s32.totalorder %s255, 3
        %s259 = scalar_select %p258, %s255, 3
        %s260 = smul.addr %s257, 4
        %s261 = sadd.s32 %s259, %s260
        %s262 = smul.addr %s261, 4
        %s263 = scalar_lea.vmem %s2, %s262
        %s264 = smul.u32 4, %s23
        %p265 = scmp.lt.s32.totalorder %s22, 3
        %s266 = scalar_select %p265, %s22, 3
        %p267 = scmp.lt.s32.totalorder %s23, 0
        %s268 = scalar_select %p267, %s23, 0
        %s269 = sadd.s32 %s268, %s266
        %s270 = smul.addr %s269, 8
        %s271 = scalar_lea.vmem %s3, %s270
        %v273 = vld [vmem:[%s253] sm:$0xff]
        %v274 = vld [vmem:[%s253 + $0x8] sm:$0xff]
        %v275 = vld [vmem:[%s253 + $0x10] sm:$0xff]
        %v276 = vld [vmem:[%s253 + $0x18] sm:$0xff]
        %v277 = vld [vmem:[%s200] sm:$0xf]
        %v278 = vld [vmem:[%s200 + $0x4] sm:$0xf]
        %v279 = vld [vmem:[%s200 + $0x8] sm:$0xf]
        %v280 = vld [vmem:[%s200 + $0xc] sm:$0xf]
        %v281 = vld [vmem:[%s200 + $0x10] sm:$0xf]
        %v282 = vld [vmem:[%s200 + $0x14] sm:$0xf]
        %v283 = vld [vmem:[%s200 + $0x18] sm:$0xf]
        %v284 = vld [vmem:[%s200 + $0x1c] sm:$0xf]
        %v285 = vld [vmem:[%s200 + $0x20] sm:$0xf]
        %v286 = vld [vmem:[%s200 + $0x24] sm:$0xf]
        %v287 = vld [vmem:[%s200 + $0x28] sm:$0xf]
        %v288 = vld [vmem:[%s200 + $0x2c] sm:$0xf]
        %v289 = vld [vmem:[%s200 + $0x30] sm:$0xf]
        %v290 = vld [vmem:[%s200 + $0x34] sm:$0xf]
        %v291 = vld [vmem:[%s200 + $0x38] sm:$0xf]
        %v292 = vld [vmem:[%s200 + $0x3c] sm:$0xf]
        %v293 = vld [vmem:[%s200 + $0x40] sm:$0xf]
        %v294 = vld [vmem:[%s200 + $0x44] sm:$0xf]
        %v295 = vld [vmem:[%s200 + $0x48] sm:$0xf]
        %v296 = vld [vmem:[%s200 + $0x4c] sm:$0xf]
        %v297 = vld [vmem:[%s200 + $0x50] sm:$0xf]
        %v298 = vld [vmem:[%s200 + $0x54] sm:$0xf]
        %v299 = vld [vmem:[%s200 + $0x58] sm:$0xf]
        %v300 = vld [vmem:[%s200 + $0x5c] sm:$0xf]
        %v301 = vld [vmem:[%s200 + $0x60] sm:$0xf]
        %v302 = vld [vmem:[%s200 + $0x64] sm:$0xf]
        %v303 = vld [vmem:[%s200 + $0x68] sm:$0xf]
        %v304 = vld [vmem:[%s200 + $0x6c] sm:$0xf]
        %v305 = vld [vmem:[%s200 + $0x70] sm:$0xf]
        %v306 = vld [vmem:[%s200 + $0x74] sm:$0xf]
        %v307 = vld [vmem:[%s200 + $0x78] sm:$0xf]
        %v308 = vld [vmem:[%s200 + $0x7c] sm:$0xf]
        %v313 = vunpack.c.l.b16 %v273
        %v314 = vunpack.c.h.b16 %v273
        %v315 = vunpack.c.l.b16 %v274
        %v316 = vunpack.c.h.b16 %v274
        %v317 = vunpack.c.l.b16 %v275
        %v318 = vunpack.c.h.b16 %v275
        %v319 = vunpack.c.l.b16 %v276
        %v320 = vunpack.c.h.b16 %v276
        %v321 = vpack.c.b16 %v315, %v313
        %v322 = vpack.c.b16 %v316, %v314
        %v323 = vpack.c.b16 %v319, %v317
        %v324 = vpack.c.b16 %v320, %v318
        %v361 = vunpack.c.l.b16 %v277
        %v362 = vunpack.c.l.b16 %v278
        %v363 = vunpack.c.l.b16 %v279
        %v364 = vunpack.c.l.b16 %v280
        %v365 = vunpack.c.l.b16 %v281
        %v366 = vunpack.c.l.b16 %v282
        %v367 = vunpack.c.l.b16 %v283
        %v368 = vunpack.c.l.b16 %v284
        %v369 = vunpack.c.l.b16 %v285
        %v370 = vunpack.c.l.b16 %v286
        %v371 = vunpack.c.l.b16 %v287
        %v372 = vunpack.c.l.b16 %v288
        %v373 = vunpack.c.l.b16 %v289
        %v374 = vunpack.c.l.b16 %v290
        %v375 = vunpack.c.l.b16 %v291
        %v376 = vunpack.c.l.b16 %v292
        %v377 = vunpack.c.l.b16 %v293
        %v378 = vunpack.c.l.b16 %v294
        %v379 = vunpack.c.l.b16 %v295
        %v380 = vunpack.c.l.b16 %v296
        %v381 = vunpack.c.l.b16 %v297
        %v382 = vunpack.c.l.b16 %v298
        %v383 = vunpack.c.l.b16 %v299
        %v384 = vunpack.c.l.b16 %v300
        %v385 = vunpack.c.l.b16 %v301
        %v386 = vunpack.c.l.b16 %v302
        %v387 = vunpack.c.l.b16 %v303
        %v388 = vunpack.c.l.b16 %v304
        %v389 = vunpack.c.l.b16 %v305
        %v390 = vunpack.c.l.b16 %v306
        %v391 = vunpack.c.l.b16 %v307
        %v392 = vunpack.c.l.b16 %v308
        %v393 = vpack.c.b16 %v362, %v361
        %v394 = vpack.c.b16 %v364, %v363
        %v395 = vpack.c.b16 %v366, %v365
        %v396 = vpack.c.b16 %v368, %v367
        %v397 = vpack.c.b16 %v370, %v369
        %v398 = vpack.c.b16 %v372, %v371
        %v399 = vpack.c.b16 %v374, %v373
        %v400 = vpack.c.b16 %v376, %v375
        %v401 = vpack.c.b16 %v378, %v377
        %v402 = vpack.c.b16 %v380, %v379
        %v403 = vpack.c.b16 %v382, %v381
        %v404 = vpack.c.b16 %v384, %v383
        %v405 = vpack.c.b16 %v386, %v385
        %v406 = vpack.c.b16 %v388, %v387
        %v407 = vpack.c.b16 %v390, %v389
        %v408 = vpack.c.b16 %v392, %v391
        %425 = vmatprep.subr.bf16.mxu0 0
        %426 = vmatpush1.bf16.msra.mxu0 %v400
        %427 = vmatprep.subr.bf16.mxu0 0
        %428 = vmatpush1.bf16.msra.mxu0 %v399
        %429 = vmatprep.subr.bf16.mxu0 0
        %430 = vmatpush1.bf16.msra.mxu0 %v398
        %431 = vmatprep.subr.bf16.mxu0 0
        %432 = vmatpush1.bf16.msra.mxu0 %v397
        %433 = vmatprep.subr.bf16.mxu0 0
        %434 = vmatpush1.bf16.msra.mxu0 %v396
        %435 = vmatprep.subr.bf16.mxu0 0
        %436 = vmatpush1.bf16.msra.mxu0 %v395
        %437 = vmatprep.subr.bf16.mxu0 0
        %438 = vmatpush1.bf16.msra.mxu0 %v394
        %439 = vmatprep.subr.bf16.mxu0 0
        %440 = vmatpush1.bf16.msra.mxu0 %v393
        %441 = vmatprep.subr.bf16.mxu0 0
        %442 = vmatpush2.bf16.msra.mxu0 %v408
        %443 = vmatprep.subr.bf16.mxu0 0
        %444 = vmatpush2.bf16.msra.mxu0 %v407
        %445 = vmatprep.subr.bf16.mxu0 0
        %446 = vmatpush2.bf16.msra.mxu0 %v406
        %447 = vmatprep.subr.bf16.mxu0 0
        %448 = vmatpush2.bf16.msra.mxu0 %v405
        %449 = vmatprep.subr.bf16.mxu0 0
        %450 = vmatpush2.bf16.msra.mxu0 %v404
        %451 = vmatprep.subr.bf16.mxu0 0
        %452 = vmatpush2.bf16.msra.mxu0 %v403
        %453 = vmatprep.subr.bf16.mxu0 0
        %454 = vmatpush2.bf16.msra.mxu0 %v402
        %455 = vmatprep.subr.bf16.mxu0 0
        %456 = vmatpush2.bf16.msra.mxu0 %v401
        %457 = vmatprep.mubr.bf16.mxu0 %v322
        %458 = vmatmul.mubr.bf16.gmra.mxu0 %v321
        %v459 = vpop.f32.mrf.mxu0
        %v460 = vadd.f32 0.0, %v459
        %v461 = vpop.f32.mrf.mxu0
        %v462 = vpop.f32.mrf.mxu0
        %v463 = vadd.f32 0.0, %v462
        %v464 = vpop.f32.mrf.mxu0
        %465 = vmatprep.mubr.bf16.mxu0 %v324
        %466 = vmatmul.mubr.bf16.gmra.mxu0 %v323
        %v467 = vpop.f32.mrf.mxu0
        %v468 = vadd.f32 0.0, %v467
        %v469 = vpop.f32.mrf.mxu0
        %v470 = vpop.f32.mrf.mxu0
        %v471 = vadd.f32 0.0, %v470
        %v472 = vpop.f32.mrf.mxu0
        %473 = vdwg.mxu0
        %v474 = vpack.c.bf16 %v463, %v460
        %v475 = vpack.c.bf16 %v471, %v468
        %v478 = vunpack.c.l.b16 %v474
        %v479 = vunpack.c.h.b16 %v474
        %v480 = vunpack.c.l.b16 %v475
        %v481 = vunpack.c.h.b16 %v475
        %v482 = vpack.c.b16 %v478, %v478
        %v483 = vpack.c.b16 %v479, %v479
        %v484 = vpack.c.b16 %v480, %v480
        %v485 = vpack.c.b16 %v481, %v481
        %490 = vst [vmem:[%s263] sm:$0xf] %v482
        %491 = vst [vmem:[%s263 + $0x4] sm:$0xf] %v483
        %492 = vst [vmem:[%s263 + $0x8] sm:$0xf] %v484
        %493 = vst [vmem:[%s263 + $0xc] sm:$0xf] %v485
        %v494 = vadd.f32 %v460, %v463
        %v495 = vadd.f32 %v494, %v468
        %v496 = vadd.f32 %v495, %v471
        %v497 = vrot.slane %v496, 4
        %v498 = vadd.f32 %v496, %v497
        %v499 = vrot.slane %v498, 2
        %v500 = vadd.f32 %v498, %v499
        %v501 = vrot.slane %v500, 1
        %v502 = vadd.f32 %v500, %v501
        %v503 = vmul.f32 %v460, %v460
        %v504 = vmul.f32 %v463, %v463
        %v505 = vmul.f32 %v468, %v468
        %v506 = vmul.f32 %v471, %v471
        %v507 = vadd.f32 %v503, %v504
        %v508 = vadd.f32 %v507, %v505
        %v509 = vadd.f32 %v508, %v506
        %v510 = vrot.slane %v509, 4
        %v511 = vadd.f32 %v509, %v510
        %v512 = vrot.slane %v511, 2
        %v513 = vadd.f32 %v511, %v512
        %v514 = vrot.slane %v513, 1
        %v515 = vadd.f32 %v513, %v514
        %v516 = vlaneseq
        %v517 = vshrl.u32 %v516, 7
        %vm518 = vcmp.eq.s32.totalorder %v517, 0
        %v519 = vsel %vm518, %v502, %v515
        %520 = vst [vmem:[%s271] sm:$0xff] %v519
        %s521 = smul.u32 4, %s23
        %p522 = scmp.lt.s32.totalorder %s22, 3
        %s523 = scalar_select %p522, %s22, 3
        %p524 = scmp.lt.s32.totalorder %s521, 3
        %s525 = scalar_select %p524, %s521, 3
        %s526 = smul.addr %s523, 4
        %s527 = sadd.s32 %s525, %s526
        %s528 = smul.addr %s527, 4
        %s529 = scalar_lea.vmem %s2, %s528
        %p530 = scmp.lt.s32.totalorder %s22, 3
        %s531 = scalar_select %p530, %s22, 3
        %p532 = scmp.lt.s32.totalorder %s23, 0
        %s533 = scalar_select %p532, %s23, 0
        %s534 = sadd.s32 %s533, %s531
        %s535 = smul.addr %s534, 8
        %s536 = scalar_lea.vmem %s3, %s535
        // Predicated region
        $region33: #{generator_forward.6} parent=27 // pred_check
          %p537 = pneg %p104
        $region34: #{generator_forward.6} parent=27 // pred_check_branch
          %539 = sbr.rel (%p537) target = $region36
        $region35: #{generator_forward.6} parent=27 // pred_region
          %s540 = smul.u32 4, %s23
        $region36: #{generator_forward.6} parent=27 // pred_fallthru
          _
        // Predicated region
        $region37: #{generator_forward.6} parent=27 // pred_check
          %p541 = pneg %p132
        $region38: #{generator_forward.6} parent=27 // pred_check_branch
          %543 = sbr.rel (%p541) target = $region40
        $region39: #{generator_forward.6} parent=27 // pred_region
          _
        $region40: #{generator_forward.6} parent=27 // pred_fallthru
          _
      $region28: #{generator_forward.6} parent=5 // pred_fallthru
        _
      %p544 = scmp.le.s32.totalorder 2, %s13
      // Predicated region
      $region41: #{generator_forward.6} parent=5 // pred_check
        %p545 = pneg %p544
      $region42: #{generator_forward.6} parent=5 // pred_check_branch
        %547 = sbr.rel (%p545) target = $region44
      $region43: #{generator_forward.6} parent=5 // pred_region
        %s548 = ssub.s32 %s13, 2
        // Predicated region
        $region45: #{generator_forward.6} parent=43 // pred_check
          %p549 = pneg %p110
        $region46: #{generator_forward.6} parent=43 // pred_check_branch
          %551 = sbr.rel (%p549) target = $region48
        $region47: #{generator_forward.6} parent=43 // pred_region
          %s552 = smul.u32 4, %s25
          %p553 = scmp.lt.s32.totalorder %s24, 3
          %s554 = scalar_select %p553, %s24, 3
          %p555 = scmp.lt.s32.totalorder %s552, 3
          %s556 = scalar_select %p555, %s552, 3
          %s557 = smul.addr %s554, 4
          %s558 = sadd.s32 %s556, %s557
          %s559 = smul.addr %s558, 4
          %s560 = scalar_lea.vmem %s2, %s559
        $region48: #{generator_forward.6} parent=43 // pred_fallthru
          _
        // Predicated region
        $region49: #{generator_forward.6} parent=43 // pred_check
          %p561 = pneg %p138
        $region50: #{generator_forward.6} parent=43 // pred_check_branch
          %563 = sbr.rel (%p561) target = $region52
        $region51: #{generator_forward.6} parent=43 // pred_region
          %p564 = scmp.lt.s32.totalorder %s24, 3
          %s565 = scalar_select %p564, %s24, 3
          %p566 = scmp.lt.s32.totalorder %s25, 0
          %s567 = scalar_select %p566, %s25, 0
          %s568 = sadd.s32 %s567, %s565
          %s569 = smul.addr %s568, 8
          %s570 = scalar_lea.vmem %s3, %s569
        $region52: #{generator_forward.6} parent=43 // pred_fallthru
          _
      $region44: #{generator_forward.6} parent=5 // pred_fallthru
        _
    $region6: #{generator_forward.6} parent=1 // loop_footer
      %s17 = sadd.s32 1, %s13
    $region7: #{generator_forward.6} parent=1 // loop_footer_branch
      %12 = sbr.rel target = $region3
    $region8: #{generator_forward.6} parent=1 // loop_exit
      _
    %571 = vsyncpa [#allocation3], 1
    %s572 = scalar_lea.sflag [#allocation3], 1
    %573 = vsyncpa %s572, 1

// kernel: generator_forward.7
$region0: #{generator_forward.7}
  #allocation0 [shape = 'u32[]', space=smem, size = 0x4, offset = 0x4, fixed_abs, tag = 'smem constant byte address 0x4 - core index']
  #allocation1 [shape = 'u32[144,128]{1,0:T(1,128)}', space=vmem, size = 0x12000, scoped, tag = 'internal scratch']
  %s0 = inlined_call_operand.vmem [shape: bf16[4,128,128], index: 0, kind: input, shape index: {}]
  %s1 = inlined_call_operand.vmem [shape: bf16[4,128,128], index: 1, kind: input, shape index: {}]
  %s2 = inlined_call_operand.vmem [shape: bf16[4,128,128], index: 2, kind: output, shape index: {0}]
  %s3 = inlined_call_operand.vmem [shape: f32[4,8,128], index: 3, kind: output, shape index: {1}]
  %4 = xla_tuple %s2, %s3
  %s5 = sld [smem:[#allocation0]]
  $region49: #{generator_forward.7} parent=0
    _
  %s7 = ssub.s32 1, %s5
  %s8 = scalar_select 0, %s7, %s5
  loop: start=0, step=1, limit=6
  $region2: #{generator_forward.7} parent=0 // loop_pre_header
    _
  $region3: #{generator_forward.7} parent=0 // loop_header
    %s10 = sphi 0, %s14
    %p11 = scmp.ge.s32.totalorder %s10, 6
    %s17 = sphi 0, %s29
    %s18 = sphi 0, %s25
    %s19 = sphi 0, %s17
    %s20 = sphi 0, %s18
    %s21 = sphi 0, %s19
    %s22 = sphi 0, %s20
    %s34 = sphi 0, %s36
    %s37 = sphi 0, %s34
    %s38 = sphi 0, %s37
    %s54 = sphi 0, %s38
    %s60 = sphi 0, %s62
    %s63 = sphi 0, %s60
    %s64 = sphi 0, %s63
    %s80 = sphi 0, %s64
    %s88 = sphi 0, %s90
    %s91 = sphi 0, %s88
    %s92 = sphi 0, %s91
    %s108 = sphi 0, %s92
    %s116 = sphi 0, %s118
    %s119 = sphi 0, %s116
    %s120 = sphi 0, %s119
    %s136 = sphi 0, %s120
  $region4: #{generator_forward.7} parent=0 // loop_header_branch
    %13 = sbr.rel (%p11) target = $region8
  $region5: #{generator_forward.7} parent=0 // loop_body
    %s15 = ssub.s32 %s10, 1
    %s16 = ssub.s32 %s10, 2
    %s23 = sadd.s32 1, %s18
    %p24 = scmp.ge.s32.totalorder %s23, 1
    %s25 = scalar_select %p24, 0, %s23
    %s26 = sadd.s32 1, %s17
    %s27 = scalar_select %p24, %s26, %s17
    %p28 = scmp.ge.s32.totalorder %s27, 4
    %s29 = scalar_select %p28, 0, %s27
    %s30 = ssub.s32 %s17, %s29
    %s31 = ssub.s32 %s18, %s25
    %s32 = sor.u32 %s30, %s31
    %p33 = scmp.eq.s32.totalorder %s32, 0
    %s35 = sadd.s32 %s34, 1
    %s36 = scalar_select %p33, %s34, %s35
    %p39 = pneg %p33
    %p40 = scmp.eq.s32.totalorder %s10, 3
    %p41 = por %p39, %p40
    %p42 = scmp.ne.s32.totalorder %s34, %s37
    %p43 = scmp.eq.s32.totalorder %s10, 0
    %p44 = por %p42, %p43
    %p45 = scmp.ne.s32.totalorder %s34, %s37
    %p46 = scmp.eq.s32.totalorder %s15, 3
    %p47 = por %p45, %p46
    %p48 = scmp.ne.s32.totalorder %s37, %s38
    %p49 = scmp.eq.s32.totalorder %s15, 0
    %p50 = por %p48, %p49
    %p51 = scmp.ne.s32.totalorder %s37, %s38
    %p52 = scmp.eq.s32.totalorder %s16, 3
    %p53 = por %p51, %p52
    %p55 = scmp.ne.s32.totalorder %s38, %s54
    %p56 = scmp.eq.s32.totalorder %s16, 0
    %p57 = por %p55, %p56
    %s58 = ssub.s32 %s17, %s29
    %p59 = scmp.eq.s32.totalorder %s58, 0
    %s61 = sadd.s32 %s60, 1
    %s62 = scalar_select %p59, %s60, %s61
    %p65 = pneg %p59
    %p66 = scmp.eq.s32.totalorder %s10, 3
    %p67 = por %p65, %p66
    %p68 = scmp.ne.s32.totalorder %s60, %s63
    %p69 = scmp.eq.s32.totalorder %s10, 0
    %p70 = por %p68, %p69
    %p71 = scmp.ne.s32.totalorder %s60, %s63
    %p72 = scmp.eq.s32.totalorder %s15, 3
    %p73 = por %p71, %p72
    %p74 = scmp.ne.s32.totalorder %s63, %s64
    %p75 = scmp.eq.s32.totalorder %s15, 0
    %p76 = por %p74, %p75
    %p77 = scmp.ne.s32.totalorder %s63, %s64
    %p78 = scmp.eq.s32.totalorder %s16, 3
    %p79 = por %p77, %p78
    %p81 = scmp.ne.s32.totalorder %s64, %s80
    %p82 = scmp.eq.s32.totalorder %s16, 0
    %p83 = por %p81, %p82
    %s84 = ssub.s32 %s17, %s29
    %s85 = ssub.s32 %s18, %s25
    %s86 = sor.u32 %s84, %s85
    %p87 = scmp.eq.s32.totalorder %s86, 0
    %s89 = sadd.s32 %s88, 1
    %s90 = scalar_select %p87, %s88, %s89
    %p93 = pneg %p87
    %p94 = scmp.eq.s32.totalorder %s10, 3
    %p95 = por %p93, %p94
    %p96 = scmp.ne.s32.totalorder %s88, %s91
    %p97 = scmp.eq.s32.totalorder %s10, 0
    %p98 = por %p96, %p97
    %p99 = scmp.ne.s32.totalorder %s88, %s91
    %p100 = scmp.eq.s32.totalorder %s15, 3
    %p101 = por %p99, %p100
    %p102 = scmp.ne.s32.totalorder %s91, %s92
    %p103 = scmp.eq.s32.totalorder %s15, 0
    %p104 = por %p102, %p103
    %p105 = scmp.ne.s32.totalorder %s91, %s92
    %p106 = scmp.eq.s32.totalorder %s16, 3
    %p107 = por %p105, %p106
    %p109 = scmp.ne.s32.totalorder %s92, %s108
    %p110 = scmp.eq.s32.totalorder %s16, 0
    %p111 = por %p109, %p110
    %s112 = ssub.s32 %s17, %s29
    %s113 = ssub.s32 %s18, %s25
    %s114 = sor.u32 %s112, %s113
    %p115 = scmp.eq.s32.totalorder %s114, 0
    %s117 = sadd.s32 %s116, 1
    %s118 = scalar_select %p115, %s116, %s117
    %p121 = pneg %p115
    %p122 = scmp.eq.s32.totalorder %s10, 3
    %p123 = por %p121, %p122
    %p124 = scmp.ne.s32.totalorder %s116, %s119
    %p125 = scmp.eq.s32.totalorder %s10, 0
    %p126 = por %p124, %p125
    %p127 = scmp.ne.s32.totalorder %s116, %s119
    %p128 = scmp.eq.s32.totalorder %s15, 3
    %p129 = por %p127, %p128
    %p130 = scmp.ne.s32.totalorder %s119, %s120
    %p131 = scmp.eq.s32.totalorder %s15, 0
    %p132 = por %p130, %p131
    %p133 = scmp.ne.s32.totalorder %s119, %s120
    %p134 = scmp.eq.s32.totalorder %s16, 3
    %p135 = por %p133, %p134
    %p137 = scmp.ne.s32.totalorder %s120, %s136
    %p138 = scmp.eq.s32.totalorder %s16, 0
    %p139 = por %p137, %p138
    %p140 = scmp.le.s32.totalorder 1, %s10
    %p141 = scmp.lt.s32.totalorder %s10, 5
    %p142 = pnand %p140, %p141
    %p143 = pneg %p142
    // Predicated region
    $region9: #{generator_forward.7} parent=5 // pred_check
      _
    $region10: #{generator_forward.7} parent=5 // pred_check_branch
      %145 = sbr.rel (%p142) target = $region12
    $region11: #{generator_forward.7} parent=5 // pred_region
      %s146 = ssub.s32 %s10, 1
    $region12: #{generator_forward.7} parent=5 // pred_fallthru
      _
    %p147 = scmp.lt.s32.totalorder %s10, 4
    // Predicated region
    $region13: #{generator_forward.7} parent=5 // pred_check
      %p148 = pneg %p147
    $region14: #{generator_forward.7} parent=5 // pred_check_branch
      %150 = sbr.rel (%p148) target = $region16
    $region15: #{generator_forward.7} parent=5 // pred_region
      // Predicated region
      $region17: #{generator_forward.7} parent=15 // pred_check
        %p151 = pneg %p44
      $region18: #{generator_forward.7} parent=15 // pred_check_branch
        %153 = sbr.rel (%p151) target = $region20
      $region19: #{generator_forward.7} parent=15 // pred_region
        %s154 = smul.u32 16, %s18
        %p155 = scmp.lt.s32.totalorder %s17, 3
        %s156 = scalar_select %p155, %s17, 3
        %p157 = scmp.lt.s32.totalorder %s154, 15
        %s158 = scalar_select %p157, %s154, 15
        %s159 = smul.addr %s156, 16
        %s160 = sadd.s32 %s158, %s159
        %s161 = smul.addr %s160, 4
        %s162 = scalar_lea.vmem %s0, %s161
        %s163 = smul.u32 16, %s18
      $region20: #{generator_forward.7} parent=15 // pred_fallthru
        _
      // Predicated region
      $region21: #{generator_forward.7} parent=15 // pred_check
        %p164 = pneg %p70
      $region22: #{generator_forward.7} parent=15 // pred_check_branch
        %166 = sbr.rel (%p164) target = $region24
      $region23: #{generator_forward.7} parent=15 // pred_region
        %p167 = scmp.lt.s32.totalorder %s17, 3
        %s168 = scalar_select %p167, %s17, 3
        %s169 = smul.addr %s168, 16
        %s170 = smul.addr %s169, 4
        %s171 = scalar_lea.vmem %s1, %s170
      $region24: #{generator_forward.7} parent=15 // pred_fallthru
        _
    $region16: #{generator_forward.7} parent=5 // pred_fallthru
      _
    %p172 = scmp.le.s32.totalorder 1, %s10
    %p173 = scmp.lt.s32.totalorder %s10, 5
    %p174 = pnand %p172, %p173
    %p175 = pneg %p174
    // Predicated region
    $region25: #{generator_forward.7} parent=5 // pred_check
      _
    $region26: #{generator_forward.7} parent=5 // pred_check_branch
      %177 = sbr.rel (%p174) target = $region28
    $region27: #{generator_forward.7} parent=5 // pred_region
      %s178 = ssub.s32 %s10, 1
      %s179 = smul.u32 16, %s20
      %p180 = scmp.lt.s32.totalorder %s19, 3
      %s181 = scalar_select %p180, %s19, 3
      %p182 = scmp.lt.s32.totalorder %s179, 15
      %s183 = scalar_select %p182, %s179, 15
      %s184 = smul.addr %s181, 16
      %s185 = sadd.s32 %s183, %s184
      %s186 = smul.addr %s185, 4
      %s187 = scalar_lea.vmem %s0, %s186
      %p188 = pneg %p50
      %p189 = pneg %p47
      %p190 = scmp.lt.s32.totalorder %s19, 3
      %s191 = scalar_select %p190, %s19, 3
      %s192 = smul.addr %s191, 16
      %s193 = smul.addr %s192, 4
      %s194 = scalar_lea.vmem %s1, %s193
      %p195 = pneg %p76
      %p196 = pneg %p73
      %p197 = pneg %p104
      %p198 = pneg %p101
      %s199 = smul.u32 16, %s20
      %p200 = scmp.lt.s32.totalorder %s19, 3
      %s201 = scalar_select %p200, %s19, 3
      %p202 = scmp.lt.s32.totalorder %s199, 15
      %s203 = scalar_select %p202, %s199, 15
      %s204 = smul.addr %s201, 16
      %s205 = sadd.s32 %s203, %s204
      %s206 = smul.addr %s205, 4
      %s207 = scalar_lea.vmem %s2, %s206
      %p208 = pneg %p132
      %p209 = pneg %p129
      %p210 = scmp.lt.s32.totalorder %s19, 3
      %s211 = scalar_select %p210, %s19, 3
      %p212 = scmp.lt.s32.totalorder %s20, 0
      %s213 = scalar_select %p212, %s20, 0
      %s214 = sadd.s32 %s213, %s211
      %s215 = smul.addr %s214, 8
      %s216 = scalar_lea.vmem %s3, %s215
      %s217 = smul.u32 16, %s20
      %p218 = scmp.lt.s32.totalorder %s19, 3
      %s219 = scalar_select %p218, %s19, 3
      %p220 = scmp.lt.s32.totalorder %s217, 15
      %s221 = scalar_select %p220, %s217, 15
      %s222 = smul.addr %s219, 16
      %s223 = sadd.s32 %s221, %s222
      %s224 = smul.addr %s223, 4
      %s225 = scalar_lea.vmem %s0, %s224
      %s226 = smul.u32 16, %s20
      %p227 = scmp.lt.s32.totalorder %s19, 3
      %s228 = scalar_select %p227, %s19, 3
      %s229 = smul.addr %s228, 16
      %s230 = smul.addr %s229, 4
      %s231 = scalar_lea.vmem %s1, %s230
      %s232 = smul.u32 16, %s20
      %p233 = scmp.lt.s32.totalorder %s19, 3
      %s234 = scalar_select %p233, %s19, 3
      %p235 = scmp.lt.s32.totalorder %s232, 15
      %s236 = scalar_select %p235, %s232, 15
      %s237 = smul.addr %s234, 16
      %s238 = sadd.s32 %s236, %s237
      %s239 = smul.addr %s238, 4
      %s240 = scalar_lea.vmem %s2, %s239
      %s241 = smul.u32 16, %s20
      %p242 = scmp.lt.s32.totalorder %s19, 3
      %s243 = scalar_select %p242, %s19, 3
      %p244 = scmp.lt.s32.totalorder %s20, 0
      %s245 = scalar_select %p244, %s20, 0
      %s246 = sadd.s32 %s245, %s243
      %s247 = smul.addr %s246, 8
      %s248 = scalar_lea.vmem %s3, %s247
      %v250 = vld [vmem:[%s225] sm:$0xf]
      %v251 = vld [vmem:[%s225 + $0x4] sm:$0xf]
      %v252 = vld [vmem:[%s225 + $0x8] sm:$0xf]
      %v253 = vld [vmem:[%s225 + $0xc] sm:$0xf]
      %v254 = vld [vmem:[%s225 + $0x10] sm:$0xf]
      %v255 = vld [vmem:[%s225 + $0x14] sm:$0xf]
      %v256 = vld [vmem:[%s225 + $0x18] sm:$0xf]
      %v257 = vld [vmem:[%s225 + $0x1c] sm:$0xf]
      %v258 = vld [vmem:[%s225 + $0x20] sm:$0xf]
      %v259 = vld [vmem:[%s225 + $0x24] sm:$0xf]
      %v260 = vld [vmem:[%s225 + $0x28] sm:$0xf]
      %v261 = vld [vmem:[%s225 + $0x2c] sm:$0xf]
      %v262 = vld [vmem:[%s225 + $0x30] sm:$0xf]
      %v263 = vld [vmem:[%s225 + $0x34] sm:$0xf]
      %v264 = vld [vmem:[%s225 + $0x38] sm:$0xf]
      %v265 = vld [vmem:[%s225 + $0x3c] sm:$0xf]
      %v266 = vld [vmem:[%s231] sm:$0xf]
      %v267 = vld [vmem:[%s231 + $0x4] sm:$0xf]
      %v268 = vld [vmem:[%s231 + $0x8] sm:$0xf]
      %v269 = vld [vmem:[%s231 + $0xc] sm:$0xf]
      %v270 = vld [vmem:[%s231 + $0x10] sm:$0xf]
      %v271 = vld [vmem:[%s231 + $0x14] sm:$0xf]
      %v272 = vld [vmem:[%s231 + $0x18] sm:$0xf]
      %v273 = vld [vmem:[%s231 + $0x1c] sm:$0xf]
      %v274 = vld [vmem:[%s231 + $0x20] sm:$0xf]
      %v275 = vld [vmem:[%s231 + $0x24] sm:$0xf]
      %v276 = vld [vmem:[%s231 + $0x28] sm:$0xf]
      %v277 = vld [vmem:[%s231 + $0x2c] sm:$0xf]
      %v278 = vld [vmem:[%s231 + $0x30] sm:$0xf]
      %v279 = vld [vmem:[%s231 + $0x34] sm:$0xf]
      %v280 = vld [vmem:[%s231 + $0x38] sm:$0xf]
      %v281 = vld [vmem:[%s231 + $0x3c] sm:$0xf]
      %v298 = vunpack.c.l.b16 %v250
      %v299 = vunpack.c.l.b16 %v251
      %v300 = vunpack.c.l.b16 %v252
      %v301 = vunpack.c.l.b16 %v253
      %v302 = vunpack.c.l.b16 %v254
      %v303 = vunpack.c.l.b16 %v255
      %v304 = vunpack.c.l.b16 %v256
      %v305 = vunpack.c.l.b16 %v257
      %v306 = vunpack.c.l.b16 %v258
      %v307 = vunpack.c.l.b16 %v259
      %v308 = vunpack.c.l.b16 %v260
      %v309 = vunpack.c.l.b16 %v261
      %v310 = vunpack.c.l.b16 %v262
      %v311 = vunpack.c.l.b16 %v263
      %v312 = vunpack.c.l.b16 %v264
      %v313 = vunpack.c.l.b16 %v265
      %v314 = vpack.c.b16 %v299, %v298
      %v315 = vpack.c.b16 %v301, %v300
      %v316 = vpack.c.b16 %v303, %v302
      %v317 = vpack.c.b16 %v305, %v304
      %v318 = vpack.c.b16 %v307, %v306
      %v319 = vpack.c.b16 %v309, %v308
      %v320 = vpack.c.b16 %v311, %v310
      %v321 = vpack.c.b16 %v313, %v312
      %v346 = vunpack.c.l.b16 %v266
      %v347 = vunpack.c.l.b16 %v267
      %v348 = vunpack.c.l.b16 %v268
      %v349 = vunpack.c.l.b16 %v269
      %v350 = vunpack.c.l.b16 %v270
      %v351 = vunpack.c.l.b16 %v271
      %v352 = vunpack.c.l.b16 %v272
      %v353 = vunpack.c.l.b16 %v273
      %v354 = vunpack.c.l.b16 %v274
      %v355 = vunpack.c.l.b16 %v275
      %v356 = vunpack.c.l.b16 %v276
      %v357 = vunpack.c.l.b16 %v277
      %v358 = vunpack.c.l.b16 %v278
      %v359 = vunpack.c.l.b16 %v279
      %v360 = vunpack.c.l.b16 %v280
      %v361 = vunpack.c.l.b16 %v281
      %v362 = vpack.c.b16 %v347, %v346
      %v363 = vpack.c.b16 %v349, %v348
      %v364 = vpack.c.b16 %v351, %v350
      %v365 = vpack.c.b16 %v353, %v352
      %v366 = vpack.c.b16 %v355, %v354
      %v367 = vpack.c.b16 %v357, %v356
      %v368 = vpack.c.b16 %v359, %v358
      %v369 = vpack.c.b16 %v361, %v360
      %378 = vmatprep.subr.bf16.mxu0 0
      %379 = vmatpush1.bf16.msra.mxu0 %v369
      %380 = vmatprep.subr.bf16.mxu0 0
      %381 = vmatpush1.bf16.msra.mxu0 %v368
      %382 = vmatprep.subr.bf16.mxu0 0
      %383 = vmatpush1.bf16.msra.mxu0 %v367
      %384 = vmatprep.subr.bf16.mxu0 0
      %385 = vmatpush1.bf16.msra.mxu0 %v366
      %386 = vmatprep.subr.bf16.mxu0 0
      %387 = vmatpush1.bf16.msra.mxu0 %v365
      %388 = vmatprep.subr.bf16.mxu0 0
      %389 = vmatpush1.bf16.msra.mxu0 %v364
      %390 = vmatprep.subr.bf16.mxu0 0
      %391 = vmatpush1.bf16.msra.mxu0 %v363
      %392 = vmatprep.subr.bf16.mxu0 0
      %393 = vmatpush1.bf16.msra.mxu0 %v362
      %394 = vmatprep.subr.bf16.mxu0 0
      %395 = vmatpush2.bf16.msra.mxu0 0
      %396 = vmatprep.subr.bf16.mxu0 0
      %397 = vmatpush2.bf16.msra.mxu0 0
      %398 = vmatprep.subr.bf16.mxu0 0
      %399 = vmatpush2.bf16.msra.mxu0 0
      %400 = vmatprep.subr.bf16.mxu0 0
      %401 = vmatpush2.bf16.msra.mxu0 0
      %402 = vmatprep.subr.bf16.mxu0 0
      %403 = vmatpush2.bf16.msra.mxu0 0
      %404 = vmatprep.subr.bf16.mxu0 0
      %405 = vmatpush2.bf16.msra.mxu0 0
      %406 = vmatprep.subr.bf16.mxu0 0
      %407 = vmatpush2.bf16.msra.mxu0 0
      %408 = vmatprep.subr.bf16.mxu0 0
      %409 = vmatpush2.bf16.msra.mxu0 0
      %410 = vmatprep.mubr.bf16.mxu0 0
      %411 = vmatmul.mubr.bf16.gmra.mxu0 %v314
      %v412 = vpop.f32.mrf.mxu0
      %v413 = vadd.f32 0.0, %v412
      %v414 = vpop.f32.mrf.mxu0
      %v415 = vpop.f32.mrf.mxu0
      %v416 = vadd.f32 0.0, %v415
      %v417 = vpop.f32.mrf.mxu0
      %418 = vmatprep.mubr.bf16.mxu0 0
      %419 = vmatmul.mubr.bf16.gmra.mxu0 %v315
      %v420 = vpop.f32.mrf.mxu0
      %v421 = vadd.f32 0.0, %v420
      %v422 = vpop.f32.mrf.mxu0
      %v423 = vpop.f32.mrf.mxu0
      %v424 = vadd.f32 0.0, %v423
      %v425 = vpop.f32.mrf.mxu0
      %426 = vmatprep.mubr.bf16.mxu0 0
      %427 = vmatmul.mubr.bf16.gmra.mxu0 %v316
      %v428 = vpop.f32.mrf.mxu0
      %v429 = vadd.f32 0.0, %v428
      %v430 = vpop.f32.mrf.mxu0
      %v431 = vpop.f32.mrf.mxu0
      %v432 = vadd.f32 0.0, %v431
      %v433 = vpop.f32.mrf.mxu0
      %434 = vmatprep.mubr.bf16.mxu0 0
      %435 = vmatmul.mubr.bf16.gmra.mxu0 %v317
      %v436 = vpop.f32.mrf.mxu0
      %v437 = vadd.f32 0.0, %v436
      %v438 = vpop.f32.mrf.mxu0
      %v439 = vpop.f32.mrf.mxu0
      %v440 = vadd.f32 0.0, %v439
      %v441 = vpop.f32.mrf.mxu0
      %442 = vmatprep.mubr.bf16.mxu0 0
      %443 = vmatmul.mubr.bf16.gmra.mxu0 %v318
      %v444 = vpop.f32.mrf.mxu0
      %v445 = vadd.f32 0.0, %v444
      %v446 = vpop.f32.mrf.mxu0
      %v447 = vpop.f32.mrf.mxu0
      %v448 = vadd.f32 0.0, %v447
      %v449 = vpop.f32.mrf.mxu0
      %450 = vmatprep.mubr.bf16.mxu0 0
      %451 = vmatmul.mubr.bf16.gmra.mxu0 %v319
      %v452 = vpop.f32.mrf.mxu0
      %v453 = vadd.f32 0.0, %v452
      %v454 = vpop.f32.mrf.mxu0
      %v455 = vpop.f32.mrf.mxu0
      %v456 = vadd.f32 0.0, %v455
      %v457 = vpop.f32.mrf.mxu0
      %458 = vmatprep.mubr.bf16.mxu0 0
      %459 = vmatmul.mubr.bf16.gmra.mxu0 %v320
      %v460 = vpop.f32.mrf.mxu0
      %v461 = vadd.f32 0.0, %v460
      %v462 = vpop.f32.mrf.mxu0
      %v463 = vpop.f32.mrf.mxu0
      %v464 = vadd.f32 0.0, %v463
      %v465 = vpop.f32.mrf.mxu0
      %466 = vmatprep.mubr.bf16.mxu0 0
      %467 = vmatmul.mubr.bf16.gmra.mxu0 %v321
      %v468 = vpop.f32.mrf.mxu0
      %v469 = vadd.f32 0.0, %v468
      %v470 = vpop.f32.mrf.mxu0
      %v471 = vpop.f32.mrf.mxu0
      %v472 = vadd.f32 0.0, %v471
      %v473 = vpop.f32.mrf.mxu0
      %474 = vdwg.mxu0
      %v475 = vpack.c.bf16 %v416, %v413
      %v476 = vpack.c.bf16 %v424, %v421
      %v477 = vpack.c.bf16 %v432, %v429
      %v478 = vpack.c.bf16 %v440, %v437
      %v479 = vpack.c.bf16 %v448, %v445
      %v480 = vpack.c.bf16 %v456, %v453
      %v481 = vpack.c.bf16 %v464, %v461
      %v482 = vpack.c.bf16 %v472, %v469
      %v491 = vunpack.c.l.b16 %v475
      %v492 = vunpack.c.h.b16 %v475
      %v493 = vunpack.c.l.b16 %v476
      %v494 = vunpack.c.h.b16 %v476
      %v495 = vunpack.c.l.b16 %v477
      %v496 = vunpack.c.h.b16 %v477
      %v497 = vunpack.c.l.b16 %v478
      %v498 = vunpack.c.h.b16 %v478
      %v499 = vunpack.c.l.b16 %v479
      %v500 = vunpack.c.h.b16 %v479
      %v501 = vunpack.c.l.b16 %v480
      %v502 = vunpack.c.h.b16 %v480
      %v503 = vunpack.c.l.b16 %v481
      %v504 = vunpack.c.h.b16 %v481
      %v505 = vunpack.c.l.b16 %v482
      %v506 = vunpack.c.h.b16 %v482
      %v507 = vpack.c.b16 %v491, %v491
      %v508 = vpack.c.b16 %v492, %v492
      %v509 = vpack.c.b16 %v493, %v493
      %v510 = vpack.c.b16 %v494, %v494
      %v511 = vpack.c.b16 %v495, %v495
      %v512 = vpack.c.b16 %v496, %v496
      %v513 = vpack.c.b16 %v497, %v497
      %v514 = vpack.c.b16 %v498, %v498
      %v515 = vpack.c.b16 %v499, %v499
      %v516 = vpack.c.b16 %v500, %v500
      %v517 = vpack.c.b16 %v501, %v501
      %v518 = vpack.c.b16 %v502, %v502
      %v519 = vpack.c.b16 %v503, %v503
      %v520 = vpack.c.b16 %v504, %v504
      %v521 = vpack.c.b16 %v505, %v505
      %v522 = vpack.c.b16 %v506, %v506
      %539 = vst [vmem:[%s240] sm:$0xf] %v507
      %540 = vst [vmem:[%s240 + $0x4] sm:$0xf] %v508
      %541 = vst [vmem:[%s240 + $0x8] sm:$0xf] %v509
      %542 = vst [vmem:[%s240 + $0xc] sm:$0xf] %v510
      %543 = vst [vmem:[%s240 + $0x10] sm:$0xf] %v511
      %544 = vst [vmem:[%s240 + $0x14] sm:$0xf] %v512
      %545 = vst [vmem:[%s240 + $0x18] sm:$0xf] %v513
      %546 = vst [vmem:[%s240 + $0x1c] sm:$0xf] %v514
      %547 = vst [vmem:[%s240 + $0x20] sm:$0xf] %v515
      %548 = vst [vmem:[%s240 + $0x24] sm:$0xf] %v516
      %549 = vst [vmem:[%s240 + $0x28] sm:$0xf] %v517
      %550 = vst [vmem:[%s240 + $0x2c] sm:$0xf] %v518
      %551 = vst [vmem:[%s240 + $0x30] sm:$0xf] %v519
      %552 = vst [vmem:[%s240 + $0x34] sm:$0xf] %v520
      %553 = vst [vmem:[%s240 + $0x38] sm:$0xf] %v521
      %554 = vst [vmem:[%s240 + $0x3c] sm:$0xf] %v522
      %v555 = vadd.f32 %v413, %v416
      %v556 = vadd.f32 %v555, %v421
      %v557 = vadd.f32 %v556, %v424
      %v558 = vadd.f32 %v557, %v429
      %v559 = vadd.f32 %v558, %v432
      %v560 = vadd.f32 %v559, %v437
      %v561 = vadd.f32 %v560, %v440
      %v562 = vadd.f32 %v561, %v445
      %v563 = vadd.f32 %v562, %v448
      %v564 = vadd.f32 %v563, %v453
      %v565 = vadd.f32 %v564, %v456
      %v566 = vadd.f32 %v565, %v461
      %v567 = vadd.f32 %v566, %v464
      %v568 = vadd.f32 %v567, %v469
      %v569 = vadd.f32 %v568, %v472
      %v570 = vrot.slane %v569, 4
      %v571 = vadd.f32 %v569, %v570
      %v572 = vrot.slane %v571, 2
      %v573 = vadd.f32 %v571, %v572
      %v574 = vrot.slane %v573, 1
      %v575 = vadd.f32 %v573, %v574
      %v576 = vmul.f32 %v413, %v413
      %v577 = vmul.f32 %v416, %v416
      %v578 = vmul.f32 %v421, %v421
      %v579 = vmul.f32 %v424, %v424
      %v580 = vmul.f32 %v429, %v429
      %v581 = vmul.f32 %v432, %v432
      %v582 = vmul.f32 %v437, %v437
      %v583 = vmul.f32 %v440, %v440
      %v584 = vmul.f32 %v445, %v445
      %v585 = vmul.f32 %v448, %v448
      %v586 = vmul.f32 %v453, %v453
      %v587 = vmul.f32 %v456, %v456
      %v588 = vmul.f32 %v461, %v461
      %v589 = vmul.f32 %v464, %v464
      %v590 = vmul.f32 %v469, %v469
      %v591 = vmul.f32 %v472, %v472
      %v592 = vadd.f32 %v576, %v577
      %v593 = vadd.f32 %v592, %v578
      %v594 = vadd.f32 %v593, %v579
      %v595 = vadd.f32 %v594, %v580
      %v596 = vadd.f32 %v595, %v581
      %v597 = vadd.f32 %v596, %v582
      %v598 = vadd.f32 %v597, %v583
      %v599 = vadd.f32 %v598, %v584
      %v600 = vadd.f32 %v599, %v585
      %v601 = vadd.f32 %v600, %v586
      %v602 = vadd.f32 %v601, %v587
      %v603 = vadd.f32 %v602, %v588
      %v604 = vadd.f32 %v603, %v589
      %v605 = vadd.f32 %v604, %v590
      %v606 = vadd.f32 %v605, %v591
      %v607 = vrot.slane %v606, 4
      %v608 = vadd.f32 %v606, %v607
      %v609 = vrot.slane %v608, 2
      %v610 = vadd.f32 %v608, %v609
      %v611 = vrot.slane %v610, 1
      %v612 = vadd.f32 %v610, %v611
      %v613 = vlaneseq
      %v614 = vshrl.u32 %v613, 7
      %vm615 = vcmp.eq.s32.totalorder %v614, 0
      %v616 = vsel %vm615, %v575, %v612
      %617 = vst [vmem:[%s248] sm:$0xff] %v616
      %s618 = smul.u32 16, %s20
      %p619 = scmp.lt.s32.totalorder %s19, 3
      %s620 = scalar_select %p619, %s19, 3
      %p621 = scmp.lt.s32.totalorder %s618, 15
      %s622 = scalar_select %p621, %s618, 15
      %s623 = smul.addr %s620, 16
      %s624 = sadd.s32 %s622, %s623
      %s625 = smul.addr %s624, 4
      %s626 = scalar_lea.vmem %s2, %s625
      %p627 = scmp.lt.s32.totalorder %s19, 3
      %s628 = scalar_select %p627, %s19, 3
      %p629 = scmp.lt.s32.totalorder %s20, 0
      %s630 = scalar_select %p629, %s20, 0
      %s631 = sadd.s32 %s630, %s628
      %s632 = smul.addr %s631, 8
      %s633 = scalar_lea.vmem %s3, %s632
      // Predicated region
      $region29: #{generator_forward.7} parent=27 // pred_check
        %p634 = pneg %p101
      $region30: #{generator_forward.7} parent=27 // pred_check_branch
        %636 = sbr.rel (%p634) target = $region32
      $region31: #{generator_forward.7} parent=27 // pred_region
        %s637 = smul.u32 16, %s20
      $region32: #{generator_forward.7} parent=27 // pred_fallthru
        _
      // Predicated region
      $region33: #{generator_forward.7} parent=27 // pred_check
        %p638 = pneg %p129
      $region34: #{generator_forward.7} parent=27 // pred_check_branch
        %640 = sbr.rel (%p638) target = $region36
      $region35: #{generator_forward.7} parent=27 // pred_region
        _
      $region36: #{generator_forward.7} parent=27 // pred_fallthru
        _
    $region28: #{generator_forward.7} parent=5 // pred_fallthru
      _
    %p641 = scmp.le.s32.totalorder 2, %s10
    // Predicated region
    $region37: #{generator_forward.7} parent=5 // pred_check
      %p642 = pneg %p641
    $region38: #{generator_forward.7} parent=5 // pred_check_branch
      %644 = sbr.rel (%p642) target = $region40
    $region39: #{generator_forward.7} parent=5 // pred_region
      %s645 = ssub.s32 %s10, 2
      // Predicated region
      $region41: #{generator_forward.7} parent=39 // pred_check
        %p646 = pneg %p107
      $region42: #{generator_forward.7} parent=39 // pred_check_branch
        %648 = sbr.rel (%p646) target = $region44
      $region43: #{generator_forward.7} parent=39 // pred_region
        %s649 = smul.u32 16, %s22
        %p650 = scmp.lt.s32.totalorder %s21, 3
        %s651 = scalar_select %p650, %s21, 3
        %p652 = scmp.lt.s32.totalorder %s649, 15
        %s653 = scalar_select %p652, %s649, 15
        %s654 = smul.addr %s651, 16
        %s655 = sadd.s32 %s653, %s654
        %s656 = smul.addr %s655, 4
        %s657 = scalar_lea.vmem %s2, %s656
      $region44: #{generator_forward.7} parent=39 // pred_fallthru
        _
      // Predicated region
      $region45: #{generator_forward.7} parent=39 // pred_check
        %p658 = pneg %p135
      $region46: #{generator_forward.7} parent=39 // pred_check_branch
        %660 = sbr.rel (%p658) target = $region48
      $region47: #{generator_forward.7} parent=39 // pred_region
        %p661 = scmp.lt.s32.totalorder %s21, 3
        %s662 = scalar_select %p661, %s21, 3
        %p663 = scmp.lt.s32.totalorder %s22, 0
        %s664 = scalar_select %p663, %s22, 0
        %s665 = sadd.s32 %s664, %s662
        %s666 = smul.addr %s665, 8
        %s667 = scalar_lea.vmem %s3, %s666
      $region48: #{generator_forward.7} parent=39 // pred_fallthru
        _
    $region40: #{generator_forward.7} parent=5 // pred_fallthru
      _
  $region6: #{generator_forward.7} parent=0 // loop_footer
    %s14 = sadd.s32 1, %s10
  $region7: #{generator_forward.7} parent=0 // loop_footer_branch
    %9 = sbr.rel target = $region3
  $region8: #{generator_forward.7} parent=0 // loop_exit
    _

// kernel: generator_forward.8
$region0: #{generator_forward.8}
  #allocation0 [shape = 'u32[]', space=smem, size = 0x4, offset = 0x4, fixed_abs, tag = 'smem constant byte address 0x4 - core index']
  #allocation1 [shape = 'u32[144,128]{1,0:T(1,128)}', space=vmem, size = 0x12000, scoped, tag = 'internal scratch']
  %s0 = inlined_call_operand.vmem [shape: bf16[4,512,64], index: 0, kind: input, shape index: {}]
  %s1 = inlined_call_operand.vmem [shape: bf16[4,64,128], index: 1, kind: input, shape index: {}]
  %s2 = inlined_call_operand.vmem [shape: bf16[4,512,128], index: 2, kind: output, shape index: {0}]
  %s3 = inlined_call_operand.vmem [shape: f32[4,8,128], index: 3, kind: output, shape index: {1}]
  %4 = xla_tuple %s2, %s3
  %s5 = sld [smem:[#allocation0]]
  $region49: #{generator_forward.8} parent=0
    _
  %s7 = ssub.s32 1, %s5
  %s8 = scalar_select 0, %s7, %s5
  loop: start=0, step=1, limit=6
  $region2: #{generator_forward.8} parent=0 // loop_pre_header
    _
  $region3: #{generator_forward.8} parent=0 // loop_header
    %s10 = sphi 0, %s14
    %p11 = scmp.ge.s32.totalorder %s10, 6
    %s17 = sphi 0, %s29
    %s18 = sphi 0, %s25
    %s19 = sphi 0, %s17
    %s20 = sphi 0, %s18
    %s21 = sphi 0, %s19
    %s22 = sphi 0, %s20
    %s34 = sphi 0, %s36
    %s37 = sphi 0, %s34
    %s38 = sphi 0, %s37
    %s54 = sphi 0, %s38
    %s60 = sphi 0, %s62
    %s63 = sphi 0, %s60
    %s64 = sphi 0, %s63
    %s80 = sphi 0, %s64
    %s88 = sphi 0, %s90
    %s91 = sphi 0, %s88
    %s92 = sphi 0, %s91
    %s108 = sphi 0, %s92
    %s116 = sphi 0, %s118
    %s119 = sphi 0, %s116
    %s120 = sphi 0, %s119
    %s136 = sphi 0, %s120
  $region4: #{generator_forward.8} parent=0 // loop_header_branch
    %13 = sbr.rel (%p11) target = $region8
  $region5: #{generator_forward.8} parent=0 // loop_body
    %s15 = ssub.s32 %s10, 1
    %s16 = ssub.s32 %s10, 2
    %s23 = sadd.s32 1, %s18
    %p24 = scmp.ge.s32.totalorder %s23, 1
    %s25 = scalar_select %p24, 0, %s23
    %s26 = sadd.s32 1, %s17
    %s27 = scalar_select %p24, %s26, %s17
    %p28 = scmp.ge.s32.totalorder %s27, 4
    %s29 = scalar_select %p28, 0, %s27
    %s30 = ssub.s32 %s17, %s29
    %s31 = ssub.s32 %s18, %s25
    %s32 = sor.u32 %s30, %s31
    %p33 = scmp.eq.s32.totalorder %s32, 0
    %s35 = sadd.s32 %s34, 1
    %s36 = scalar_select %p33, %s34, %s35
    %p39 = pneg %p33
    %p40 = scmp.eq.s32.totalorder %s10, 3
    %p41 = por %p39, %p40
    %p42 = scmp.ne.s32.totalorder %s34, %s37
    %p43 = scmp.eq.s32.totalorder %s10, 0
    %p44 = por %p42, %p43
    %p45 = scmp.ne.s32.totalorder %s34, %s37
    %p46 = scmp.eq.s32.totalorder %s15, 3
    %p47 = por %p45, %p46
    %p48 = scmp.ne.s32.totalorder %s37, %s38
    %p49 = scmp.eq.s32.totalorder %s15, 0
    %p50 = por %p48, %p49
    %p51 = scmp.ne.s32.totalorder %s37, %s38
    %p52 = scmp.eq.s32.totalorder %s16, 3
    %p53 = por %p51, %p52
    %p55 = scmp.ne.s32.totalorder %s38, %s54
    %p56 = scmp.eq.s32.totalorder %s16, 0
    %p57 = por %p55, %p56
    %s58 = ssub.s32 %s17, %s29
    %p59 = scmp.eq.s32.totalorder %s58, 0
    %s61 = sadd.s32 %s60, 1
    %s62 = scalar_select %p59, %s60, %s61
    %p65 = pneg %p59
    %p66 = scmp.eq.s32.totalorder %s10, 3
    %p67 = por %p65, %p66
    %p68 = scmp.ne.s32.totalorder %s60, %s63
    %p69 = scmp.eq.s32.totalorder %s10, 0
    %p70 = por %p68, %p69
    %p71 = scmp.ne.s32.totalorder %s60, %s63
    %p72 = scmp.eq.s32.totalorder %s15, 3
    %p73 = por %p71, %p72
    %p74 = scmp.ne.s32.totalorder %s63, %s64
    %p75 = scmp.eq.s32.totalorder %s15, 0
    %p76 = por %p74, %p75
    %p77 = scmp.ne.s32.totalorder %s63, %s64
    %p78 = scmp.eq.s32.totalorder %s16, 3
    %p79 = por %p77, %p78
    %p81 = scmp.ne.s32.totalorder %s64, %s80
    %p82 = scmp.eq.s32.totalorder %s16, 0
    %p83 = por %p81, %p82
    %s84 = ssub.s32 %s17, %s29
    %s85 = ssub.s32 %s18, %s25
    %s86 = sor.u32 %s84, %s85
    %p87 = scmp.eq.s32.totalorder %s86, 0
    %s89 = sadd.s32 %s88, 1
    %s90 = scalar_select %p87, %s88, %s89
    %p93 = pneg %p87
    %p94 = scmp.eq.s32.totalorder %s10, 3
    %p95 = por %p93, %p94
    %p96 = scmp.ne.s32.totalorder %s88, %s91
    %p97 = scmp.eq.s32.totalorder %s10, 0
    %p98 = por %p96, %p97
    %p99 = scmp.ne.s32.totalorder %s88, %s91
    %p100 = scmp.eq.s32.totalorder %s15, 3
    %p101 = por %p99, %p100
    %p102 = scmp.ne.s32.totalorder %s91, %s92
    %p103 = scmp.eq.s32.totalorder %s15, 0
    %p104 = por %p102, %p103
    %p105 = scmp.ne.s32.totalorder %s91, %s92
    %p106 = scmp.eq.s32.totalorder %s16, 3
    %p107 = por %p105, %p106
    %p109 = scmp.ne.s32.totalorder %s92, %s108
    %p110 = scmp.eq.s32.totalorder %s16, 0
    %p111 = por %p109, %p110
    %s112 = ssub.s32 %s17, %s29
    %s113 = ssub.s32 %s18, %s25
    %s114 = sor.u32 %s112, %s113
    %p115 = scmp.eq.s32.totalorder %s114, 0
    %s117 = sadd.s32 %s116, 1
    %s118 = scalar_select %p115, %s116, %s117
    %p121 = pneg %p115
    %p122 = scmp.eq.s32.totalorder %s10, 3
    %p123 = por %p121, %p122
    %p124 = scmp.ne.s32.totalorder %s116, %s119
    %p125 = scmp.eq.s32.totalorder %s10, 0
    %p126 = por %p124, %p125
    %p127 = scmp.ne.s32.totalorder %s116, %s119
    %p128 = scmp.eq.s32.totalorder %s15, 3
    %p129 = por %p127, %p128
    %p130 = scmp.ne.s32.totalorder %s119, %s120
    %p131 = scmp.eq.s32.totalorder %s15, 0
    %p132 = por %p130, %p131
    %p133 = scmp.ne.s32.totalorder %s119, %s120
    %p134 = scmp.eq.s32.totalorder %s16, 3
    %p135 = por %p133, %p134
    %p137 = scmp.ne.s32.totalorder %s120, %s136
    %p138 = scmp.eq.s32.totalorder %s16, 0
    %p139 = por %p137, %p138
    %p140 = scmp.le.s32.totalorder 1, %s10
    %p141 = scmp.lt.s32.totalorder %s10, 5
    %p142 = pnand %p140, %p141
    %p143 = pneg %p142
    // Predicated region
    $region9: #{generator_forward.8} parent=5 // pred_check
      _
    $region10: #{generator_forward.8} parent=5 // pred_check_branch
      %145 = sbr.rel (%p142) target = $region12
    $region11: #{generator_forward.8} parent=5 // pred_region
      %s146 = ssub.s32 %s10, 1
    $region12: #{generator_forward.8} parent=5 // pred_fallthru
      _
    %p147 = scmp.lt.s32.totalorder %s10, 4
    // Predicated region
    $region13: #{generator_forward.8} parent=5 // pred_check
      %p148 = pneg %p147
    $region14: #{generator_forward.8} parent=5 // pred_check_branch
      %150 = sbr.rel (%p148) target = $region16
    $region15: #{generator_forward.8} parent=5 // pred_region
      // Predicated region
      $region17: #{generator_forward.8} parent=15 // pred_check
        %p151 = pneg %p44
      $region18: #{generator_forward.8} parent=15 // pred_check_branch
        %153 = sbr.rel (%p151) target = $region20
      $region19: #{generator_forward.8} parent=15 // pred_region
        %s154 = smul.u32 64, %s18
        %p155 = scmp.lt.s32.totalorder %s17, 3
        %s156 = scalar_select %p155, %s17, 3
        %p157 = scmp.lt.s32.totalorder %s154, 63
        %s158 = scalar_select %p157, %s154, 63
        %s159 = smul.addr %s156, 64
        %s160 = sadd.s32 %s158, %s159
        %s161 = smul.addr %s160, 4
        %s162 = scalar_lea.vmem %s0, %s161
        %s163 = smul.u32 64, %s18
      $region20: #{generator_forward.8} parent=15 // pred_fallthru
        _
      // Predicated region
      $region21: #{generator_forward.8} parent=15 // pred_check
        %p164 = pneg %p70
      $region22: #{generator_forward.8} parent=15 // pred_check_branch
        %166 = sbr.rel (%p164) target = $region24
      $region23: #{generator_forward.8} parent=15 // pred_region
        %p167 = scmp.lt.s32.totalorder %s17, 3
        %s168 = scalar_select %p167, %s17, 3
        %s169 = smul.addr %s168, 8
        %s170 = smul.addr %s169, 4
        %s171 = scalar_lea.vmem %s1, %s170
      $region24: #{generator_forward.8} parent=15 // pred_fallthru
        _
    $region16: #{generator_forward.8} parent=5 // pred_fallthru
      _
    %p172 = scmp.le.s32.totalorder 1, %s10
    %p173 = scmp.lt.s32.totalorder %s10, 5
    %p174 = pnand %p172, %p173
    %p175 = pneg %p174
    // Predicated region
    $region25: #{generator_forward.8} parent=5 // pred_check
      _
    $region26: #{generator_forward.8} parent=5 // pred_check_branch
      %177 = sbr.rel (%p174) target = $region28
    $region27: #{generator_forward.8} parent=5 // pred_region
      %s178 = ssub.s32 %s10, 1
      %s179 = smul.u32 64, %s20
      %p180 = scmp.lt.s32.totalorder %s19, 3
      %s181 = scalar_select %p180, %s19, 3
      %p182 = scmp.lt.s32.totalorder %s179, 63
      %s183 = scalar_select %p182, %s179, 63
      %s184 = smul.addr %s181, 64
      %s185 = sadd.s32 %s183, %s184
      %s186 = smul.addr %s185, 4
      %s187 = scalar_lea.vmem %s0, %s186
      %p188 = pneg %p50
      %p189 = pneg %p47
      %p190 = scmp.lt.s32.totalorder %s19, 3
      %s191 = scalar_select %p190, %s19, 3
      %s192 = smul.addr %s191, 8
      %s193 = smul.addr %s192, 4
      %s194 = scalar_lea.vmem %s1, %s193
      %p195 = pneg %p76
      %p196 = pneg %p73
      %p197 = pneg %p104
      %p198 = pneg %p101
      %s199 = smul.u32 64, %s20
      %p200 = scmp.lt.s32.totalorder %s19, 3
      %s201 = scalar_select %p200, %s19, 3
      %p202 = scmp.lt.s32.totalorder %s199, 63
      %s203 = scalar_select %p202, %s199, 63
      %s204 = smul.addr %s201, 64
      %s205 = sadd.s32 %s203, %s204
      %s206 = smul.addr %s205, 4
      %s207 = scalar_lea.vmem %s2, %s206
      %p208 = pneg %p132
      %p209 = pneg %p129
      %p210 = scmp.lt.s32.totalorder %s19, 3
      %s211 = scalar_select %p210, %s19, 3
      %p212 = scmp.lt.s32.totalorder %s20, 0
      %s213 = scalar_select %p212, %s20, 0
      %s214 = sadd.s32 %s213, %s211
      %s215 = smul.addr %s214, 8
      %s216 = scalar_lea.vmem %s3, %s215
      %s217 = smul.u32 64, %s20
      %p218 = scmp.lt.s32.totalorder %s19, 3
      %s219 = scalar_select %p218, %s19, 3
      %p220 = scmp.lt.s32.totalorder %s217, 63
      %s221 = scalar_select %p220, %s217, 63
      %s222 = smul.addr %s219, 64
      %s223 = sadd.s32 %s221, %s222
      %s224 = smul.addr %s223, 4
      %s225 = scalar_lea.vmem %s0, %s224
      %s226 = smul.u32 64, %s20
      %p227 = scmp.lt.s32.totalorder %s19, 3
      %s228 = scalar_select %p227, %s19, 3
      %s229 = smul.addr %s228, 8
      %s230 = smul.addr %s229, 4
      %s231 = scalar_lea.vmem %s1, %s230
      %s232 = smul.u32 64, %s20
      %p233 = scmp.lt.s32.totalorder %s19, 3
      %s234 = scalar_select %p233, %s19, 3
      %p235 = scmp.lt.s32.totalorder %s232, 63
      %s236 = scalar_select %p235, %s232, 63
      %s237 = smul.addr %s234, 64
      %s238 = sadd.s32 %s236, %s237
      %s239 = smul.addr %s238, 4
      %s240 = scalar_lea.vmem %s2, %s239
      %s241 = smul.u32 64, %s20
      %p242 = scmp.lt.s32.totalorder %s19, 3
      %s243 = scalar_select %p242, %s19, 3
      %p244 = scmp.lt.s32.totalorder %s20, 0
      %s245 = scalar_select %p244, %s20, 0
      %s246 = sadd.s32 %s245, %s243
      %s247 = smul.addr %s246, 8
      %s248 = scalar_lea.vmem %s3, %s247
      %v250 = vld [vmem:[%s225] sm:$0xf]
      %v251 = vld [vmem:[%s225 + $0x4] sm:$0xf]
      %v252 = vld [vmem:[%s225 + $0x8] sm:$0xf]
      %v253 = vld [vmem:[%s225 + $0xc] sm:$0xf]
      %v254 = vld [vmem:[%s225 + $0x10] sm:$0xf]
      %v255 = vld [vmem:[%s225 + $0x14] sm:$0xf]
      %v256 = vld [vmem:[%s225 + $0x18] sm:$0xf]
      %v257 = vld [vmem:[%s225 + $0x1c] sm:$0xf]
      %v258 = vld [vmem:[%s225 + $0x20] sm:$0xf]
      %v259 = vld [vmem:[%s225 + $0x24] sm:$0xf]
      %v260 = vld [vmem:[%s225 + $0x28] sm:$0xf]
      %v261 = vld [vmem:[%s225 + $0x2c] sm:$0xf]
      %v262 = vld [vmem:[%s225 + $0x30] sm:$0xf]
      %v263 = vld [vmem:[%s225 + $0x34] sm:$0xf]
      %v264 = vld [vmem:[%s225 + $0x38] sm:$0xf]
      %v265 = vld [vmem:[%s225 + $0x3c] sm:$0xf]
      %v266 = vld [vmem:[%s225 + $0x40] sm:$0xf]
      %v267 = vld [vmem:[%s225 + $0x44] sm:$0xf]
      %v268 = vld [vmem:[%s225 + $0x48] sm:$0xf]
      %v269 = vld [vmem:[%s225 + $0x4c] sm:$0xf]
      %v270 = vld [vmem:[%s225 + $0x50] sm:$0xf]
      %v271 = vld [vmem:[%s225 + $0x54] sm:$0xf]
      %v272 = vld [vmem:[%s225 + $0x58] sm:$0xf]
      %v273 = vld [vmem:[%s225 + $0x5c] sm:$0xf]
      %v274 = vld [vmem:[%s225 + $0x60] sm:$0xf]
      %v275 = vld [vmem:[%s225 + $0x64] sm:$0xf]
      %v276 = vld [vmem:[%s225 + $0x68] sm:$0xf]
      %v277 = vld [vmem:[%s225 + $0x6c] sm:$0xf]
      %v278 = vld [vmem:[%s225 + $0x70] sm:$0xf]
      %v279 = vld [vmem:[%s225 + $0x74] sm:$0xf]
      %v280 = vld [vmem:[%s225 + $0x78] sm:$0xf]
      %v281 = vld [vmem:[%s225 + $0x7c] sm:$0xf]
      %v282 = vld [vmem:[%s225 + $0x80] sm:$0xf]
      %v283 = vld [vmem:[%s225 + $0x84] sm:$0xf]
      %v284 = vld [vmem:[%s225 + $0x88] sm:$0xf]
      %v285 = vld [vmem:[%s225 + $0x8c] sm:$0xf]
      %v286 = vld [vmem:[%s225 + $0x90] sm:$0xf]
      %v287 = vld [vmem:[%s225 + $0x94] sm:$0xf]
      %v288 = vld [vmem:[%s225 + $0x98] sm:$0xf]
      %v289 = vld [vmem:[%s225 + $0x9c] sm:$0xf]
      %v290 = vld [vmem:[%s225 + $0xa0] sm:$0xf]
      %v291 = vld [vmem:[%s225 + $0xa4] sm:$0xf]
      %v292 = vld [vmem:[%s225 + $0xa8] sm:$0xf]
      %v293 = vld [vmem:[%s225 + $0xac] sm:$0xf]
      %v294 = vld [vmem:[%s225 + $0xb0] sm:$0xf]
      %v295 = vld [vmem:[%s225 + $0xb4] sm:$0xf]
      %v296 = vld [vmem:[%s225 + $0xb8] sm:$0xf]
      %v297 = vld [vmem:[%s225 + $0xbc] sm:$0xf]
      %v298 = vld [vmem:[%s225 + $0xc0] sm:$0xf]
      %v299 = vld [vmem:[%s225 + $0xc4] sm:$0xf]
      %v300 = vld [vmem:[%s225 + $0xc8] sm:$0xf]
      %v301 = vld [vmem:[%s225 + $0xcc] sm:$0xf]
      %v302 = vld [vmem:[%s225 + $0xd0] sm:$0xf]
      %v303 = vld [vmem:[%s225 + $0xd4] sm:$0xf]
      %v304 = vld [vmem:[%s225 + $0xd8] sm:$0xf]
      %v305 = vld [vmem:[%s225 + $0xdc] sm:$0xf]
      %v306 = vld [vmem:[%s225 + $0xe0] sm:$0xf]
      %v307 = vld [vmem:[%s225 + $0xe4] sm:$0xf]
      %v308 = vld [vmem:[%s225 + $0xe8] sm:$0xf]
      %v309 = vld [vmem:[%s225 + $0xec] sm:$0xf]
      %v310 = vld [vmem:[%s225 + $0xf0] sm:$0xf]
      %v311 = vld [vmem:[%s225 + $0xf4] sm:$0xf]
      %v312 = vld [vmem:[%s225 + $0xf8] sm:$0xf]
      %v313 = vld [vmem:[%s225 + $0xfc] sm:$0xf]
      %v314 = vld [vmem:[%s231] sm:$0xf]
      %v315 = vld [vmem:[%s231 + $0x4] sm:$0xf]
      %v316 = vld [vmem:[%s231 + $0x8] sm:$0xf]
      %v317 = vld [vmem:[%s231 + $0xc] sm:$0xf]
      %v318 = vld [vmem:[%s231 + $0x10] sm:$0xf]
      %v319 = vld [vmem:[%s231 + $0x14] sm:$0xf]
      %v320 = vld [vmem:[%s231 + $0x18] sm:$0xf]
      %v321 = vld [vmem:[%s231 + $0x1c] sm:$0xf]
      %v386 = vunpack.c.l.b16 %v250
      %v387 = vunpack.c.l.b16 %v251
      %v388 = vunpack.c.l.b16 %v252
      %v389 = vunpack.c.l.b16 %v253
      %v390 = vunpack.c.l.b16 %v254
      %v391 = vunpack.c.l.b16 %v255
      %v392 = vunpack.c.l.b16 %v256
      %v393 = vunpack.c.l.b16 %v257
      %v394 = vunpack.c.l.b16 %v258
      %v395 = vunpack.c.l.b16 %v259
      %v396 = vunpack.c.l.b16 %v260
      %v397 = vunpack.c.l.b16 %v261
      %v398 = vunpack.c.l.b16 %v262
      %v399 = vunpack.c.l.b16 %v263
      %v400 = vunpack.c.l.b16 %v264
      %v401 = vunpack.c.l.b16 %v265
      %v402 = vunpack.c.l.b16 %v266
      %v403 = vunpack.c.l.b16 %v267
      %v404 = vunpack.c.l.b16 %v268
      %v405 = vunpack.c.l.b16 %v269
      %v406 = vunpack.c.l.b16 %v270
      %v407 = vunpack.c.l.b16 %v271
      %v408 = vunpack.c.l.b16 %v272
      %v409 = vunpack.c.l.b16 %v273
      %v410 = vunpack.c.l.b16 %v274
      %v411 = vunpack.c.l.b16 %v275
      %v412 = vunpack.c.l.b16 %v276
      %v413 = vunpack.c.l.b16 %v277
      %v414 = vunpack.c.l.b16 %v278
      %v415 = vunpack.c.l.b16 %v279
      %v416 = vunpack.c.l.b16 %v280
      %v417 = vunpack.c.l.b16 %v281
      %v418 = vunpack.c.l.b16 %v282
      %v419 = vunpack.c.l.b16 %v283
      %v420 = vunpack.c.l.b16 %v284
      %v421 = vunpack.c.l.b16 %v285
      %v422 = vunpack.c.l.b16 %v286
      %v423 = vunpack.c.l.b16 %v287
      %v424 = vunpack.c.l.b16 %v288
      %v425 = vunpack.c.l.b16 %v289
      %v426 = vunpack.c.l.b16 %v290
      %v427 = vunpack.c.l.b16 %v291
      %v428 = vunpack.c.l.b16 %v292
      %v429 = vunpack.c.l.b16 %v293
      %v430 = vunpack.c.l.b16 %v294
      %v431 = vunpack.c.l.b16 %v295
      %v432 = vunpack.c.l.b16 %v296
      %v433 = vunpack.c.l.b16 %v297
      %v434 = vunpack.c.l.b16 %v298
      %v435 = vunpack.c.l.b16 %v299
      %v436 = vunpack.c.l.b16 %v300
      %v437 = vunpack.c.l.b16 %v301
      %v438 = vunpack.c.l.b16 %v302
      %v439 = vunpack.c.l.b16 %v303
      %v440 = vunpack.c.l.b16 %v304
      %v441 = vunpack.c.l.b16 %v305
      %v442 = vunpack.c.l.b16 %v306
      %v443 = vunpack.c.l.b16 %v307
      %v444 = vunpack.c.l.b16 %v308
      %v445 = vunpack.c.l.b16 %v309
      %v446 = vunpack.c.l.b16 %v310
      %v447 = vunpack.c.l.b16 %v311
      %v448 = vunpack.c.l.b16 %v312
      %v449 = vunpack.c.l.b16 %v313
      %v450 = vpack.c.b16 %v387, %v386
      %v451 = vpack.c.b16 %v389, %v388
      %v452 = vpack.c.b16 %v391, %v390
      %v453 = vpack.c.b16 %v393, %v392
      %v454 = vpack.c.b16 %v395, %v394
      %v455 = vpack.c.b16 %v397, %v396
      %v456 = vpack.c.b16 %v399, %v398
      %v457 = vpack.c.b16 %v401, %v400
      %v458 = vpack.c.b16 %v403, %v402
      %v459 = vpack.c.b16 %v405, %v404
      %v460 = vpack.c.b16 %v407, %v406
      %v461 = vpack.c.b16 %v409, %v408
      %v462 = vpack.c.b16 %v411, %v410
      %v463 = vpack.c.b16 %v413, %v412
      %v464 = vpack.c.b16 %v415, %v414
      %v465 = vpack.c.b16 %v417, %v416
      %v466 = vpack.c.b16 %v419, %v418
      %v467 = vpack.c.b16 %v421, %v420
      %v468 = vpack.c.b16 %v423, %v422
      %v469 = vpack.c.b16 %v425, %v424
      %v470 = vpack.c.b16 %v427, %v426
      %v471 = vpack.c.b16 %v429, %v428
      %v472 = vpack.c.b16 %v431, %v430
      %v473 = vpack.c.b16 %v433, %v432
      %v474 = vpack.c.b16 %v435, %v434
      %v475 = vpack.c.b16 %v437, %v436
      %v476 = vpack.c.b16 %v439, %v438
      %v477 = vpack.c.b16 %v441, %v440
      %v478 = vpack.c.b16 %v443, %v442
      %v479 = vpack.c.b16 %v445, %v444
      %v480 = vpack.c.b16 %v447, %v446
      %v481 = vpack.c.b16 %v449, %v448
      %v490 = vunpack.c.l.b16 %v314
      %v491 = vunpack.c.l.b16 %v315
      %v492 = vunpack.c.l.b16 %v316
      %v493 = vunpack.c.l.b16 %v317
      %v494 = vunpack.c.l.b16 %v318
      %v495 = vunpack.c.l.b16 %v319
      %v496 = vunpack.c.l.b16 %v320
      %v497 = vunpack.c.l.b16 %v321
      %v498 = vpack.c.b16 %v491, %v490
      %v499 = vpack.c.b16 %v493, %v492
      %v500 = vpack.c.b16 %v495, %v494
      %v501 = vpack.c.b16 %v497, %v496
      %vm506 = vcmask 523264
      %v508 = vsel %vm506, %v450, 0
      %v511 = vsel %vm506, %v451, 0
      %v514 = vsel %vm506, %v452, 0
      %v517 = vsel %vm506, %v453, 0
      %v520 = vsel %vm506, %v454, 0
      %v523 = vsel %vm506, %v455, 0
      %v526 = vsel %vm506, %v456, 0
      %v529 = vsel %vm506, %v457, 0
      %v532 = vsel %vm506, %v458, 0
      %v535 = vsel %vm506, %v459, 0
      %v538 = vsel %vm506, %v460, 0
      %v541 = vsel %vm506, %v461, 0
      %v544 = vsel %vm506, %v462, 0
      %v547 = vsel %vm506, %v463, 0
      %v550 = vsel %vm506, %v464, 0
      %v553 = vsel %vm506, %v465, 0
      %v556 = vsel %vm506, %v466, 0
      %v559 = vsel %vm506, %v467, 0
      %v562 = vsel %vm506, %v468, 0
      %v565 = vsel %vm506, %v469, 0
      %v568 = vsel %vm506, %v470, 0
      %v571 = vsel %vm506, %v471, 0
      %v574 = vsel %vm506, %v472, 0
      %v577 = vsel %vm506, %v473, 0
      %v580 = vsel %vm506, %v474, 0
      %v583 = vsel %vm506, %v475, 0
      %v586 = vsel %vm506, %v476, 0
      %v589 = vsel %vm506, %v477, 0
      %v592 = vsel %vm506, %v478, 0
      %v595 = vsel %vm506, %v479, 0
      %v598 = vsel %vm506, %v480, 0
      %v601 = vsel %vm506, %v481, 0
      %603 = vmatprep.subr.bf16.mxu0 0
      %604 = vmatpush1.bf16.msra.mxu0 0
      %605 = vmatprep.subr.bf16.mxu0 0
      %606 = vmatpush1.bf16.msra.mxu0 0
      %607 = vmatprep.subr.bf16.mxu0 0
      %608 = vmatpush1.bf16.msra.mxu0 0
      %609 = vmatprep.subr.bf16.mxu0 0
      %610 = vmatpush1.bf16.msra.mxu0 0
      %611 = vmatprep.subr.bf16.mxu0 0
      %612 = vmatpush1.bf16.msra.mxu0 %v501
      %613 = vmatprep.subr.bf16.mxu0 0
      %614 = vmatpush1.bf16.msra.mxu0 %v500
      %615 = vmatprep.subr.bf16.mxu0 0
      %616 = vmatpush1.bf16.msra.mxu0 %v499
      %617 = vmatprep.subr.bf16.mxu0 0
      %618 = vmatpush1.bf16.msra.mxu0 %v498
      %619 = vmatprep.subr.bf16.mxu0 0
      %620 = vmatpush2.bf16.msra.mxu0 0
      %621 = vmatprep.subr.bf16.mxu0 0
      %622 = vmatpush2.bf16.msra.mxu0 0
      %623 = vmatprep.subr.bf16.mxu0 0
      %624 = vmatpush2.bf16.msra.mxu0 0
      %625 = vmatprep.subr.bf16.mxu0 0
      %626 = vmatpush2.bf16.msra.mxu0 0
      %627 = vmatprep.subr.bf16.mxu0 0
      %628 = vmatpush2.bf16.msra.mxu0 0
      %629 = vmatprep.subr.bf16.mxu0 0
      %630 = vmatpush2.bf16.msra.mxu0 0
      %631 = vmatprep.subr.bf16.mxu0 0
      %632 = vmatpush2.bf16.msra.mxu0 0
      %633 = vmatprep.subr.bf16.mxu0 0
      %634 = vmatpush2.bf16.msra.mxu0 0
      %635 = vmatprep.mubr.bf16.mxu0 0
      %636 = vmatmul.mubr.bf16.gmra.mxu0 %v508
      %v637 = vpop.f32.mrf.mxu0
      %v638 = vadd.f32 0.0, %v637
      %v639 = vpop.f32.mrf.mxu0
      %v640 = vpop.f32.mrf.mxu0
      %v641 = vadd.f32 0.0, %v640
      %v642 = vpop.f32.mrf.mxu0
      %643 = vmatprep.mubr.bf16.mxu0 0
      %644 = vmatmul.mubr.bf16.gmra.mxu0 %v511
      %v645 = vpop.f32.mrf.mxu0
      %v646 = vadd.f32 0.0, %v645
      %v647 = vpop.f32.mrf.mxu0
      %v648 = vpop.f32.mrf.mxu0
      %v649 = vadd.f32 0.0, %v648
      %v650 = vpop.f32.mrf.mxu0
      %651 = vmatprep.mubr.bf16.mxu0 0
      %652 = vmatmul.mubr.bf16.gmra.mxu0 %v514
      %v653 = vpop.f32.mrf.mxu0
      %v654 = vadd.f32 0.0, %v653
      %v655 = vpop.f32.mrf.mxu0
      %v656 = vpop.f32.mrf.mxu0
      %v657 = vadd.f32 0.0, %v656
      %v658 = vpop.f32.mrf.mxu0
      %659 = vmatprep.mubr.bf16.mxu0 0
      %660 = vmatmul.mubr.bf16.gmra.mxu0 %v517
      %v661 = vpop.f32.mrf.mxu0
      %v662 = vadd.f32 0.0, %v661
      %v663 = vpop.f32.mrf.mxu0
      %v664 = vpop.f32.mrf.mxu0
      %v665 = vadd.f32 0.0, %v664
      %v666 = vpop.f32.mrf.mxu0
      %667 = vmatprep.mubr.bf16.mxu0 0
      %668 = vmatmul.mubr.bf16.gmra.mxu0 %v520
      %v669 = vpop.f32.mrf.mxu0
      %v670 = vadd.f32 0.0, %v669
      %v671 = vpop.f32.mrf.mxu0
      %v672 = vpop.f32.mrf.mxu0
      %v673 = vadd.f32 0.0, %v672
      %v674 = vpop.f32.mrf.mxu0
      %675 = vmatprep.mubr.bf16.mxu0 0
      %676 = vmatmul.mubr.bf16.gmra.mxu0 %v523
      %v677 = vpop.f32.mrf.mxu0
      %v678 = vadd.f32 0.0, %v677
      %v679 = vpop.f32.mrf.mxu0
      %v680 = vpop.f32.mrf.mxu0
      %v681 = vadd.f32 0.0, %v680
      %v682 = vpop.f32.mrf.mxu0
      %683 = vmatprep.mubr.bf16.mxu0 0
      %684 = vmatmul.mubr.bf16.gmra.mxu0 %v526
      %v685 = vpop.f32.mrf.mxu0
      %v686 = vadd.f32 0.0, %v685
      %v687 = vpop.f32.mrf.mxu0
      %v688 = vpop.f32.mrf.mxu0
      %v689 = vadd.f32 0.0, %v688
      %v690 = vpop.f32.mrf.mxu0
      %691 = vmatprep.mubr.bf16.mxu0 0
      %692 = vmatmul.mubr.bf16.gmra.mxu0 %v529
      %v693 = vpop.f32.mrf.mxu0
      %v694 = vadd.f32 0.0, %v693
      %v695 = vpop.f32.mrf.mxu0
      %v696 = vpop.f32.mrf.mxu0
      %v697 = vadd.f32 0.0, %v696
      %v698 = vpop.f32.mrf.mxu0
      %699 = vmatprep.mubr.bf16.mxu0 0
      %700 = vmatmul.mubr.bf16.gmra.mxu0 %v532
      %v701 = vpop.f32.mrf.mxu0
      %v702 = vadd.f32 0.0, %v701
      %v703 = vpop.f32.mrf.mxu0
      %v704 = vpop.f32.mrf.mxu0
      %v705 = vadd.f32 0.0, %v704
      %v706 = vpop.f32.mrf.mxu0
      %707 = vmatprep.mubr.bf16.mxu0 0
      %708 = vmatmul.mubr.bf16.gmra.mxu0 %v535
      %v709 = vpop.f32.mrf.mxu0
      %v710 = vadd.f32 0.0, %v709
      %v711 = vpop.f32.mrf.mxu0
      %v712 = vpop.f32.mrf.mxu0
      %v713 = vadd.f32 0.0, %v712
      %v714 = vpop.f32.mrf.mxu0
      %715 = vmatprep.mubr.bf16.mxu0 0
      %716 = vmatmul.mubr.bf16.gmra.mxu0 %v538
      %v717 = vpop.f32.mrf.mxu0
      %v718 = vadd.f32 0.0, %v717
      %v719 = vpop.f32.mrf.mxu0
      %v720 = vpop.f32.mrf.mxu0
      %v721 = vadd.f32 0.0, %v720
      %v722 = vpop.f32.mrf.mxu0
      %723 = vmatprep.mubr.bf16.mxu0 0
      %724 = vmatmul.mubr.bf16.gmra.mxu0 %v541
      %v725 = vpop.f32.mrf.mxu0
      %v726 = vadd.f32 0.0, %v725
      %v727 = vpop.f32.mrf.mxu0
      %v728 = vpop.f32.mrf.mxu0
      %v729 = vadd.f32 0.0, %v728
      %v730 = vpop.f32.mrf.mxu0
      %731 = vmatprep.mubr.bf16.mxu0 0
      %732 = vmatmul.mubr.bf16.gmra.mxu0 %v544
      %v733 = vpop.f32.mrf.mxu0
      %v734 = vadd.f32 0.0, %v733
      %v735 = vpop.f32.mrf.mxu0
      %v736 = vpop.f32.mrf.mxu0
      %v737 = vadd.f32 0.0, %v736
      %v738 = vpop.f32.mrf.mxu0
      %739 = vmatprep.mubr.bf16.mxu0 0
      %740 = vmatmul.mubr.bf16.gmra.mxu0 %v547
      %v741 = vpop.f32.mrf.mxu0
      %v742 = vadd.f32 0.0, %v741
      %v743 = vpop.f32.mrf.mxu0
      %v744 = vpop.f32.mrf.mxu0
      %v745 = vadd.f32 0.0, %v744
      %v746 = vpop.f32.mrf.mxu0
      %747 = vmatprep.mubr.bf16.mxu0 0
      %748 = vmatmul.mubr.bf16.gmra.mxu0 %v550
      %v749 = vpop.f32.mrf.mxu0
      %v750 = vadd.f32 0.0, %v749
      %v751 = vpop.f32.mrf.mxu0
      %v752 = vpop.f32.mrf.mxu0
      %v753 = vadd.f32 0.0, %v752
      %v754 = vpop.f32.mrf.mxu0
      %755 = vmatprep.mubr.bf16.mxu0 0
      %756 = vmatmul.mubr.bf16.gmra.mxu0 %v553
      %v757 = vpop.f32.mrf.mxu0
      %v758 = vadd.f32 0.0, %v757
      %v759 = vpop.f32.mrf.mxu0
      %v760 = vpop.f32.mrf.mxu0
      %v761 = vadd.f32 0.0, %v760
      %v762 = vpop.f32.mrf.mxu0
      %763 = vmatprep.mubr.bf16.mxu0 0
      %764 = vmatmul.mubr.bf16.gmra.mxu0 %v556
      %v765 = vpop.f32.mrf.mxu0
      %v766 = vadd.f32 0.0, %v765
      %v767 = vpop.f32.mrf.mxu0
      %v768 = vpop.f32.mrf.mxu0
      %v769 = vadd.f32 0.0, %v768
      %v770 = vpop.f32.mrf.mxu0
      %771 = vmatprep.mubr.bf16.mxu0 0
      %772 = vmatmul.mubr.bf16.gmra.mxu0 %v559
      %v773 = vpop.f32.mrf.mxu0
      %v774 = vadd.f32 0.0, %v773
      %v775 = vpop.f32.mrf.mxu0
      %v776 = vpop.f32.mrf.mxu0
      %v777 = vadd.f32 0.0, %v776
      %v778 = vpop.f32.mrf.mxu0
      %779 = vmatprep.mubr.bf16.mxu0 0
      %780 = vmatmul.mubr.bf16.gmra.mxu0 %v562
      %v781 = vpop.f32.mrf.mxu0
      %v782 = vadd.f32 0.0, %v781
      %v783 = vpop.f32.mrf.mxu0
      %v784 = vpop.f32.mrf.mxu0
      %v785 = vadd.f32 0.0, %v784
      %v786 = vpop.f32.mrf.mxu0
      %787 = vmatprep.mubr.bf16.mxu0 0
      %788 = vmatmul.mubr.bf16.gmra.mxu0 %v565
      %v789 = vpop.f32.mrf.mxu0
      %v790 = vadd.f32 0.0, %v789
      %v791 = vpop.f32.mrf.mxu0
      %v792 = vpop.f32.mrf.mxu0
      %v793 = vadd.f32 0.0, %v792
      %v794 = vpop.f32.mrf.mxu0
      %795 = vmatprep.mubr.bf16.mxu0 0
      %796 = vmatmul.mubr.bf16.gmra.mxu0 %v568
      %v797 = vpop.f32.mrf.mxu0
      %v798 = vadd.f32 0.0, %v797
      %v799 = vpop.f32.mrf.mxu0
      %v800 = vpop.f32.mrf.mxu0
      %v801 = vadd.f32 0.0, %v800
      %v802 = vpop.f32.mrf.mxu0
      %803 = vmatprep.mubr.bf16.mxu0 0
      %804 = vmatmul.mubr.bf16.gmra.mxu0 %v571
      %v805 = vpop.f32.mrf.mxu0
      %v806 = vadd.f32 0.0, %v805
      %v807 = vpop.f32.mrf.mxu0
      %v808 = vpop.f32.mrf.mxu0
      %v809 = vadd.f32 0.0, %v808
      %v810 = vpop.f32.mrf.mxu0
      %811 = vmatprep.mubr.bf16.mxu0 0
      %812 = vmatmul.mubr.bf16.gmra.mxu0 %v574
      %v813 = vpop.f32.mrf.mxu0
      %v814 = vadd.f32 0.0, %v813
      %v815 = vpop.f32.mrf.mxu0
      %v816 = vpop.f32.mrf.mxu0
      %v817 = vadd.f32 0.0, %v816
      %v818 = vpop.f32.mrf.mxu0
      %819 = vmatprep.mubr.bf16.mxu0 0
      %820 = vmatmul.mubr.bf16.gmra.mxu0 %v577
      %v821 = vpop.f32.mrf.mxu0
      %v822 = vadd.f32 0.0, %v821
      %v823 = vpop.f32.mrf.mxu0
      %v824 = vpop.f32.mrf.mxu0
      %v825 = vadd.f32 0.0, %v824
      %v826 = vpop.f32.mrf.mxu0
      %827 = vmatprep.mubr.bf16.mxu0 0
      %828 = vmatmul.mubr.bf16.gmra.mxu0 %v580
      %v829 = vpop.f32.mrf.mxu0
      %v830 = vadd.f32 0.0, %v829
      %v831 = vpop.f32.mrf.mxu0
      %v832 = vpop.f32.mrf.mxu0
      %v833 = vadd.f32 0.0, %v832
      %v834 = vpop.f32.mrf.mxu0
      %835 = vmatprep.mubr.bf16.mxu0 0
      %836 = vmatmul.mubr.bf16.gmra.mxu0 %v583
      %v837 = vpop.f32.mrf.mxu0
      %v838 = vadd.f32 0.0, %v837
      %v839 = vpop.f32.mrf.mxu0
      %v840 = vpop.f32.mrf.mxu0
      %v841 = vadd.f32 0.0, %v840
      %v842 = vpop.f32.mrf.mxu0
      %843 = vmatprep.mubr.bf16.mxu0 0
      %844 = vmatmul.mubr.bf16.gmra.mxu0 %v586
      %v845 = vpop.f32.mrf.mxu0
      %v846 = vadd.f32 0.0, %v845
      %v847 = vpop.f32.mrf.mxu0
      %v848 = vpop.f32.mrf.mxu0
      %v849 = vadd.f32 0.0, %v848
      %v850 = vpop.f32.mrf.mxu0
      %851 = vmatprep.mubr.bf16.mxu0 0
      %852 = vmatmul.mubr.bf16.gmra.mxu0 %v589
      %v853 = vpop.f32.mrf.mxu0
      %v854 = vadd.f32 0.0, %v853
      %v855 = vpop.f32.mrf.mxu0
      %v856 = vpop.f32.mrf.mxu0
      %v857 = vadd.f32 0.0, %v856
      %v858 = vpop.f32.mrf.mxu0
      %859 = vmatprep.mubr.bf16.mxu0 0
      %860 = vmatmul.mubr.bf16.gmra.mxu0 %v592
      %v861 = vpop.f32.mrf.mxu0
      %v862 = vadd.f32 0.0, %v861
      %v863 = vpop.f32.mrf.mxu0
      %v864 = vpop.f32.mrf.mxu0
      %v865 = vadd.f32 0.0, %v864
      %v866 = vpop.f32.mrf.mxu0
      %867 = vmatprep.mubr.bf16.mxu0 0
      %868 = vmatmul.mubr.bf16.gmra.mxu0 %v595
      %v869 = vpop.f32.mrf.mxu0
      %v870 = vadd.f32 0.0, %v869
      %v871 = vpop.f32.mrf.mxu0
      %v872 = vpop.f32.mrf.mxu0
      %v873 = vadd.f32 0.0, %v872
      %v874 = vpop.f32.mrf.mxu0
      %875 = vmatprep.mubr.bf16.mxu0 0
      %876 = vmatmul.mubr.bf16.gmra.mxu0 %v598
      %v877 = vpop.f32.mrf.mxu0
      %v878 = vadd.f32 0.0, %v877
      %v879 = vpop.f32.mrf.mxu0
      %v880 = vpop.f32.mrf.mxu0
      %v881 = vadd.f32 0.0, %v880
      %v882 = vpop.f32.mrf.mxu0
      %883 = vmatprep.mubr.bf16.mxu0 0
      %884 = vmatmul.mubr.bf16.gmra.mxu0 %v601
      %v885 = vpop.f32.mrf.mxu0
      %v886 = vadd.f32 0.0, %v885
      %v887 = vpop.f32.mrf.mxu0
      %v888 = vpop.f32.mrf.mxu0
      %v889 = vadd.f32 0.0, %v888
      %v890 = vpop.f32.mrf.mxu0
      %891 = vdwg.mxu0
      %v892 = vpack.c.bf16 %v641, %v638
      %v893 = vpack.c.bf16 %v649, %v646
      %v894 = vpack.c.bf16 %v657, %v654
      %v895 = vpack.c.bf16 %v665, %v662
      %v896 = vpack.c.bf16 %v673, %v670
      %v897 = vpack.c.bf16 %v681, %v678
      %v898 = vpack.c.bf16 %v689, %v686
      %v899 = vpack.c.bf16 %v697, %v694
      %v900 = vpack.c.bf16 %v705, %v702
      %v901 = vpack.c.bf16 %v713, %v710
      %v902 = vpack.c.bf16 %v721, %v718
      %v903 = vpack.c.bf16 %v729, %v726
      %v904 = vpack.c.bf16 %v737, %v734
      %v905 = vpack.c.bf16 %v745, %v742
      %v906 = vpack.c.bf16 %v753, %v750
      %v907 = vpack.c.bf16 %v761, %v758
      %v908 = vpack.c.bf16 %v769, %v766
      %v909 = vpack.c.bf16 %v777, %v774
      %v910 = vpack.c.bf16 %v785, %v782
      %v911 = vpack.c.bf16 %v793, %v790
      %v912 = vpack.c.bf16 %v801, %v798
      %v913 = vpack.c.bf16 %v809, %v806
      %v914 = vpack.c.bf16 %v817, %v814
      %v915 = vpack.c.bf16 %v825, %v822
      %v916 = vpack.c.bf16 %v833, %v830
      %v917 = vpack.c.bf16 %v841, %v838
      %v918 = vpack.c.bf16 %v849, %v846
      %v919 = vpack.c.bf16 %v857, %v854
      %v920 = vpack.c.bf16 %v865, %v862
      %v921 = vpack.c.bf16 %v873, %v870
      %v922 = vpack.c.bf16 %v881, %v878
      %v923 = vpack.c.bf16 %v889, %v886
      %v956 = vunpack.c.l.b16 %v892
      %v957 = vunpack.c.h.b16 %v892
      %v958 = vunpack.c.l.b16 %v893
      %v959 = vunpack.c.h.b16 %v893
      %v960 = vunpack.c.l.b16 %v894
      %v961 = vunpack.c.h.b16 %v894
      %v962 = vunpack.c.l.b16 %v895
      %v963 = vunpack.c.h.b16 %v895
      %v964 = vunpack.c.l.b16 %v896
      %v965 = vunpack.c.h.b16 %v896
      %v966 = vunpack.c.l.b16 %v897
      %v967 = vunpack.c.h.b16 %v897
      %v968 = vunpack.c.l.b16 %v898
      %v969 = vunpack.c.h.b16 %v898
      %v970 = vunpack.c.l.b16 %v899
      %v971 = vunpack.c.h.b16 %v899
      %v972 = vunpack.c.l.b16 %v900
      %v973 = vunpack.c.h.b16 %v900
      %v974 = vunpack.c.l.b16 %v901
      %v975 = vunpack.c.h.b16 %v901
      %v976 = vunpack.c.l.b16 %v902
      %v977 = vunpack.c.h.b16 %v902
      %v978 = vunpack.c.l.b16 %v903
      %v979 = vunpack.c.h.b16 %v903
      %v980 = vunpack.c.l.b16 %v904
      %v981 = vunpack.c.h.b16 %v904
      %v982 = vunpack.c.l.b16 %v905
      %v983 = vunpack.c.h.b16 %v905
      %v984 = vunpack.c.l.b16 %v906
      %v985 = vunpack.c.h.b16 %v906
      %v986 = vunpack.c.l.b16 %v907
      %v987 = vunpack.c.h.b16 %v907
      %v988 = vunpack.c.l.b16 %v908
      %v989 = vunpack.c.h.b16 %v908
      %v990 = vunpack.c.l.b16 %v909
      %v991 = vunpack.c.h.b16 %v909
      %v992 = vunpack.c.l.b16 %v910
      %v993 = vunpack.c.h.b16 %v910
      %v994 = vunpack.c.l.b16 %v911
      %v995 = vunpack.c.h.b16 %v911
      %v996 = vunpack.c.l.b16 %v912
      %v997 = vunpack.c.h.b16 %v912
      %v998 = vunpack.c.l.b16 %v913
      %v999 = vunpack.c.h.b16 %v913
      %v1000 = vunpack.c.l.b16 %v914
      %v1001 = vunpack.c.h.b16 %v914
      %v1002 = vunpack.c.l.b16 %v915
      %v1003 = vunpack.c.h.b16 %v915
      %v1004 = vunpack.c.l.b16 %v916
      %v1005 = vunpack.c.h.b16 %v916
      %v1006 = vunpack.c.l.b16 %v917
      %v1007 = vunpack.c.h.b16 %v917
      %v1008 = vunpack.c.l.b16 %v918
      %v1009 = vunpack.c.h.b16 %v918
      %v1010 = vunpack.c.l.b16 %v919
      %v1011 = vunpack.c.h.b16 %v919
      %v1012 = vunpack.c.l.b16 %v920
      %v1013 = vunpack.c.h.b16 %v920
      %v1014 = vunpack.c.l.b16 %v921
      %v1015 = vunpack.c.h.b16 %v921
      %v1016 = vunpack.c.l.b16 %v922
      %v1017 = vunpack.c.h.b16 %v922
      %v1018 = vunpack.c.l.b16 %v923
      %v1019 = vunpack.c.h.b16 %v923
      %v1020 = vpack.c.b16 %v956, %v956
      %v1021 = vpack.c.b16 %v957, %v957
      %v1022 = vpack.c.b16 %v958, %v958
      %v1023 = vpack.c.b16 %v959, %v959
      %v1024 = vpack.c.b16 %v960, %v960
      %v1025 = vpack.c.b16 %v961, %v961
      %v1026 = vpack.c.b16 %v962, %v962
      %v1027 = vpack.c.b16 %v963, %v963
      %v1028 = vpack.c.b16 %v964, %v964
      %v1029 = vpack.c.b16 %v965, %v965
      %v1030 = vpack.c.b16 %v966, %v966
      %v1031 = vpack.c.b16 %v967, %v967
      %v1032 = vpack.c.b16 %v968, %v968
      %v1033 = vpack.c.b16 %v969, %v969
      %v1034 = vpack.c.b16 %v970, %v970
      %v1035 = vpack.c.b16 %v971, %v971
      %v1036 = vpack.c.b16 %v972, %v972
      %v1037 = vpack.c.b16 %v973, %v973
      %v1038 = vpack.c.b16 %v974, %v974
      %v1039 = vpack.c.b16 %v975, %v975
      %v1040 = vpack.c.b16 %v976, %v976
      %v1041 = vpack.c.b16 %v977, %v977
      %v1042 = vpack.c.b16 %v978, %v978
      %v1043 = vpack.c.b16 %v979, %v979
      %v1044 = vpack.c.b16 %v980, %v980
      %v1045 = vpack.c.b16 %v981, %v981
      %v1046 = vpack.c.b16 %v982, %v982
      %v1047 = vpack.c.b16 %v983, %v983
      %v1048 = vpack.c.b16 %v984, %v984
      %v1049 = vpack.c.b16 %v985, %v985
      %v1050 = vpack.c.b16 %v986, %v986
      %v1051 = vpack.c.b16 %v987, %v987
      %v1052 = vpack.c.b16 %v988, %v988
      %v1053 = vpack.c.b16 %v989, %v989
      %v1054 = vpack.c.b16 %v990, %v990
      %v1055 = vpack.c.b16 %v991, %v991
      %v1056 = vpack.c.b16 %v992, %v992
      %v1057 = vpack.c.b16 %v993, %v993
      %v1058 = vpack.c.b16 %v994, %v994
      %v1059 = vpack.c.b16 %v995, %v995
      %v1060 = vpack.c.b16 %v996, %v996
      %v1061 = vpack.c.b16 %v997, %v997
      %v1062 = vpack.c.b16 %v998, %v998
      %v1063 = vpack.c.b16 %v999, %v999
      %v1064 = vpack.c.b16 %v1000, %v1000
      %v1065 = vpack.c.b16 %v1001, %v1001
      %v1066 = vpack.c.b16 %v1002, %v1002
      %v1067 = vpack.c.b16 %v1003, %v1003
      %v1068 = vpack.c.b16 %v1004, %v1004
      %v1069 = vpack.c.b16 %v1005, %v1005
      %v1070 = vpack.c.b16 %v1006, %v1006
      %v1071 = vpack.c.b16 %v1007, %v1007
      %v1072 = vpack.c.b16 %v1008, %v1008
      %v1073 = vpack.c.b16 %v1009, %v1009
      %v1074 = vpack.c.b16 %v1010, %v1010
      %v1075 = vpack.c.b16 %v1011, %v1011
      %v1076 = vpack.c.b16 %v1012, %v1012
      %v1077 = vpack.c.b16 %v1013, %v1013
      %v1078 = vpack.c.b16 %v1014, %v1014
      %v1079 = vpack.c.b16 %v1015, %v1015
      %v1080 = vpack.c.b16 %v1016, %v1016
      %v1081 = vpack.c.b16 %v1017, %v1017
      %v1082 = vpack.c.b16 %v1018, %v1018
      %v1083 = vpack.c.b16 %v1019, %v1019
      %1148 = vst [vmem:[%s240] sm:$0xf] %v1020
      %1149 = vst [vmem:[%s240 + $0x4] sm:$0xf] %v1021
      %1150 = vst [vmem:[%s240 + $0x8] sm:$0xf] %v1022
      %1151 = vst [vmem:[%s240 + $0xc] sm:$0xf] %v1023
      %1152 = vst [vmem:[%s240 + $0x10] sm:$0xf] %v1024
      %1153 = vst [vmem:[%s240 + $0x14] sm:$0xf] %v1025
      %1154 = vst [vmem:[%s240 + $0x18] sm:$0xf] %v1026
      %1155 = vst [vmem:[%s240 + $0x1c] sm:$0xf] %v1027
      %1156 = vst [vmem:[%s240 + $0x20] sm:$0xf] %v1028
      %1157 = vst [vmem:[%s240 + $0x24] sm:$0xf] %v1029
      %1158 = vst [vmem:[%s240 + $0x28] sm:$0xf] %v1030
      %1159 = vst [vmem:[%s240 + $0x2c] sm:$0xf] %v1031
      %1160 = vst [vmem:[%s240 + $0x30] sm:$0xf] %v1032
      %1161 = vst [vmem:[%s240 + $0x34] sm:$0xf] %v1033
      %1162 = vst [vmem:[%s240 + $0x38] sm:$0xf] %v1034
      %1163 = vst [vmem:[%s240 + $0x3c] sm:$0xf] %v1035
      %1164 = vst [vmem:[%s240 + $0x40] sm:$0xf] %v1036
      %1165 = vst [vmem:[%s240 + $0x44] sm:$0xf] %v1037
      %1166 = vst [vmem:[%s240 + $0x48] sm:$0xf] %v1038
      %1167 = vst [vmem:[%s240 + $0x4c] sm:$0xf] %v1039
      %1168 = vst [vmem:[%s240 + $0x50] sm:$0xf] %v1040
      %1169 = vst [vmem:[%s240 + $0x54] sm:$0xf] %v1041
      %1170 = vst [vmem:[%s240 + $0x58] sm:$0xf] %v1042
      %1171 = vst [vmem:[%s240 + $0x5c] sm:$0xf] %v1043
      %1172 = vst [vmem:[%s240 + $0x60] sm:$0xf] %v1044
      %1173 = vst [vmem:[%s240 + $0x64] sm:$0xf] %v1045
      %1174 = vst [vmem:[%s240 + $0x68] sm:$0xf] %v1046
      %1175 = vst [vmem:[%s240 + $0x6c] sm:$0xf] %v1047
      %1176 = vst [vmem:[%s240 + $0x70] sm:$0xf] %v1048
      %1177 = vst [vmem:[%s240 + $0x74] sm:$0xf] %v1049
      %1178 = vst [vmem:[%s240 + $0x78] sm:$0xf] %v1050
      %1179 = vst [vmem:[%s240 + $0x7c] sm:$0xf] %v1051
      %1180 = vst [vmem:[%s240 + $0x80] sm:$0xf] %v1052
      %1181 = vst [vmem:[%s240 + $0x84] sm:$0xf] %v1053
      %1182 = vst [vmem:[%s240 + $0x88] sm:$0xf] %v1054
      %1183 = vst [vmem:[%s240 + $0x8c] sm:$0xf] %v1055
      %1184 = vst [vmem:[%s240 + $0x90] sm:$0xf] %v1056
      %1185 = vst [vmem:[%s240 + $0x94] sm:$0xf] %v1057
      %1186 = vst [vmem:[%s240 + $0x98] sm:$0xf] %v1058
      %1187 = vst [vmem:[%s240 + $0x9c] sm:$0xf] %v1059
      %1188 = vst [vmem:[%s240 + $0xa0] sm:$0xf] %v1060
      %1189 = vst [vmem:[%s240 + $0xa4] sm:$0xf] %v1061
      %1190 = vst [vmem:[%s240 + $0xa8] sm:$0xf] %v1062
      %1191 = vst [vmem:[%s240 + $0xac] sm:$0xf] %v1063
      %1192 = vst [vmem:[%s240 + $0xb0] sm:$0xf] %v1064
      %1193 = vst [vmem:[%s240 + $0xb4] sm:$0xf] %v1065
      %1194 = vst [vmem:[%s240 + $0xb8] sm:$0xf] %v1066
      %1195 = vst [vmem:[%s240 + $0xbc] sm:$0xf] %v1067
      %1196 = vst [vmem:[%s240 + $0xc0] sm:$0xf] %v1068
      %1197 = vst [vmem:[%s240 + $0xc4] sm:$0xf] %v1069
      %1198 = vst [vmem:[%s240 + $0xc8] sm:$0xf] %v1070
      %1199 = vst [vmem:[%s240 + $0xcc] sm:$0xf] %v1071
      %1200 = vst [vmem:[%s240 + $0xd0] sm:$0xf] %v1072
      %1201 = vst [vmem:[%s240 + $0xd4] sm:$0xf] %v1073
      %1202 = vst [vmem:[%s240 + $0xd8] sm:$0xf] %v1074
      %1203 = vst [vmem:[%s240 + $0xdc] sm:$0xf] %v1075
      %1204 = vst [vmem:[%s240 + $0xe0] sm:$0xf] %v1076
      %1205 = vst [vmem:[%s240 + $0xe4] sm:$0xf] %v1077
      %1206 = vst [vmem:[%s240 + $0xe8] sm:$0xf] %v1078
      %1207 = vst [vmem:[%s240 + $0xec] sm:$0xf] %v1079
      %1208 = vst [vmem:[%s240 + $0xf0] sm:$0xf] %v1080
      %1209 = vst [vmem:[%s240 + $0xf4] sm:$0xf] %v1081
      %1210 = vst [vmem:[%s240 + $0xf8] sm:$0xf] %v1082
      %1211 = vst [vmem:[%s240 + $0xfc] sm:$0xf] %v1083
      %v1212 = vadd.f32 %v638, %v641
      %v1213 = vadd.f32 %v1212, %v646
      %v1214 = vadd.f32 %v1213, %v649
      %v1215 = vadd.f32 %v1214, %v654
      %v1216 = vadd.f32 %v1215, %v657
      %v1217 = vadd.f32 %v1216, %v662
      %v1218 = vadd.f32 %v1217, %v665
      %v1219 = vadd.f32 %v1218, %v670
      %v1220 = vadd.f32 %v1219, %v673
      %v1221 = vadd.f32 %v1220, %v678
      %v1222 = vadd.f32 %v1221, %v681
      %v1223 = vadd.f32 %v1222, %v686
      %v1224 = vadd.f32 %v1223, %v689
      %v1225 = vadd.f32 %v1224, %v694
      %v1226 = vadd.f32 %v1225, %v697
      %v1227 = vadd.f32 %v1226, %v702
      %v1228 = vadd.f32 %v1227, %v705
      %v1229 = vadd.f32 %v1228, %v710
      %v1230 = vadd.f32 %v1229, %v713
      %v1231 = vadd.f32 %v1230, %v718
      %v1232 = vadd.f32 %v1231, %v721
      %v1233 = vadd.f32 %v1232, %v726
      %v1234 = vadd.f32 %v1233, %v729
      %v1235 = vadd.f32 %v1234, %v734
      %v1236 = vadd.f32 %v1235, %v737
      %v1237 = vadd.f32 %v1236, %v742
      %v1238 = vadd.f32 %v1237, %v745
      %v1239 = vadd.f32 %v1238, %v750
      %v1240 = vadd.f32 %v1239, %v753
      %v1241 = vadd.f32 %v1240, %v758
      %v1242 = vadd.f32 %v1241, %v761
      %v1243 = vadd.f32 %v1242, %v766
      %v1244 = vadd.f32 %v1243, %v769
      %v1245 = vadd.f32 %v1244, %v774
      %v1246 = vadd.f32 %v1245, %v777
      %v1247 = vadd.f32 %v1246, %v782
      %v1248 = vadd.f32 %v1247, %v785
      %v1249 = vadd.f32 %v1248, %v790
      %v1250 = vadd.f32 %v1249, %v793
      %v1251 = vadd.f32 %v1250, %v798
      %v1252 = vadd.f32 %v1251, %v801
      %v1253 = vadd.f32 %v1252, %v806
      %v1254 = vadd.f32 %v1253, %v809
      %v1255 = vadd.f32 %v1254, %v814
      %v1256 = vadd.f32 %v1255, %v817
      %v1257 = vadd.f32 %v1256, %v822
      %v1258 = vadd.f32 %v1257, %v825
      %v1259 = vadd.f32 %v1258, %v830
      %v1260 = vadd.f32 %v1259, %v833
      %v1261 = vadd.f32 %v1260, %v838
      %v1262 = vadd.f32 %v1261, %v841
      %v1263 = vadd.f32 %v1262, %v846
      %v1264 = vadd.f32 %v1263, %v849
      %v1265 = vadd.f32 %v1264, %v854
      %v1266 = vadd.f32 %v1265, %v857
      %v1267 = vadd.f32 %v1266, %v862
      %v1268 = vadd.f32 %v1267, %v865
      %v1269 = vadd.f32 %v1268, %v870
      %v1270 = vadd.f32 %v1269, %v873
      %v1271 = vadd.f32 %v1270, %v878
      %v1272 = vadd.f32 %v1271, %v881
      %v1273 = vadd.f32 %v1272, %v886
      %v1274 = vadd.f32 %v1273, %v889
      %v1275 = vrot.slane %v1274, 4
      %v1276 = vadd.f32 %v1274, %v1275
      %v1277 = vrot.slane %v1276, 2
      %v1278 = vadd.f32 %v1276, %v1277
      %v1279 = vrot.slane %v1278, 1
      %v1280 = vadd.f32 %v1278, %v1279
      %v1281 = vmul.f32 %v638, %v638
      %v1282 = vmul.f32 %v641, %v641
      %v1283 = vmul.f32 %v646, %v646
      %v1284 = vmul.f32 %v649, %v649
      %v1285 = vmul.f32 %v654, %v654
      %v1286 = vmul.f32 %v657, %v657
      %v1287 = vmul.f32 %v662, %v662
      %v1288 = vmul.f32 %v665, %v665
      %v1289 = vmul.f32 %v670, %v670
      %v1290 = vmul.f32 %v673, %v673
      %v1291 = vmul.f32 %v678, %v678
      %v1292 = vmul.f32 %v681, %v681
      %v1293 = vmul.f32 %v686, %v686
      %v1294 = vmul.f32 %v689, %v689
      %v1295 = vmul.f32 %v694, %v694
      %v1296 = vmul.f32 %v697, %v697
      %v1297 = vmul.f32 %v702, %v702
      %v1298 = vmul.f32 %v705, %v705
      %v1299 = vmul.f32 %v710, %v710
      %v1300 = vmul.f32 %v713, %v713
      %v1301 = vmul.f32 %v718, %v718
      %v1302 = vmul.f32 %v721, %v721
      %v1303 = vmul.f32 %v726, %v726
      %v1304 = vmul.f32 %v729, %v729
      %v1305 = vmul.f32 %v734, %v734
      %v1306 = vmul.f32 %v737, %v737
      %v1307 = vmul.f32 %v742, %v742
      %v1308 = vmul.f32 %v745, %v745
      %v1309 = vmul.f32 %v750, %v750
      %v1310 = vmul.f32 %v753, %v753
      %v1311 = vmul.f32 %v758, %v758
      %v1312 = vmul.f32 %v761, %v761
      %v1313 = vmul.f32 %v766, %v766
      %v1314 = vmul.f32 %v769, %v769
      %v1315 = vmul.f32 %v774, %v774
      %v1316 = vmul.f32 %v777, %v777
      %v1317 = vmul.f32 %v782, %v782
      %v1318 = vmul.f32 %v785, %v785
      %v1319 = vmul.f32 %v790, %v790
      %v1320 = vmul.f32 %v793, %v793
      %v1321 = vmul.f32 %v798, %v798
      %v1322 = vmul.f32 %v801, %v801
      %v1323 = vmul.f32 %v806, %v806
      %v1324 = vmul.f32 %v809, %v809
      %v1325 = vmul.f32 %v814, %v814
      %v1326 = vmul.f32 %v817, %v817
      %v1327 = vmul.f32 %v822, %v822
      %v1328 = vmul.f32 %v825, %v825
      %v1329 = vmul.f32 %v830, %v830
      %v1330 = vmul.f32 %v833, %v833
      %v1331 = vmul.f32 %v838, %v838
      %v1332 = vmul.f32 %v841, %v841
      %v1333 = vmul.f32 %v846, %v846
      %v1334 = vmul.f32 %v849, %v849
      %v1335 = vmul.f32 %v854, %v854
      %v1336 = vmul.f32 %v857, %v857
      %v1337 = vmul.f32 %v862, %v862
      %v1338 = vmul.f32 %v865, %v865
      %v1339 = vmul.f32 %v870, %v870
      %v1340 = vmul.f32 %v873, %v873
      %v1341 = vmul.f32 %v878, %v878
      %v1342 = vmul.f32 %v881, %v881
      %v1343 = vmul.f32 %v886, %v886
      %v1344 = vmul.f32 %v889, %v889
      %v1345 = vadd.f32 %v1281, %v1282
      %v1346 = vadd.f32 %v1345, %v1283
      %v1347 = vadd.f32 %v1346, %v1284
      %v1348 = vadd.f32 %v1347, %v1285
      %v1349 = vadd.f32 %v1348, %v1286
      %v1350 = vadd.f32 %v1349, %v1287
      %v1351 = vadd.f32 %v1350, %v1288
      %v1352 = vadd.f32 %v1351, %v1289
      %v1353 = vadd.f32 %v1352, %v1290
      %v1354 = vadd.f32 %v1353, %v1291
      %v1355 = vadd.f32 %v1354, %v1292
      %v1356 = vadd.f32 %v1355, %v1293
      %v1357 = vadd.f32 %v1356, %v1294
      %v1358 = vadd.f32 %v1357, %v1295
      %v1359 = vadd.f32 %v1358, %v1296
      %v1360 = vadd.f32 %v1359, %v1297
      %v1361 = vadd.f32 %v1360, %v1298
      %v1362 = vadd.f32 %v1361, %v1299
      %v1363 = vadd.f32 %v1362, %v1300
      %v1364 = vadd.f32 %v1363, %v1301
      %v1365 = vadd.f32 %v1364, %v1302
      %v1366 = vadd.f32 %v1365, %v1303
      %v1367 = vadd.f32 %v1366, %v1304
      %v1368 = vadd.f32 %v1367, %v1305
      %v1369 = vadd.f32 %v1368, %v1306
      %v1370 = vadd.f32 %v1369, %v1307
      %v1371 = vadd.f32 %v1370, %v1308
      %v1372 = vadd.f32 %v1371, %v1309
      %v1373 = vadd.f32 %v1372, %v1310
      %v1374 = vadd.f32 %v1373, %v1311
      %v1375 = vadd.f32 %v1374, %v1312
      %v1376 = vadd.f32 %v1375, %v1313
      %v1377 = vadd.f32 %v1376, %v1314
      %v1378 = vadd.f32 %v1377, %v1315
      %v1379 = vadd.f32 %v1378, %v1316
      %v1380 = vadd.f32 %v1379, %v1317
      %v1381 = vadd.f32 %v1380, %v1318
      %v1382 = vadd.f32 %v1381, %v1319
      %v1383 = vadd.f32 %v1382, %v1320
      %v1384 = vadd.f32 %v1383, %v1321
      %v1385 = vadd.f32 %v1384, %v1322
      %v1386 = vadd.f32 %v1385, %v1323
      %v1387 = vadd.f32 %v1386, %v1324
      %v1388 = vadd.f32 %v1387, %v1325
      %v1389 = vadd.f32 %v1388, %v1326
      %v1390 = vadd.f32 %v1389, %v1327
      %v1391 = vadd.f32 %v1390, %v1328
      %v1392 = vadd.f32 %v1391, %v1329
      %v1393 = vadd.f32 %v1392, %v1330
      %v1394 = vadd.f32 %v1393, %v1331
      %v1395 = vadd.f32 %v1394, %v1332
      %v1396 = vadd.f32 %v1395, %v1333
      %v1397 = vadd.f32 %v1396, %v1334
      %v1398 = vadd.f32 %v1397, %v1335
      %v1399 = vadd.f32 %v1398, %v1336
      %v1400 = vadd.f32 %v1399, %v1337
      %v1401 = vadd.f32 %v1400, %v1338
      %v1402 = vadd.f32 %v1401, %v1339
      %v1403 = vadd.f32 %v1402, %v1340
      %v1404 = vadd.f32 %v1403, %v1341
      %v1405 = vadd.f32 %v1404, %v1342
      %v1406 = vadd.f32 %v1405, %v1343
      %v1407 = vadd.f32 %v1406, %v1344
      %v1408 = vrot.slane %v1407, 4
      %v1409 = vadd.f32 %v1407, %v1408
      %v1410 = vrot.slane %v1409, 2
      %v1411 = vadd.f32 %v1409, %v1410
      %v1412 = vrot.slane %v1411, 1
      %v1413 = vadd.f32 %v1411, %v1412
      %v1414 = vlaneseq
      %v1415 = vshrl.u32 %v1414, 7
      %vm1416 = vcmp.eq.s32.totalorder %v1415, 0
      %v1417 = vsel %vm1416, %v1280, %v1413
      %1418 = vst [vmem:[%s248] sm:$0xff] %v1417
      %s1419 = smul.u32 64, %s20
      %p1420 = scmp.lt.s32.totalorder %s19, 3
      %s1421 = scalar_select %p1420, %s19, 3
      %p1422 = scmp.lt.s32.totalorder %s1419, 63
      %s1423 = scalar_select %p1422, %s1419, 63
      %s1424 = smul.addr %s1421, 64
      %s1425 = sadd.s32 %s1423, %s1424
      %s1426 = smul.addr %s1425, 4
      %s1427 = scalar_lea.vmem %s2, %s1426
      %p1428 = scmp.lt.s32.totalorder %s19, 3
      %s1429 = scalar_select %p1428, %s19, 3
      %p1430 = scmp.lt.s32.totalorder %s20, 0
      %s1431 = scalar_select %p1430, %s20, 0
      %s1432 = sadd.s32 %s1431, %s1429
      %s1433 = smul.addr %s1432, 8
      %s1434 = scalar_lea.vmem %s3, %s1433
      // Predicated region
      $region29: #{generator_forward.8} parent=27 // pred_check
        %p1435 = pneg %p101
      $region30: #{generator_forward.8} parent=27 // pred_check_branch
        %1437 = sbr.rel (%p1435) target = $region32
      $region31: #{generator_forward.8} parent=27 // pred_region
        %s1438 = smul.u32 64, %s20
      $region32: #{generator_forward.8} parent=27 // pred_fallthru
        _
      // Predicated region
      $region33: #{generator_forward.8} parent=27 // pred_check
        %p1439 = pneg %p129
      $region34: #{generator_forward.8} parent=27 // pred_check_branch
        %1441 = sbr.rel (%p1439) target = $region36
      $region35: #{generator_forward.8} parent=27 // pred_region
        _
      $region36: #{generator_forward.8} parent=27 // pred_fallthru
        _
    $region28: #{generator_forward.8} parent=5 // pred_fallthru
      _
    %p1442 = scmp.le.s32.totalorder 2, %s10
    // Predicated region
    $region37: #{generator_forward.8} parent=5 // pred_check
      %p1443 = pneg %p1442
    $region38: #{generator_forward.8} parent=5 // pred_check_branch
      %1445 = sbr.rel (%p1443) target = $region40
    $region39: #{generator_forward.8} parent=5 // pred_region
      %s1446 = ssub.s32 %s10, 2
      // Predicated region
      $region41: #{generator_forward.8} parent=39 // pred_check
        %p1447 = pneg %p107
      $region42: #{generator_forward.8} parent=39 // pred_check_branch
        %1449 = sbr.rel (%p1447) target = $region44
      $region43: #{generator_forward.8} parent=39 // pred_region
        %s1450 = smul.u32 64, %s22
        %p1451 = scmp.lt.s32.totalorder %s21, 3
        %s1452 = scalar_select %p1451, %s21, 3
        %p1453 = scmp.lt.s32.totalorder %s1450, 63
        %s1454 = scalar_select %p1453, %s1450, 63
        %s1455 = smul.addr %s1452, 64
        %s1456 = sadd.s32 %s1454, %s1455
        %s1457 = smul.addr %s1456, 4
        %s1458 = scalar_lea.vmem %s2, %s1457
      $region44: #{generator_forward.8} parent=39 // pred_fallthru
        _
      // Predicated region
      $region45: #{generator_forward.8} parent=39 // pred_check
        %p1459 = pneg %p135
      $region46: #{generator_forward.8} parent=39 // pred_check_branch
        %1461 = sbr.rel (%p1459) target = $region48
      $region47: #{generator_forward.8} parent=39 // pred_region
        %p1462 = scmp.lt.s32.totalorder %s21, 3
        %s1463 = scalar_select %p1462, %s21, 3
        %p1464 = scmp.lt.s32.totalorder %s22, 0
        %s1465 = scalar_select %p1464, %s22, 0
        %s1466 = sadd.s32 %s1465, %s1463
        %s1467 = smul.addr %s1466, 8
        %s1468 = scalar_lea.vmem %s3, %s1467
      $region48: #{generator_forward.8} parent=39 // pred_fallthru
        _
    $region40: #{generator_forward.8} parent=5 // pred_fallthru
      _
  $region6: #{generator_forward.8} parent=0 // loop_footer
    %s14 = sadd.s32 1, %s10
  $region7: #{generator_forward.8} parent=0 // loop_footer_branch
    %9 = sbr.rel target = $region3
  $region8: #{generator_forward.8} parent=0 // loop_exit
    _

// kernel: generator_forward.9
$region0: #{generator_forward.9}
  #allocation0 [shape = 'u32[]', space=smem, size = 0x4, offset = 0x4, fixed_abs, tag = 'smem constant byte address 0x4 - core index']
  #allocation1 [shape = 'u32[144,128]{1,0:T(1,128)}', space=vmem, size = 0x12000, scoped, tag = 'internal scratch']
  %s0 = inlined_call_operand.vmem [shape: bf16[4,2048,32], index: 0, kind: input, shape index: {}]
  %s1 = inlined_call_operand.vmem [shape: bf16[4,32,128], index: 1, kind: input, shape index: {}]
  %s2 = inlined_call_operand.vmem [shape: bf16[4,2048,128], index: 2, kind: output, shape index: {}]
  %s3 = sld [smem:[#allocation0]]
  $region41: #{generator_forward.9} parent=0
    _
  %s5 = ssub.s32 1, %s3
  %s6 = scalar_select 0, %s5, %s3
  loop: start=0, step=1, limit=10
  $region2: #{generator_forward.9} parent=0 // loop_pre_header
    _
  $region3: #{generator_forward.9} parent=0 // loop_header
    %s8 = sphi 0, %s12
    %p9 = scmp.ge.s32.totalorder %s8, 10
    %s15 = sphi 0, %s27
    %s16 = sphi 0, %s23
    %s17 = sphi 0, %s15
    %s18 = sphi 0, %s16
    %s19 = sphi 0, %s17
    %s20 = sphi 0, %s18
    %s32 = sphi 0, %s34
    %s35 = sphi 0, %s32
    %s36 = sphi 0, %s35
    %s52 = sphi 0, %s36
    %s58 = sphi 0, %s60
    %s61 = sphi 0, %s58
    %s62 = sphi 0, %s61
    %s78 = sphi 0, %s62
    %s86 = sphi 0, %s88
    %s89 = sphi 0, %s86
    %s90 = sphi 0, %s89
    %s106 = sphi 0, %s90
  $region4: #{generator_forward.9} parent=0 // loop_header_branch
    %11 = sbr.rel (%p9) target = $region8
  $region5: #{generator_forward.9} parent=0 // loop_body
    %s13 = ssub.s32 %s8, 1
    %s14 = ssub.s32 %s8, 2
    %s21 = sadd.s32 1, %s16
    %p22 = scmp.ge.s32.totalorder %s21, 2
    %s23 = scalar_select %p22, 0, %s21
    %s24 = sadd.s32 1, %s15
    %s25 = scalar_select %p22, %s24, %s15
    %p26 = scmp.ge.s32.totalorder %s25, 4
    %s27 = scalar_select %p26, 0, %s25
    %s28 = ssub.s32 %s15, %s27
    %s29 = ssub.s32 %s16, %s23
    %s30 = sor.u32 %s28, %s29
    %p31 = scmp.eq.s32.totalorder %s30, 0
    %s33 = sadd.s32 %s32, 1
    %s34 = scalar_select %p31, %s32, %s33
    %p37 = pneg %p31
    %p38 = scmp.eq.s32.totalorder %s8, 7
    %p39 = por %p37, %p38
    %p40 = scmp.ne.s32.totalorder %s32, %s35
    %p41 = scmp.eq.s32.totalorder %s8, 0
    %p42 = por %p40, %p41
    %p43 = scmp.ne.s32.totalorder %s32, %s35
    %p44 = scmp.eq.s32.totalorder %s13, 7
    %p45 = por %p43, %p44
    %p46 = scmp.ne.s32.totalorder %s35, %s36
    %p47 = scmp.eq.s32.totalorder %s13, 0
    %p48 = por %p46, %p47
    %p49 = scmp.ne.s32.totalorder %s35, %s36
    %p50 = scmp.eq.s32.totalorder %s14, 7
    %p51 = por %p49, %p50
    %p53 = scmp.ne.s32.totalorder %s36, %s52
    %p54 = scmp.eq.s32.totalorder %s14, 0
    %p55 = por %p53, %p54
    %s56 = ssub.s32 %s15, %s27
    %p57 = scmp.eq.s32.totalorder %s56, 0
    %s59 = sadd.s32 %s58, 1
    %s60 = scalar_select %p57, %s58, %s59
    %p63 = pneg %p57
    %p64 = scmp.eq.s32.totalorder %s8, 7
    %p65 = por %p63, %p64
    %p66 = scmp.ne.s32.totalorder %s58, %s61
    %p67 = scmp.eq.s32.totalorder %s8, 0
    %p68 = por %p66, %p67
    %p69 = scmp.ne.s32.totalorder %s58, %s61
    %p70 = scmp.eq.s32.totalorder %s13, 7
    %p71 = por %p69, %p70
    %p72 = scmp.ne.s32.totalorder %s61, %s62
    %p73 = scmp.eq.s32.totalorder %s13, 0
    %p74 = por %p72, %p73
    %p75 = scmp.ne.s32.totalorder %s61, %s62
    %p76 = scmp.eq.s32.totalorder %s14, 7
    %p77 = por %p75, %p76
    %p79 = scmp.ne.s32.totalorder %s62, %s78
    %p80 = scmp.eq.s32.totalorder %s14, 0
    %p81 = por %p79, %p80
    %s82 = ssub.s32 %s15, %s27
    %s83 = ssub.s32 %s16, %s23
    %s84 = sor.u32 %s82, %s83
    %p85 = scmp.eq.s32.totalorder %s84, 0
    %s87 = sadd.s32 %s86, 1
    %s88 = scalar_select %p85, %s86, %s87
    %p91 = pneg %p85
    %p92 = scmp.eq.s32.totalorder %s8, 7
    %p93 = por %p91, %p92
    %p94 = scmp.ne.s32.totalorder %s86, %s89
    %p95 = scmp.eq.s32.totalorder %s8, 0
    %p96 = por %p94, %p95
    %p97 = scmp.ne.s32.totalorder %s86, %s89
    %p98 = scmp.eq.s32.totalorder %s13, 7
    %p99 = por %p97, %p98
    %p100 = scmp.ne.s32.totalorder %s89, %s90
    %p101 = scmp.eq.s32.totalorder %s13, 0
    %p102 = por %p100, %p101
    %p103 = scmp.ne.s32.totalorder %s89, %s90
    %p104 = scmp.eq.s32.totalorder %s14, 7
    %p105 = por %p103, %p104
    %p107 = scmp.ne.s32.totalorder %s90, %s106
    %p108 = scmp.eq.s32.totalorder %s14, 0
    %p109 = por %p107, %p108
    %p110 = scmp.le.s32.totalorder 1, %s8
    %p111 = scmp.lt.s32.totalorder %s8, 9
    %p112 = pnand %p110, %p111
    %p113 = pneg %p112
    // Predicated region
    $region9: #{generator_forward.9} parent=5 // pred_check
      _
    $region10: #{generator_forward.9} parent=5 // pred_check_branch
      %115 = sbr.rel (%p112) target = $region12
    $region11: #{generator_forward.9} parent=5 // pred_region
      %s116 = ssub.s32 %s8, 1
    $region12: #{generator_forward.9} parent=5 // pred_fallthru
      _
    %p117 = scmp.lt.s32.totalorder %s8, 8
    // Predicated region
    $region13: #{generator_forward.9} parent=5 // pred_check
      %p118 = pneg %p117
    $region14: #{generator_forward.9} parent=5 // pred_check_branch
      %120 = sbr.rel (%p118) target = $region16
    $region15: #{generator_forward.9} parent=5 // pred_region
      // Predicated region
      $region17: #{generator_forward.9} parent=15 // pred_check
        %p121 = pneg %p42
      $region18: #{generator_forward.9} parent=15 // pred_check_branch
        %123 = sbr.rel (%p121) target = $region20
      $region19: #{generator_forward.9} parent=15 // pred_region
        %s124 = smul.u32 128, %s16
        %p125 = scmp.lt.s32.totalorder %s15, 3
        %s126 = scalar_select %p125, %s15, 3
        %p127 = scmp.lt.s32.totalorder %s124, 255
        %s128 = scalar_select %p127, %s124, 255
        %s129 = smul.addr %s126, 256
        %s130 = sadd.s32 %s128, %s129
        %s131 = smul.addr %s130, 4
        %s132 = scalar_lea.vmem %s0, %s131
        %s133 = smul.u32 128, %s16
      $region20: #{generator_forward.9} parent=15 // pred_fallthru
        _
      // Predicated region
      $region21: #{generator_forward.9} parent=15 // pred_check
        %p134 = pneg %p68
      $region22: #{generator_forward.9} parent=15 // pred_check_branch
        %136 = sbr.rel (%p134) target = $region24
      $region23: #{generator_forward.9} parent=15 // pred_region
        %p137 = scmp.lt.s32.totalorder %s15, 3
        %s138 = scalar_select %p137, %s15, 3
        %s139 = smul.addr %s138, 4
        %s140 = smul.addr %s139, 4
        %s141 = scalar_lea.vmem %s1, %s140
      $region24: #{generator_forward.9} parent=15 // pred_fallthru
        _
    $region16: #{generator_forward.9} parent=5 // pred_fallthru
      _
    %p142 = scmp.le.s32.totalorder 1, %s8
    %p143 = scmp.lt.s32.totalorder %s8, 9
    %p144 = pnand %p142, %p143
    %p145 = pneg %p144
    // Predicated region
    $region25: #{generator_forward.9} parent=5 // pred_check
      _
    $region26: #{generator_forward.9} parent=5 // pred_check_branch
      %147 = sbr.rel (%p144) target = $region28
    $region27: #{generator_forward.9} parent=5 // pred_region
      %s148 = ssub.s32 %s8, 1
      %s149 = smul.u32 128, %s18
      %p150 = scmp.lt.s32.totalorder %s17, 3
      %s151 = scalar_select %p150, %s17, 3
      %p152 = scmp.lt.s32.totalorder %s149, 255
      %s153 = scalar_select %p152, %s149, 255
      %s154 = smul.addr %s151, 256
      %s155 = sadd.s32 %s153, %s154
      %s156 = smul.addr %s155, 4
      %s157 = scalar_lea.vmem %s0, %s156
      %p158 = pneg %p48
      %p159 = pneg %p45
      %p160 = scmp.lt.s32.totalorder %s17, 3
      %s161 = scalar_select %p160, %s17, 3
      %s162 = smul.addr %s161, 4
      %s163 = smul.addr %s162, 4
      %s164 = scalar_lea.vmem %s1, %s163
      %p165 = pneg %p74
      %p166 = pneg %p71
      %p167 = pneg %p102
      %p168 = pneg %p99
      %s169 = smul.u32 128, %s18
      %p170 = scmp.lt.s32.totalorder %s17, 3
      %s171 = scalar_select %p170, %s17, 3
      %p172 = scmp.lt.s32.totalorder %s169, 255
      %s173 = scalar_select %p172, %s169, 255
      %s174 = smul.addr %s171, 256
      %s175 = sadd.s32 %s173, %s174
      %s176 = smul.addr %s175, 4
      %s177 = scalar_lea.vmem %s2, %s176
      %s178 = smul.u32 128, %s18
      %p179 = scmp.lt.s32.totalorder %s17, 3
      %s180 = scalar_select %p179, %s17, 3
      %p181 = scmp.lt.s32.totalorder %s178, 255
      %s182 = scalar_select %p181, %s178, 255
      %s183 = smul.addr %s180, 256
      %s184 = sadd.s32 %s182, %s183
      %s185 = smul.addr %s184, 4
      %s186 = scalar_lea.vmem %s0, %s185
      %s187 = smul.u32 128, %s18
      %p188 = scmp.lt.s32.totalorder %s17, 3
      %s189 = scalar_select %p188, %s17, 3
      %s190 = smul.addr %s189, 4
      %s191 = smul.addr %s190, 4
      %s192 = scalar_lea.vmem %s1, %s191
      %s193 = smul.u32 128, %s18
      %p194 = scmp.lt.s32.totalorder %s17, 3
      %s195 = scalar_select %p194, %s17, 3
      %p196 = scmp.lt.s32.totalorder %s193, 255
      %s197 = scalar_select %p196, %s193, 255
      %s198 = smul.addr %s195, 256
      %s199 = sadd.s32 %s197, %s198
      %s200 = smul.addr %s199, 4
      %s201 = scalar_lea.vmem %s2, %s200
      %s202 = smul.u32 128, %s18
      %v204 = vld [vmem:[%s186] sm:$0xf]
      %v205 = vld [vmem:[%s186 + $0x4] sm:$0xf]
      %v206 = vld [vmem:[%s186 + $0x8] sm:$0xf]
      %v207 = vld [vmem:[%s186 + $0xc] sm:$0xf]
      %v208 = vld [vmem:[%s186 + $0x10] sm:$0xf]
      %v209 = vld [vmem:[%s186 + $0x14] sm:$0xf]
      %v210 = vld [vmem:[%s186 + $0x18] sm:$0xf]
      %v211 = vld [vmem:[%s186 + $0x1c] sm:$0xf]
      %v212 = vld [vmem:[%s186 + $0x20] sm:$0xf]
      %v213 = vld [vmem:[%s186 + $0x24] sm:$0xf]
      %v214 = vld [vmem:[%s186 + $0x28] sm:$0xf]
      %v215 = vld [vmem:[%s186 + $0x2c] sm:$0xf]
      %v216 = vld [vmem:[%s186 + $0x30] sm:$0xf]
      %v217 = vld [vmem:[%s186 + $0x34] sm:$0xf]
      %v218 = vld [vmem:[%s186 + $0x38] sm:$0xf]
      %v219 = vld [vmem:[%s186 + $0x3c] sm:$0xf]
      %v220 = vld [vmem:[%s186 + $0x40] sm:$0xf]
      %v221 = vld [vmem:[%s186 + $0x44] sm:$0xf]
      %v222 = vld [vmem:[%s186 + $0x48] sm:$0xf]
      %v223 = vld [vmem:[%s186 + $0x4c] sm:$0xf]
      %v224 = vld [vmem:[%s186 + $0x50] sm:$0xf]
      %v225 = vld [vmem:[%s186 + $0x54] sm:$0xf]
      %v226 = vld [vmem:[%s186 + $0x58] sm:$0xf]
      %v227 = vld [vmem:[%s186 + $0x5c] sm:$0xf]
      %v228 = vld [vmem:[%s186 + $0x60] sm:$0xf]
      %v229 = vld [vmem:[%s186 + $0x64] sm:$0xf]
      %v230 = vld [vmem:[%s186 + $0x68] sm:$0xf]
      %v231 = vld [vmem:[%s186 + $0x6c] sm:$0xf]
      %v232 = vld [vmem:[%s186 + $0x70] sm:$0xf]
      %v233 = vld [vmem:[%s186 + $0x74] sm:$0xf]
      %v234 = vld [vmem:[%s186 + $0x78] sm:$0xf]
      %v235 = vld [vmem:[%s186 + $0x7c] sm:$0xf]
      %v236 = vld [vmem:[%s186 + $0x80] sm:$0xf]
      %v237 = vld [vmem:[%s186 + $0x84] sm:$0xf]
      %v238 = vld [vmem:[%s186 + $0x88] sm:$0xf]
      %v239 = vld [vmem:[%s186 + $0x8c] sm:$0xf]
      %v240 = vld [vmem:[%s186 + $0x90] sm:$0xf]
      %v241 = vld [vmem:[%s186 + $0x94] sm:$0xf]
      %v242 = vld [vmem:[%s186 + $0x98] sm:$0xf]
      %v243 = vld [vmem:[%s186 + $0x9c] sm:$0xf]
      %v244 = vld [vmem:[%s186 + $0xa0] sm:$0xf]
      %v245 = vld [vmem:[%s186 + $0xa4] sm:$0xf]
      %v246 = vld [vmem:[%s186 + $0xa8] sm:$0xf]
      %v247 = vld [vmem:[%s186 + $0xac] sm:$0xf]
      %v248 = vld [vmem:[%s186 + $0xb0] sm:$0xf]
      %v249 = vld [vmem:[%s186 + $0xb4] sm:$0xf]
      %v250 = vld [vmem:[%s186 + $0xb8] sm:$0xf]
      %v251 = vld [vmem:[%s186 + $0xbc] sm:$0xf]
      %v252 = vld [vmem:[%s186 + $0xc0] sm:$0xf]
      %v253 = vld [vmem:[%s186 + $0xc4] sm:$0xf]
      %v254 = vld [vmem:[%s186 + $0xc8] sm:$0xf]
      %v255 = vld [vmem:[%s186 + $0xcc] sm:$0xf]
      %v256 = vld [vmem:[%s186 + $0xd0] sm:$0xf]
      %v257 = vld [vmem:[%s186 + $0xd4] sm:$0xf]
      %v258 = vld [vmem:[%s186 + $0xd8] sm:$0xf]
      %v259 = vld [vmem:[%s186 + $0xdc] sm:$0xf]
      %v260 = vld [vmem:[%s186 + $0xe0] sm:$0xf]
      %v261 = vld [vmem:[%s186 + $0xe4] sm:$0xf]
      %v262 = vld [vmem:[%s186 + $0xe8] sm:$0xf]
      %v263 = vld [vmem:[%s186 + $0xec] sm:$0xf]
      %v264 = vld [vmem:[%s186 + $0xf0] sm:$0xf]
      %v265 = vld [vmem:[%s186 + $0xf4] sm:$0xf]
      %v266 = vld [vmem:[%s186 + $0xf8] sm:$0xf]
      %v267 = vld [vmem:[%s186 + $0xfc] sm:$0xf]
      %v268 = vld [vmem:[%s186 + $0x100] sm:$0xf]
      %v269 = vld [vmem:[%s186 + $0x104] sm:$0xf]
      %v270 = vld [vmem:[%s186 + $0x108] sm:$0xf]
      %v271 = vld [vmem:[%s186 + $0x10c] sm:$0xf]
      %v272 = vld [vmem:[%s186 + $0x110] sm:$0xf]
      %v273 = vld [vmem:[%s186 + $0x114] sm:$0xf]
      %v274 = vld [vmem:[%s186 + $0x118] sm:$0xf]
      %v275 = vld [vmem:[%s186 + $0x11c] sm:$0xf]
      %v276 = vld [vmem:[%s186 + $0x120] sm:$0xf]
      %v277 = vld [vmem:[%s186 + $0x124] sm:$0xf]
      %v278 = vld [vmem:[%s186 + $0x128] sm:$0xf]
      %v279 = vld [vmem:[%s186 + $0x12c] sm:$0xf]
      %v280 = vld [vmem:[%s186 + $0x130] sm:$0xf]
      %v281 = vld [vmem:[%s186 + $0x134] sm:$0xf]
      %v282 = vld [vmem:[%s186 + $0x138] sm:$0xf]
      %v283 = vld [vmem:[%s186 + $0x13c] sm:$0xf]
      %v284 = vld [vmem:[%s186 + $0x140] sm:$0xf]
      %v285 = vld [vmem:[%s186 + $0x144] sm:$0xf]
      %v286 = vld [vmem:[%s186 + $0x148] sm:$0xf]
      %v287 = vld [vmem:[%s186 + $0x14c] sm:$0xf]
      %v288 = vld [vmem:[%s186 + $0x150] sm:$0xf]
      %v289 = vld [vmem:[%s186 + $0x154] sm:$0xf]
      %v290 = vld [vmem:[%s186 + $0x158] sm:$0xf]
      %v291 = vld [vmem:[%s186 + $0x15c] sm:$0xf]
      %v292 = vld [vmem:[%s186 + $0x160] sm:$0xf]
      %v293 = vld [vmem:[%s186 + $0x164] sm:$0xf]
      %v294 = vld [vmem:[%s186 + $0x168] sm:$0xf]
      %v295 = vld [vmem:[%s186 + $0x16c] sm:$0xf]
      %v296 = vld [vmem:[%s186 + $0x170] sm:$0xf]
      %v297 = vld [vmem:[%s186 + $0x174] sm:$0xf]
      %v298 = vld [vmem:[%s186 + $0x178] sm:$0xf]
      %v299 = vld [vmem:[%s186 + $0x17c] sm:$0xf]
      %v300 = vld [vmem:[%s186 + $0x180] sm:$0xf]
      %v301 = vld [vmem:[%s186 + $0x184] sm:$0xf]
      %v302 = vld [vmem:[%s186 + $0x188] sm:$0xf]
      %v303 = vld [vmem:[%s186 + $0x18c] sm:$0xf]
      %v304 = vld [vmem:[%s186 + $0x190] sm:$0xf]
      %v305 = vld [vmem:[%s186 + $0x194] sm:$0xf]
      %v306 = vld [vmem:[%s186 + $0x198] sm:$0xf]
      %v307 = vld [vmem:[%s186 + $0x19c] sm:$0xf]
      %v308 = vld [vmem:[%s186 + $0x1a0] sm:$0xf]
      %v309 = vld [vmem:[%s186 + $0x1a4] sm:$0xf]
      %v310 = vld [vmem:[%s186 + $0x1a8] sm:$0xf]
      %v311 = vld [vmem:[%s186 + $0x1ac] sm:$0xf]
      %v312 = vld [vmem:[%s186 + $0x1b0] sm:$0xf]
      %v313 = vld [vmem:[%s186 + $0x1b4] sm:$0xf]
      %v314 = vld [vmem:[%s186 + $0x1b8] sm:$0xf]
      %v315 = vld [vmem:[%s186 + $0x1bc] sm:$0xf]
      %v316 = vld [vmem:[%s186 + $0x1c0] sm:$0xf]
      %v317 = vld [vmem:[%s186 + $0x1c4] sm:$0xf]
      %v318 = vld [vmem:[%s186 + $0x1c8] sm:$0xf]
      %v319 = vld [vmem:[%s186 + $0x1cc] sm:$0xf]
      %v320 = vld [vmem:[%s186 + $0x1d0] sm:$0xf]
      %v321 = vld [vmem:[%s186 + $0x1d4] sm:$0xf]
      %v322 = vld [vmem:[%s186 + $0x1d8] sm:$0xf]
      %v323 = vld [vmem:[%s186 + $0x1dc] sm:$0xf]
      %v324 = vld [vmem:[%s186 + $0x1e0] sm:$0xf]
      %v325 = vld [vmem:[%s186 + $0x1e4] sm:$0xf]
      %v326 = vld [vmem:[%s186 + $0x1e8] sm:$0xf]
      %v327 = vld [vmem:[%s186 + $0x1ec] sm:$0xf]
      %v328 = vld [vmem:[%s186 + $0x1f0] sm:$0xf]
      %v329 = vld [vmem:[%s186 + $0x1f4] sm:$0xf]
      %v330 = vld [vmem:[%s186 + $0x1f8] sm:$0xf]
      %v331 = vld [vmem:[%s186 + $0x1fc] sm:$0xf]
      %v332 = vld [vmem:[%s192] sm:$0xf]
      %v333 = vld [vmem:[%s192 + $0x4] sm:$0xf]
      %v334 = vld [vmem:[%s192 + $0x8] sm:$0xf]
      %v335 = vld [vmem:[%s192 + $0xc] sm:$0xf]
      %v464 = vunpack.c.l.b16 %v204
      %v465 = vunpack.c.l.b16 %v205
      %v466 = vunpack.c.l.b16 %v206
      %v467 = vunpack.c.l.b16 %v207
      %v468 = vunpack.c.l.b16 %v208
      %v469 = vunpack.c.l.b16 %v209
      %v470 = vunpack.c.l.b16 %v210
      %v471 = vunpack.c.l.b16 %v211
      %v472 = vunpack.c.l.b16 %v212
      %v473 = vunpack.c.l.b16 %v213
      %v474 = vunpack.c.l.b16 %v214
      %v475 = vunpack.c.l.b16 %v215
      %v476 = vunpack.c.l.b16 %v216
      %v477 = vunpack.c.l.b16 %v217
      %v478 = vunpack.c.l.b16 %v218
      %v479 = vunpack.c.l.b16 %v219
      %v480 = vunpack.c.l.b16 %v220
      %v481 = vunpack.c.l.b16 %v221
      %v482 = vunpack.c.l.b16 %v222
      %v483 = vunpack.c.l.b16 %v223
      %v484 = vunpack.c.l.b16 %v224
      %v485 = vunpack.c.l.b16 %v225
      %v486 = vunpack.c.l.b16 %v226
      %v487 = vunpack.c.l.b16 %v227
      %v488 = vunpack.c.l.b16 %v228
      %v489 = vunpack.c.l.b16 %v229
      %v490 = vunpack.c.l.b16 %v230
      %v491 = vunpack.c.l.b16 %v231
      %v492 = vunpack.c.l.b16 %v232
      %v493 = vunpack.c.l.b16 %v233
      %v494 = vunpack.c.l.b16 %v234
      %v495 = vunpack.c.l.b16 %v235
      %v496 = vunpack.c.l.b16 %v236
      %v497 = vunpack.c.l.b16 %v237
      %v498 = vunpack.c.l.b16 %v238
      %v499 = vunpack.c.l.b16 %v239
      %v500 = vunpack.c.l.b16 %v240
      %v501 = vunpack.c.l.b16 %v241
      %v502 = vunpack.c.l.b16 %v242
      %v503 = vunpack.c.l.b16 %v243
      %v504 = vunpack.c.l.b16 %v244
      %v505 = vunpack.c.l.b16 %v245
      %v506 = vunpack.c.l.b16 %v246
      %v507 = vunpack.c.l.b16 %v247
      %v508 = vunpack.c.l.b16 %v248
      %v509 = vunpack.c.l.b16 %v249
      %v510 = vunpack.c.l.b16 %v250
      %v511 = vunpack.c.l.b16 %v251
      %v512 = vunpack.c.l.b16 %v252
      %v513 = vunpack.c.l.b16 %v253
      %v514 = vunpack.c.l.b16 %v254
      %v515 = vunpack.c.l.b16 %v255
      %v516 = vunpack.c.l.b16 %v256
      %v517 = vunpack.c.l.b16 %v257
      %v518 = vunpack.c.l.b16 %v258
      %v519 = vunpack.c.l.b16 %v259
      %v520 = vunpack.c.l.b16 %v260
      %v521 = vunpack.c.l.b16 %v261
      %v522 = vunpack.c.l.b16 %v262
      %v523 = vunpack.c.l.b16 %v263
      %v524 = vunpack.c.l.b16 %v264
      %v525 = vunpack.c.l.b16 %v265
      %v526 = vunpack.c.l.b16 %v266
      %v527 = vunpack.c.l.b16 %v267
      %v528 = vunpack.c.l.b16 %v268
      %v529 = vunpack.c.l.b16 %v269
      %v530 = vunpack.c.l.b16 %v270
      %v531 = vunpack.c.l.b16 %v271
      %v532 = vunpack.c.l.b16 %v272
      %v533 = vunpack.c.l.b16 %v273
      %v534 = vunpack.c.l.b16 %v274
      %v535 = vunpack.c.l.b16 %v275
      %v536 = vunpack.c.l.b16 %v276
      %v537 = vunpack.c.l.b16 %v277
      %v538 = vunpack.c.l.b16 %v278
      %v539 = vunpack.c.l.b16 %v279
      %v540 = vunpack.c.l.b16 %v280
      %v541 = vunpack.c.l.b16 %v281
      %v542 = vunpack.c.l.b16 %v282
      %v543 = vunpack.c.l.b16 %v283
      %v544 = vunpack.c.l.b16 %v284
      %v545 = vunpack.c.l.b16 %v285
      %v546 = vunpack.c.l.b16 %v286
      %v547 = vunpack.c.l.b16 %v287
      %v548 = vunpack.c.l.b16 %v288
      %v549 = vunpack.c.l.b16 %v289
      %v550 = vunpack.c.l.b16 %v290
      %v551 = vunpack.c.l.b16 %v291
      %v552 = vunpack.c.l.b16 %v292
      %v553 = vunpack.c.l.b16 %v293
      %v554 = vunpack.c.l.b16 %v294
      %v555 = vunpack.c.l.b16 %v295
      %v556 = vunpack.c.l.b16 %v296
      %v557 = vunpack.c.l.b16 %v297
      %v558 = vunpack.c.l.b16 %v298
      %v559 = vunpack.c.l.b16 %v299
      %v560 = vunpack.c.l.b16 %v300
      %v561 = vunpack.c.l.b16 %v301
      %v562 = vunpack.c.l.b16 %v302
      %v563 = vunpack.c.l.b16 %v303
      %v564 = vunpack.c.l.b16 %v304
      %v565 = vunpack.c.l.b16 %v305
      %v566 = vunpack.c.l.b16 %v306
      %v567 = vunpack.c.l.b16 %v307
      %v568 = vunpack.c.l.b16 %v308
      %v569 = vunpack.c.l.b16 %v309
      %v570 = vunpack.c.l.b16 %v310
      %v571 = vunpack.c.l.b16 %v311
      %v572 = vunpack.c.l.b16 %v312
      %v573 = vunpack.c.l.b16 %v313
      %v574 = vunpack.c.l.b16 %v314
      %v575 = vunpack.c.l.b16 %v315
      %v576 = vunpack.c.l.b16 %v316
      %v577 = vunpack.c.l.b16 %v317
      %v578 = vunpack.c.l.b16 %v318
      %v579 = vunpack.c.l.b16 %v319
      %v580 = vunpack.c.l.b16 %v320
      %v581 = vunpack.c.l.b16 %v321
      %v582 = vunpack.c.l.b16 %v322
      %v583 = vunpack.c.l.b16 %v323
      %v584 = vunpack.c.l.b16 %v324
      %v585 = vunpack.c.l.b16 %v325
      %v586 = vunpack.c.l.b16 %v326
      %v587 = vunpack.c.l.b16 %v327
      %v588 = vunpack.c.l.b16 %v328
      %v589 = vunpack.c.l.b16 %v329
      %v590 = vunpack.c.l.b16 %v330
      %v591 = vunpack.c.l.b16 %v331
      %v592 = vpack.c.b16 %v465, %v464
      %v593 = vpack.c.b16 %v467, %v466
      %v594 = vpack.c.b16 %v469, %v468
      %v595 = vpack.c.b16 %v471, %v470
      %v596 = vpack.c.b16 %v473, %v472
      %v597 = vpack.c.b16 %v475, %v474
      %v598 = vpack.c.b16 %v477, %v476
      %v599 = vpack.c.b16 %v479, %v478
      %v600 = vpack.c.b16 %v481, %v480
      %v601 = vpack.c.b16 %v483, %v482
      %v602 = vpack.c.b16 %v485, %v484
      %v603 = vpack.c.b16 %v487, %v486
      %v604 = vpack.c.b16 %v489, %v488
      %v605 = vpack.c.b16 %v491, %v490
      %v606 = vpack.c.b16 %v493, %v492
      %v607 = vpack.c.b16 %v495, %v494
      %v608 = vpack.c.b16 %v497, %v496
      %v609 = vpack.c.b16 %v499, %v498
      %v610 = vpack.c.b16 %v501, %v500
      %v611 = vpack.c.b16 %v503, %v502
      %v612 = vpack.c.b16 %v505, %v504
      %v613 = vpack.c.b16 %v507, %v506
      %v614 = vpack.c.b16 %v509, %v508
      %v615 = vpack.c.b16 %v511, %v510
      %v616 = vpack.c.b16 %v513, %v512
      %v617 = vpack.c.b16 %v515, %v514
      %v618 = vpack.c.b16 %v517, %v516
      %v619 = vpack.c.b16 %v519, %v518
      %v620 = vpack.c.b16 %v521, %v520
      %v621 = vpack.c.b16 %v523, %v522
      %v622 = vpack.c.b16 %v525, %v524
      %v623 = vpack.c.b16 %v527, %v526
      %v624 = vpack.c.b16 %v529, %v528
      %v625 = vpack.c.b16 %v531, %v530
      %v626 = vpack.c.b16 %v533, %v532
      %v627 = vpack.c.b16 %v535, %v534
      %v628 = vpack.c.b16 %v537, %v536
      %v629 = vpack.c.b16 %v539, %v538
      %v630 = vpack.c.b16 %v541, %v540
      %v631 = vpack.c.b16 %v543, %v542
      %v632 = vpack.c.b16 %v545, %v544
      %v633 = vpack.c.b16 %v547, %v546
      %v634 = vpack.c.b16 %v549, %v548
      %v635 = vpack.c.b16 %v551, %v550
      %v636 = vpack.c.b16 %v553, %v552
      %v637 = vpack.c.b16 %v555, %v554
      %v638 = vpack.c.b16 %v557, %v556
      %v639 = vpack.c.b16 %v559, %v558
      %v640 = vpack.c.b16 %v561, %v560
      %v641 = vpack.c.b16 %v563, %v562
      %v642 = vpack.c.b16 %v565, %v564
      %v643 = vpack.c.b16 %v567, %v566
      %v644 = vpack.c.b16 %v569, %v568
      %v645 = vpack.c.b16 %v571, %v570
      %v646 = vpack.c.b16 %v573, %v572
      %v647 = vpack.c.b16 %v575, %v574
      %v648 = vpack.c.b16 %v577, %v576
      %v649 = vpack.c.b16 %v579, %v578
      %v650 = vpack.c.b16 %v581, %v580
      %v651 = vpack.c.b16 %v583, %v582
      %v652 = vpack.c.b16 %v585, %v584
      %v653 = vpack.c.b16 %v587, %v586
      %v654 = vpack.c.b16 %v589, %v588
      %v655 = vpack.c.b16 %v591, %v590
      %v660 = vunpack.c.l.b16 %v332
      %v661 = vunpack.c.l.b16 %v333
      %v662 = vunpack.c.l.b16 %v334
      %v663 = vunpack.c.l.b16 %v335
      %v664 = vpack.c.b16 %v661, %v660
      %v665 = vpack.c.b16 %v663, %v662
      %vm668 = vcmask 261120
      %v670 = vsel %vm668, %v592, 0
      %v673 = vsel %vm668, %v593, 0
      %v676 = vsel %vm668, %v594, 0
      %v679 = vsel %vm668, %v595, 0
      %v682 = vsel %vm668, %v596, 0
      %v685 = vsel %vm668, %v597, 0
      %v688 = vsel %vm668, %v598, 0
      %v691 = vsel %vm668, %v599, 0
      %v694 = vsel %vm668, %v600, 0
      %v697 = vsel %vm668, %v601, 0
      %v700 = vsel %vm668, %v602, 0
      %v703 = vsel %vm668, %v603, 0
      %v706 = vsel %vm668, %v604, 0
      %v709 = vsel %vm668, %v605, 0
      %v712 = vsel %vm668, %v606, 0
      %v715 = vsel %vm668, %v607, 0
      %v718 = vsel %vm668, %v608, 0
      %v721 = vsel %vm668, %v609, 0
      %v724 = vsel %vm668, %v610, 0
      %v727 = vsel %vm668, %v611, 0
      %v730 = vsel %vm668, %v612, 0
      %v733 = vsel %vm668, %v613, 0
      %v736 = vsel %vm668, %v614, 0
      %v739 = vsel %vm668, %v615, 0
      %v742 = vsel %vm668, %v616, 0
      %v745 = vsel %vm668, %v617, 0
      %v748 = vsel %vm668, %v618, 0
      %v751 = vsel %vm668, %v619, 0
      %v754 = vsel %vm668, %v620, 0
      %v757 = vsel %vm668, %v621, 0
      %v760 = vsel %vm668, %v622, 0
      %v763 = vsel %vm668, %v623, 0
      %v766 = vsel %vm668, %v624, 0
      %v769 = vsel %vm668, %v625, 0
      %v772 = vsel %vm668, %v626, 0
      %v775 = vsel %vm668, %v627, 0
      %v778 = vsel %vm668, %v628, 0
      %v781 = vsel %vm668, %v629, 0
      %v784 = vsel %vm668, %v630, 0
      %v787 = vsel %vm668, %v631, 0
      %v790 = vsel %vm668, %v632, 0
      %v793 = vsel %vm668, %v633, 0
      %v796 = vsel %vm668, %v634, 0
      %v799 = vsel %vm668, %v635, 0
      %v802 = vsel %vm668, %v636, 0
      %v805 = vsel %vm668, %v637, 0
      %v808 = vsel %vm668, %v638, 0
      %v811 = vsel %vm668, %v639, 0
      %v814 = vsel %vm668, %v640, 0
      %v817 = vsel %vm668, %v641, 0
      %v820 = vsel %vm668, %v642, 0
      %v823 = vsel %vm668, %v643, 0
      %v826 = vsel %vm668, %v644, 0
      %v829 = vsel %vm668, %v645, 0
      %v832 = vsel %vm668, %v646, 0
      %v835 = vsel %vm668, %v647, 0
      %v838 = vsel %vm668, %v648, 0
      %v841 = vsel %vm668, %v649, 0
      %v844 = vsel %vm668, %v650, 0
      %v847 = vsel %vm668, %v651, 0
      %v850 = vsel %vm668, %v652, 0
      %v853 = vsel %vm668, %v653, 0
      %v856 = vsel %vm668, %v654, 0
      %v859 = vsel %vm668, %v655, 0
      %861 = vmatprep.subr.bf16.mxu0 0
      %862 = vmatpush1.bf16.msra.mxu0 0
      %863 = vmatprep.subr.bf16.mxu0 0
      %864 = vmatpush1.bf16.msra.mxu0 0
      %865 = vmatprep.subr.bf16.mxu0 0
      %866 = vmatpush1.bf16.msra.mxu0 0
      %867 = vmatprep.subr.bf16.mxu0 0
      %868 = vmatpush1.bf16.msra.mxu0 0
      %869 = vmatprep.subr.bf16.mxu0 0
      %870 = vmatpush1.bf16.msra.mxu0 0
      %871 = vmatprep.subr.bf16.mxu0 0
      %872 = vmatpush1.bf16.msra.mxu0 0
      %873 = vmatprep.subr.bf16.mxu0 0
      %874 = vmatpush1.bf16.msra.mxu0 %v665
      %875 = vmatprep.subr.bf16.mxu0 0
      %876 = vmatpush1.bf16.msra.mxu0 %v664
      %877 = vmatprep.subr.bf16.mxu0 0
      %878 = vmatpush2.bf16.msra.mxu0 0
      %879 = vmatprep.subr.bf16.mxu0 0
      %880 = vmatpush2.bf16.msra.mxu0 0
      %881 = vmatprep.subr.bf16.mxu0 0
      %882 = vmatpush2.bf16.msra.mxu0 0
      %883 = vmatprep.subr.bf16.mxu0 0
      %884 = vmatpush2.bf16.msra.mxu0 0
      %885 = vmatprep.subr.bf16.mxu0 0
      %886 = vmatpush2.bf16.msra.mxu0 0
      %887 = vmatprep.subr.bf16.mxu0 0
      %888 = vmatpush2.bf16.msra.mxu0 0
      %889 = vmatprep.subr.bf16.mxu0 0
      %890 = vmatpush2.bf16.msra.mxu0 0
      %891 = vmatprep.subr.bf16.mxu0 0
      %892 = vmatpush2.bf16.msra.mxu0 0
      %893 = vmatprep.mubr.bf16.mxu0 0
      %894 = vmatmul.mubr.bf16.gmra.mxu0 %v670
      %v895 = vpop.f32.mrf.mxu0
      %v896 = vadd.f32 0.0, %v895
      %v897 = vpop.f32.mrf.mxu0
      %v898 = vpop.f32.mrf.mxu0
      %v899 = vadd.f32 0.0, %v898
      %v900 = vpop.f32.mrf.mxu0
      %901 = vmatprep.mubr.bf16.mxu0 0
      %902 = vmatmul.mubr.bf16.gmra.mxu0 %v673
      %v903 = vpop.f32.mrf.mxu0
      %v904 = vadd.f32 0.0, %v903
      %v905 = vpop.f32.mrf.mxu0
      %v906 = vpop.f32.mrf.mxu0
      %v907 = vadd.f32 0.0, %v906
      %v908 = vpop.f32.mrf.mxu0
      %909 = vmatprep.mubr.bf16.mxu0 0
      %910 = vmatmul.mubr.bf16.gmra.mxu0 %v676
      %v911 = vpop.f32.mrf.mxu0
      %v912 = vadd.f32 0.0, %v911
      %v913 = vpop.f32.mrf.mxu0
      %v914 = vpop.f32.mrf.mxu0
      %v915 = vadd.f32 0.0, %v914
      %v916 = vpop.f32.mrf.mxu0
      %917 = vmatprep.mubr.bf16.mxu0 0
      %918 = vmatmul.mubr.bf16.gmra.mxu0 %v679
      %v919 = vpop.f32.mrf.mxu0
      %v920 = vadd.f32 0.0, %v919
      %v921 = vpop.f32.mrf.mxu0
      %v922 = vpop.f32.mrf.mxu0
      %v923 = vadd.f32 0.0, %v922
      %v924 = vpop.f32.mrf.mxu0
      %925 = vmatprep.mubr.bf16.mxu0 0
      %926 = vmatmul.mubr.bf16.gmra.mxu0 %v682
      %v927 = vpop.f32.mrf.mxu0
      %v928 = vadd.f32 0.0, %v927
      %v929 = vpop.f32.mrf.mxu0
      %v930 = vpop.f32.mrf.mxu0
      %v931 = vadd.f32 0.0, %v930
      %v932 = vpop.f32.mrf.mxu0
      %933 = vmatprep.mubr.bf16.mxu0 0
      %934 = vmatmul.mubr.bf16.gmra.mxu0 %v685
      %v935 = vpop.f32.mrf.mxu0
      %v936 = vadd.f32 0.0, %v935
      %v937 = vpop.f32.mrf.mxu0
      %v938 = vpop.f32.mrf.mxu0
      %v939 = vadd.f32 0.0, %v938
      %v940 = vpop.f32.mrf.mxu0
      %941 = vmatprep.mubr.bf16.mxu0 0
      %942 = vmatmul.mubr.bf16.gmra.mxu0 %v688
      %v943 = vpop.f32.mrf.mxu0
      %v944 = vadd.f32 0.0, %v943
      %v945 = vpop.f32.mrf.mxu0
      %v946 = vpop.f32.mrf.mxu0
      %v947 = vadd.f32 0.0, %v946
      %v948 = vpop.f32.mrf.mxu0
      %949 = vmatprep.mubr.bf16.mxu0 0
      %950 = vmatmul.mubr.bf16.gmra.mxu0 %v691
      %v951 = vpop.f32.mrf.mxu0
      %v952 = vadd.f32 0.0, %v951
      %v953 = vpop.f32.mrf.mxu0
      %v954 = vpop.f32.mrf.mxu0
      %v955 = vadd.f32 0.0, %v954
      %v956 = vpop.f32.mrf.mxu0
      %957 = vmatprep.mubr.bf16.mxu0 0
      %958 = vmatmul.mubr.bf16.gmra.mxu0 %v694
      %v959 = vpop.f32.mrf.mxu0
      %v960 = vadd.f32 0.0, %v959
      %v961 = vpop.f32.mrf.mxu0
      %v962 = vpop.f32.mrf.mxu0
      %v963 = vadd.f32 0.0, %v962
      %v964 = vpop.f32.mrf.mxu0
      %965 = vmatprep.mubr.bf16.mxu0 0
      %966 = vmatmul.mubr.bf16.gmra.mxu0 %v697
      %v967 = vpop.f32.mrf.mxu0
      %v968 = vadd.f32 0.0, %v967
      %v969 = vpop.f32.mrf.mxu0
      %v970 = vpop.f32.mrf.mxu0
      %v971 = vadd.f32 0.0, %v970
      %v972 = vpop.f32.mrf.mxu0
      %973 = vmatprep.mubr.bf16.mxu0 0
      %974 = vmatmul.mubr.bf16.gmra.mxu0 %v700
      %v975 = vpop.f32.mrf.mxu0
      %v976 = vadd.f32 0.0, %v975
      %v977 = vpop.f32.mrf.mxu0
      %v978 = vpop.f32.mrf.mxu0
      %v979 = vadd.f32 0.0, %v978
      %v980 = vpop.f32.mrf.mxu0
      %981 = vmatprep.mubr.bf16.mxu0 0
      %982 = vmatmul.mubr.bf16.gmra.mxu0 %v703
      %v983 = vpop.f32.mrf.mxu0
      %v984 = vadd.f32 0.0, %v983
      %v985 = vpop.f32.mrf.mxu0
      %v986 = vpop.f32.mrf.mxu0
      %v987 = vadd.f32 0.0, %v986
      %v988 = vpop.f32.mrf.mxu0
      %989 = vmatprep.mubr.bf16.mxu0 0
      %990 = vmatmul.mubr.bf16.gmra.mxu0 %v706
      %v991 = vpop.f32.mrf.mxu0
      %v992 = vadd.f32 0.0, %v991
      %v993 = vpop.f32.mrf.mxu0
      %v994 = vpop.f32.mrf.mxu0
      %v995 = vadd.f32 0.0, %v994
      %v996 = vpop.f32.mrf.mxu0
      %997 = vmatprep.mubr.bf16.mxu0 0
      %998 = vmatmul.mubr.bf16.gmra.mxu0 %v709
      %v999 = vpop.f32.mrf.mxu0
      %v1000 = vadd.f32 0.0, %v999
      %v1001 = vpop.f32.mrf.mxu0
      %v1002 = vpop.f32.mrf.mxu0
      %v1003 = vadd.f32 0.0, %v1002
      %v1004 = vpop.f32.mrf.mxu0
      %1005 = vmatprep.mubr.bf16.mxu0 0
      %1006 = vmatmul.mubr.bf16.gmra.mxu0 %v712
      %v1007 = vpop.f32.mrf.mxu0
      %v1008 = vadd.f32 0.0, %v1007
      %v1009 = vpop.f32.mrf.mxu0
      %v1010 = vpop.f32.mrf.mxu0
      %v1011 = vadd.f32 0.0, %v1010
      %v1012 = vpop.f32.mrf.mxu0
      %1013 = vmatprep.mubr.bf16.mxu0 0
      %1014 = vmatmul.mubr.bf16.gmra.mxu0 %v715
      %v1015 = vpop.f32.mrf.mxu0
      %v1016 = vadd.f32 0.0, %v1015
      %v1017 = vpop.f32.mrf.mxu0
      %v1018 = vpop.f32.mrf.mxu0
      %v1019 = vadd.f32 0.0, %v1018
      %v1020 = vpop.f32.mrf.mxu0
      %1021 = vmatprep.mubr.bf16.mxu0 0
      %1022 = vmatmul.mubr.bf16.gmra.mxu0 %v718
      %v1023 = vpop.f32.mrf.mxu0
      %v1024 = vadd.f32 0.0, %v1023
      %v1025 = vpop.f32.mrf.mxu0
      %v1026 = vpop.f32.mrf.mxu0
      %v1027 = vadd.f32 0.0, %v1026
      %v1028 = vpop.f32.mrf.mxu0
      %1029 = vmatprep.mubr.bf16.mxu0 0
      %1030 = vmatmul.mubr.bf16.gmra.mxu0 %v721
      %v1031 = vpop.f32.mrf.mxu0
      %v1032 = vadd.f32 0.0, %v1031
      %v1033 = vpop.f32.mrf.mxu0
      %v1034 = vpop.f32.mrf.mxu0
      %v1035 = vadd.f32 0.0, %v1034
      %v1036 = vpop.f32.mrf.mxu0
      %1037 = vmatprep.mubr.bf16.mxu0 0
      %1038 = vmatmul.mubr.bf16.gmra.mxu0 %v724
      %v1039 = vpop.f32.mrf.mxu0
      %v1040 = vadd.f32 0.0, %v1039
      %v1041 = vpop.f32.mrf.mxu0
      %v1042 = vpop.f32.mrf.mxu0
      %v1043 = vadd.f32 0.0, %v1042
      %v1044 = vpop.f32.mrf.mxu0
      %1045 = vmatprep.mubr.bf16.mxu0 0
      %1046 = vmatmul.mubr.bf16.gmra.mxu0 %v727
      %v1047 = vpop.f32.mrf.mxu0
      %v1048 = vadd.f32 0.0, %v1047
      %v1049 = vpop.f32.mrf.mxu0
      %v1050 = vpop.f32.mrf.mxu0
      %v1051 = vadd.f32 0.0, %v1050
      %v1052 = vpop.f32.mrf.mxu0
      %1053 = vmatprep.mubr.bf16.mxu0 0
      %1054 = vmatmul.mubr.bf16.gmra.mxu0 %v730
      %v1055 = vpop.f32.mrf.mxu0
      %v1056 = vadd.f32 0.0, %v1055
      %v1057 = vpop.f32.mrf.mxu0
      %v1058 = vpop.f32.mrf.mxu0
      %v1059 = vadd.f32 0.0, %v1058
      %v1060 = vpop.f32.mrf.mxu0
      %1061 = vmatprep.mubr.bf16.mxu0 0
      %1062 = vmatmul.mubr.bf16.gmra.mxu0 %v733
      %v1063 = vpop.f32.mrf.mxu0
      %v1064 = vadd.f32 0.0, %v1063
      %v1065 = vpop.f32.mrf.mxu0
      %v1066 = vpop.f32.mrf.mxu0
      %v1067 = vadd.f32 0.0, %v1066
      %v1068 = vpop.f32.mrf.mxu0
      %1069 = vmatprep.mubr.bf16.mxu0 0
      %1070 = vmatmul.mubr.bf16.gmra.mxu0 %v736
      %v1071 = vpop.f32.mrf.mxu0
      %v1072 = vadd.f32 0.0, %v1071
      %v1073 = vpop.f32.mrf.mxu0
      %v1074 = vpop.f32.mrf.mxu0
      %v1075 = vadd.f32 0.0, %v1074
      %v1076 = vpop.f32.mrf.mxu0
      %1077 = vmatprep.mubr.bf16.mxu0 0
      %1078 = vmatmul.mubr.bf16.gmra.mxu0 %v739
      %v1079 = vpop.f32.mrf.mxu0
      %v1080 = vadd.f32 0.0, %v1079
      %v1081 = vpop.f32.mrf.mxu0
      %v1082 = vpop.f32.mrf.mxu0
      %v1083 = vadd.f32 0.0, %v1082
      %v1084 = vpop.f32.mrf.mxu0
      %1085 = vmatprep.mubr.bf16.mxu0 0
      %1086 = vmatmul.mubr.bf16.gmra.mxu0 %v742
      %v1087 = vpop.f32.mrf.mxu0
      %v1088 = vadd.f32 0.0, %v1087
      %v1089 = vpop.f32.mrf.mxu0
      %v1090 = vpop.f32.mrf.mxu0
      %v1091 = vadd.f32 0.0, %v1090
      %v1092 = vpop.f32.mrf.mxu0
      %1093 = vmatprep.mubr.bf16.mxu0 0
      %1094 = vmatmul.mubr.bf16.gmra.mxu0 %v745
      %v1095 = vpop.f32.mrf.mxu0
      %v1096 = vadd.f32 0.0, %v1095
      %v1097 = vpop.f32.mrf.mxu0
      %v1098 = vpop.f32.mrf.mxu0
      %v1099 = vadd.f32 0.0, %v1098
      %v1100 = vpop.f32.mrf.mxu0
      %1101 = vmatprep.mubr.bf16.mxu0 0
      %1102 = vmatmul.mubr.bf16.gmra.mxu0 %v748
      %v1103 = vpop.f32.mrf.mxu0
      %v1104 = vadd.f32 0.0, %v1103
      %v1105 = vpop.f32.mrf.mxu0
      %v1106 = vpop.f32.mrf.mxu0
      %v1107 = vadd.f32 0.0, %v1106
      %v1108 = vpop.f32.mrf.mxu0
      %1109 = vmatprep.mubr.bf16.mxu0 0
      %1110 = vmatmul.mubr.bf16.gmra.mxu0 %v751
      %v1111 = vpop.f32.mrf.mxu0
      %v1112 = vadd.f32 0.0, %v1111
      %v1113 = vpop.f32.mrf.mxu0
      %v1114 = vpop.f32.mrf.mxu0
      %v1115 = vadd.f32 0.0, %v1114
      %v1116 = vpop.f32.mrf.mxu0
      %1117 = vmatprep.mubr.bf16.mxu0 0
      %1118 = vmatmul.mubr.bf16.gmra.mxu0 %v754
      %v1119 = vpop.f32.mrf.mxu0
      %v1120 = vadd.f32 0.0, %v1119
      %v1121 = vpop.f32.mrf.mxu0
      %v1122 = vpop.f32.mrf.mxu0
      %v1123 = vadd.f32 0.0, %v1122
      %v1124 = vpop.f32.mrf.mxu0
      %1125 = vmatprep.mubr.bf16.mxu0 0
      %1126 = vmatmul.mubr.bf16.gmra.mxu0 %v757
      %v1127 = vpop.f32.mrf.mxu0
      %v1128 = vadd.f32 0.0, %v1127
      %v1129 = vpop.f32.mrf.mxu0
      %v1130 = vpop.f32.mrf.mxu0
      %v1131 = vadd.f32 0.0, %v1130
      %v1132 = vpop.f32.mrf.mxu0
      %1133 = vmatprep.mubr.bf16.mxu0 0
      %1134 = vmatmul.mubr.bf16.gmra.mxu0 %v760
      %v1135 = vpop.f32.mrf.mxu0
      %v1136 = vadd.f32 0.0, %v1135
      %v1137 = vpop.f32.mrf.mxu0
      %v1138 = vpop.f32.mrf.mxu0
      %v1139 = vadd.f32 0.0, %v1138
      %v1140 = vpop.f32.mrf.mxu0
      %1141 = vmatprep.mubr.bf16.mxu0 0
      %1142 = vmatmul.mubr.bf16.gmra.mxu0 %v763
      %v1143 = vpop.f32.mrf.mxu0
      %v1144 = vadd.f32 0.0, %v1143
      %v1145 = vpop.f32.mrf.mxu0
      %v1146 = vpop.f32.mrf.mxu0
      %v1147 = vadd.f32 0.0, %v1146
      %v1148 = vpop.f32.mrf.mxu0
      %1149 = vmatprep.mubr.bf16.mxu0 0
      %1150 = vmatmul.mubr.bf16.gmra.mxu0 %v766
      %v1151 = vpop.f32.mrf.mxu0
      %v1152 = vadd.f32 0.0, %v1151
      %v1153 = vpop.f32.mrf.mxu0
      %v1154 = vpop.f32.mrf.mxu0
      %v1155 = vadd.f32 0.0, %v1154
      %v1156 = vpop.f32.mrf.mxu0
      %1157 = vmatprep.mubr.bf16.mxu0 0
      %1158 = vmatmul.mubr.bf16.gmra.mxu0 %v769
      %v1159 = vpop.f32.mrf.mxu0
      %v1160 = vadd.f32 0.0, %v1159
      %v1161 = vpop.f32.mrf.mxu0
      %v1162 = vpop.f32.mrf.mxu0
      %v1163 = vadd.f32 0.0, %v1162
      %v1164 = vpop.f32.mrf.mxu0
      %1165 = vmatprep.mubr.bf16.mxu0 0
      %1166 = vmatmul.mubr.bf16.gmra.mxu0 %v772
      %v1167 = vpop.f32.mrf.mxu0
      %v1168 = vadd.f32 0.0, %v1167
      %v1169 = vpop.f32.mrf.mxu0
      %v1170 = vpop.f32.mrf.mxu0
      %v1171 = vadd.f32 0.0, %v1170
      %v1172 = vpop.f32.mrf.mxu0
      %1173 = vmatprep.mubr.bf16.mxu0 0
      %1174 = vmatmul.mubr.bf16.gmra.mxu0 %v775
      %v1175 = vpop.f32.mrf.mxu0
      %v1176 = vadd.f32 0.0, %v1175
      %v1177 = vpop.f32.mrf.mxu0
      %v1178 = vpop.f32.mrf.mxu0
      %v1179 = vadd.f32 0.0, %v1178
      %v1180 = vpop.f32.mrf.mxu0
      %1181 = vmatprep.mubr.bf16.mxu0 0
      %1182 = vmatmul.mubr.bf16.gmra.mxu0 %v778
      %v1183 = vpop.f32.mrf.mxu0
      %v1184 = vadd.f32 0.0, %v1183
      %v1185 = vpop.f32.mrf.mxu0
      %v1186 = vpop.f32.mrf.mxu0
      %v1187 = vadd.f32 0.0, %v1186
      %v1188 = vpop.f32.mrf.mxu0
      %1189 = vmatprep.mubr.bf16.mxu0 0
      %1190 = vmatmul.mubr.bf16.gmra.mxu0 %v781
      %v1191 = vpop.f32.mrf.mxu0
      %v1192 = vadd.f32 0.0, %v1191
      %v1193 = vpop.f32.mrf.mxu0
      %v1194 = vpop.f32.mrf.mxu0
      %v1195 = vadd.f32 0.0, %v1194
      %v1196 = vpop.f32.mrf.mxu0
      %1197 = vmatprep.mubr.bf16.mxu0 0
      %1198 = vmatmul.mubr.bf16.gmra.mxu0 %v784
      %v1199 = vpop.f32.mrf.mxu0
      %v1200 = vadd.f32 0.0, %v1199
      %v1201 = vpop.f32.mrf.mxu0
      %v1202 = vpop.f32.mrf.mxu0
      %v1203 = vadd.f32 0.0, %v1202
      %v1204 = vpop.f32.mrf.mxu0
      %1205 = vmatprep.mubr.bf16.mxu0 0
      %1206 = vmatmul.mubr.bf16.gmra.mxu0 %v787
      %v1207 = vpop.f32.mrf.mxu0
      %v1208 = vadd.f32 0.0, %v1207
      %v1209 = vpop.f32.mrf.mxu0
      %v1210 = vpop.f32.mrf.mxu0
      %v1211 = vadd.f32 0.0, %v1210
      %v1212 = vpop.f32.mrf.mxu0
      %1213 = vmatprep.mubr.bf16.mxu0 0
      %1214 = vmatmul.mubr.bf16.gmra.mxu0 %v790
      %v1215 = vpop.f32.mrf.mxu0
      %v1216 = vadd.f32 0.0, %v1215
      %v1217 = vpop.f32.mrf.mxu0
      %v1218 = vpop.f32.mrf.mxu0
      %v1219 = vadd.f32 0.0, %v1218
      %v1220 = vpop.f32.mrf.mxu0
      %1221 = vmatprep.mubr.bf16.mxu0 0
      %1222 = vmatmul.mubr.bf16.gmra.mxu0 %v793
      %v1223 = vpop.f32.mrf.mxu0
      %v1224 = vadd.f32 0.0, %v1223
      %v1225 = vpop.f32.mrf.mxu0
      %v1226 = vpop.f32.mrf.mxu0
      %v1227 = vadd.f32 0.0, %v1226
      %v1228 = vpop.f32.mrf.mxu0
      %1229 = vmatprep.mubr.bf16.mxu0 0
      %1230 = vmatmul.mubr.bf16.gmra.mxu0 %v796
      %v1231 = vpop.f32.mrf.mxu0
      %v1232 = vadd.f32 0.0, %v1231
      %v1233 = vpop.f32.mrf.mxu0
      %v1234 = vpop.f32.mrf.mxu0
      %v1235 = vadd.f32 0.0, %v1234
      %v1236 = vpop.f32.mrf.mxu0
      %1237 = vmatprep.mubr.bf16.mxu0 0
      %1238 = vmatmul.mubr.bf16.gmra.mxu0 %v799
      %v1239 = vpop.f32.mrf.mxu0
      %v1240 = vadd.f32 0.0, %v1239
      %v1241 = vpop.f32.mrf.mxu0
      %v1242 = vpop.f32.mrf.mxu0
      %v1243 = vadd.f32 0.0, %v1242
      %v1244 = vpop.f32.mrf.mxu0
      %1245 = vmatprep.mubr.bf16.mxu0 0
      %1246 = vmatmul.mubr.bf16.gmra.mxu0 %v802
      %v1247 = vpop.f32.mrf.mxu0
      %v1248 = vadd.f32 0.0, %v1247
      %v1249 = vpop.f32.mrf.mxu0
      %v1250 = vpop.f32.mrf.mxu0
      %v1251 = vadd.f32 0.0, %v1250
      %v1252 = vpop.f32.mrf.mxu0
      %1253 = vmatprep.mubr.bf16.mxu0 0
      %1254 = vmatmul.mubr.bf16.gmra.mxu0 %v805
      %v1255 = vpop.f32.mrf.mxu0
      %v1256 = vadd.f32 0.0, %v1255
      %v1257 = vpop.f32.mrf.mxu0
      %v1258 = vpop.f32.mrf.mxu0
      %v1259 = vadd.f32 0.0, %v1258
      %v1260 = vpop.f32.mrf.mxu0
      %1261 = vmatprep.mubr.bf16.mxu0 0
      %1262 = vmatmul.mubr.bf16.gmra.mxu0 %v808
      %v1263 = vpop.f32.mrf.mxu0
      %v1264 = vadd.f32 0.0, %v1263
      %v1265 = vpop.f32.mrf.mxu0
      %v1266 = vpop.f32.mrf.mxu0
      %v1267 = vadd.f32 0.0, %v1266
      %v1268 = vpop.f32.mrf.mxu0
      %1269 = vmatprep.mubr.bf16.mxu0 0
      %1270 = vmatmul.mubr.bf16.gmra.mxu0 %v811
      %v1271 = vpop.f32.mrf.mxu0
      %v1272 = vadd.f32 0.0, %v1271
      %v1273 = vpop.f32.mrf.mxu0
      %v1274 = vpop.f32.mrf.mxu0
      %v1275 = vadd.f32 0.0, %v1274
      %v1276 = vpop.f32.mrf.mxu0
      %1277 = vmatprep.mubr.bf16.mxu0 0
      %1278 = vmatmul.mubr.bf16.gmra.mxu0 %v814
      %v1279 = vpop.f32.mrf.mxu0
      %v1280 = vadd.f32 0.0, %v1279
      %v1281 = vpop.f32.mrf.mxu0
      %v1282 = vpop.f32.mrf.mxu0
      %v1283 = vadd.f32 0.0, %v1282
      %v1284 = vpop.f32.mrf.mxu0
      %1285 = vmatprep.mubr.bf16.mxu0 0
      %1286 = vmatmul.mubr.bf16.gmra.mxu0 %v817
      %v1287 = vpop.f32.mrf.mxu0
      %v1288 = vadd.f32 0.0, %v1287
      %v1289 = vpop.f32.mrf.mxu0
      %v1290 = vpop.f32.mrf.mxu0
      %v1291 = vadd.f32 0.0, %v1290
      %v1292 = vpop.f32.mrf.mxu0
      %1293 = vmatprep.mubr.bf16.mxu0 0
      %1294 = vmatmul.mubr.bf16.gmra.mxu0 %v820
      %v1295 = vpop.f32.mrf.mxu0
      %v1296 = vadd.f32 0.0, %v1295
      %v1297 = vpop.f32.mrf.mxu0
      %v1298 = vpop.f32.mrf.mxu0
      %v1299 = vadd.f32 0.0, %v1298
      %v1300 = vpop.f32.mrf.mxu0
      %1301 = vmatprep.mubr.bf16.mxu0 0
      %1302 = vmatmul.mubr.bf16.gmra.mxu0 %v823
      %v1303 = vpop.f32.mrf.mxu0
      %v1304 = vadd.f32 0.0, %v1303
      %v1305 = vpop.f32.mrf.mxu0
      %v1306 = vpop.f32.mrf.mxu0
      %v1307 = vadd.f32 0.0, %v1306
      %v1308 = vpop.f32.mrf.mxu0
      %1309 = vmatprep.mubr.bf16.mxu0 0
      %1310 = vmatmul.mubr.bf16.gmra.mxu0 %v826
      %v1311 = vpop.f32.mrf.mxu0
      %v1312 = vadd.f32 0.0, %v1311
      %v1313 = vpop.f32.mrf.mxu0
      %v1314 = vpop.f32.mrf.mxu0
      %v1315 = vadd.f32 0.0, %v1314
      %v1316 = vpop.f32.mrf.mxu0
      %1317 = vmatprep.mubr.bf16.mxu0 0
      %1318 = vmatmul.mubr.bf16.gmra.mxu0 %v829
      %v1319 = vpop.f32.mrf.mxu0
      %v1320 = vadd.f32 0.0, %v1319
      %v1321 = vpop.f32.mrf.mxu0
      %v1322 = vpop.f32.mrf.mxu0
      %v1323 = vadd.f32 0.0, %v1322
      %v1324 = vpop.f32.mrf.mxu0
      %1325 = vmatprep.mubr.bf16.mxu0 0
      %1326 = vmatmul.mubr.bf16.gmra.mxu0 %v832
      %v1327 = vpop.f32.mrf.mxu0
      %v1328 = vadd.f32 0.0, %v1327
      %v1329 = vpop.f32.mrf.mxu0
      %v1330 = vpop.f32.mrf.mxu0
      %v1331 = vadd.f32 0.0, %v1330
      %v1332 = vpop.f32.mrf.mxu0
      %1333 = vmatprep.mubr.bf16.mxu0 0
      %1334 = vmatmul.mubr.bf16.gmra.mxu0 %v835
      %v1335 = vpop.f32.mrf.mxu0
      %v1336 = vadd.f32 0.0, %v1335
      %v1337 = vpop.f32.mrf.mxu0
      %v1338 = vpop.f32.mrf.mxu0
      %v1339 = vadd.f32 0.0, %v1338
      %v1340 = vpop.f32.mrf.mxu0
      %1341 = vmatprep.mubr.bf16.mxu0 0
      %1342 = vmatmul.mubr.bf16.gmra.mxu0 %v838
      %v1343 = vpop.f32.mrf.mxu0
      %v1344 = vadd.f32 0.0, %v1343
      %v1345 = vpop.f32.mrf.mxu0
      %v1346 = vpop.f32.mrf.mxu0
      %v1347 = vadd.f32 0.0, %v1346
      %v1348 = vpop.f32.mrf.mxu0
      %1349 = vmatprep.mubr.bf16.mxu0 0
      %1350 = vmatmul.mubr.bf16.gmra.mxu0 %v841
      %v1351 = vpop.f32.mrf.mxu0
      %v1352 = vadd.f32 0.0, %v1351
      %v1353 = vpop.f32.mrf.mxu0
      %v1354 = vpop.f32.mrf.mxu0
      %v1355 = vadd.f32 0.0, %v1354
      %v1356 = vpop.f32.mrf.mxu0
      %1357 = vmatprep.mubr.bf16.mxu0 0
      %1358 = vmatmul.mubr.bf16.gmra.mxu0 %v844
      %v1359 = vpop.f32.mrf.mxu0
      %v1360 = vadd.f32 0.0, %v1359
      %v1361 = vpop.f32.mrf.mxu0
      %v1362 = vpop.f32.mrf.mxu0
      %v1363 = vadd.f32 0.0, %v1362
      %v1364 = vpop.f32.mrf.mxu0
      %1365 = vmatprep.mubr.bf16.mxu0 0
      %1366 = vmatmul.mubr.bf16.gmra.mxu0 %v847
      %v1367 = vpop.f32.mrf.mxu0
      %v1368 = vadd.f32 0.0, %v1367
      %v1369 = vpop.f32.mrf.mxu0
      %v1370 = vpop.f32.mrf.mxu0
      %v1371 = vadd.f32 0.0, %v1370
      %v1372 = vpop.f32.mrf.mxu0
      %1373 = vmatprep.mubr.bf16.mxu0 0
      %1374 = vmatmul.mubr.bf16.gmra.mxu0 %v850
      %v1375 = vpop.f32.mrf.mxu0
      %v1376 = vadd.f32 0.0, %v1375
      %v1377 = vpop.f32.mrf.mxu0
      %v1378 = vpop.f32.mrf.mxu0
      %v1379 = vadd.f32 0.0, %v1378
      %v1380 = vpop.f32.mrf.mxu0
      %1381 = vmatprep.mubr.bf16.mxu0 0
      %1382 = vmatmul.mubr.bf16.gmra.mxu0 %v853
      %v1383 = vpop.f32.mrf.mxu0
      %v1384 = vadd.f32 0.0, %v1383
      %v1385 = vpop.f32.mrf.mxu0
      %v1386 = vpop.f32.mrf.mxu0
      %v1387 = vadd.f32 0.0, %v1386
      %v1388 = vpop.f32.mrf.mxu0
      %1389 = vmatprep.mubr.bf16.mxu0 0
      %1390 = vmatmul.mubr.bf16.gmra.mxu0 %v856
      %v1391 = vpop.f32.mrf.mxu0
      %v1392 = vadd.f32 0.0, %v1391
      %v1393 = vpop.f32.mrf.mxu0
      %v1394 = vpop.f32.mrf.mxu0
      %v1395 = vadd.f32 0.0, %v1394
      %v1396 = vpop.f32.mrf.mxu0
      %1397 = vmatprep.mubr.bf16.mxu0 0
      %1398 = vmatmul.mubr.bf16.gmra.mxu0 %v859
      %v1399 = vpop.f32.mrf.mxu0
      %v1400 = vadd.f32 0.0, %v1399
      %v1401 = vpop.f32.mrf.mxu0
      %v1402 = vpop.f32.mrf.mxu0
      %v1403 = vadd.f32 0.0, %v1402
      %v1404 = vpop.f32.mrf.mxu0
      %1405 = vdwg.mxu0
      %v1406 = vtanh.pop %v896
      %v1407 = vtanh.pop %v899
      %v1408 = vtanh.pop %v904
      %v1409 = vtanh.pop %v907
      %v1410 = vtanh.pop %v912
      %v1411 = vtanh.pop %v915
      %v1412 = vtanh.pop %v920
      %v1413 = vtanh.pop %v923
      %v1414 = vtanh.pop %v928
      %v1415 = vtanh.pop %v931
      %v1416 = vtanh.pop %v936
      %v1417 = vtanh.pop %v939
      %v1418 = vtanh.pop %v944
      %v1419 = vtanh.pop %v947
      %v1420 = vtanh.pop %v952
      %v1421 = vtanh.pop %v955
      %v1422 = vtanh.pop %v960
      %v1423 = vtanh.pop %v963
      %v1424 = vtanh.pop %v968
      %v1425 = vtanh.pop %v971
      %v1426 = vtanh.pop %v976
      %v1427 = vtanh.pop %v979
      %v1428 = vtanh.pop %v984
      %v1429 = vtanh.pop %v987
      %v1430 = vtanh.pop %v992
      %v1431 = vtanh.pop %v995
      %v1432 = vtanh.pop %v1000
      %v1433 = vtanh.pop %v1003
      %v1434 = vtanh.pop %v1008
      %v1435 = vtanh.pop %v1011
      %v1436 = vtanh.pop %v1016
      %v1437 = vtanh.pop %v1019
      %v1438 = vtanh.pop %v1024
      %v1439 = vtanh.pop %v1027
      %v1440 = vtanh.pop %v1032
      %v1441 = vtanh.pop %v1035
      %v1442 = vtanh.pop %v1040
      %v1443 = vtanh.pop %v1043
      %v1444 = vtanh.pop %v1048
      %v1445 = vtanh.pop %v1051
      %v1446 = vtanh.pop %v1056
      %v1447 = vtanh.pop %v1059
      %v1448 = vtanh.pop %v1064
      %v1449 = vtanh.pop %v1067
      %v1450 = vtanh.pop %v1072
      %v1451 = vtanh.pop %v1075
      %v1452 = vtanh.pop %v1080
      %v1453 = vtanh.pop %v1083
      %v1454 = vtanh.pop %v1088
      %v1455 = vtanh.pop %v1091
      %v1456 = vtanh.pop %v1096
      %v1457 = vtanh.pop %v1099
      %v1458 = vtanh.pop %v1104
      %v1459 = vtanh.pop %v1107
      %v1460 = vtanh.pop %v1112
      %v1461 = vtanh.pop %v1115
      %v1462 = vtanh.pop %v1120
      %v1463 = vtanh.pop %v1123
      %v1464 = vtanh.pop %v1128
      %v1465 = vtanh.pop %v1131
      %v1466 = vtanh.pop %v1136
      %v1467 = vtanh.pop %v1139
      %v1468 = vtanh.pop %v1144
      %v1469 = vtanh.pop %v1147
      %v1470 = vtanh.pop %v1152
      %v1471 = vtanh.pop %v1155
      %v1472 = vtanh.pop %v1160
      %v1473 = vtanh.pop %v1163
      %v1474 = vtanh.pop %v1168
      %v1475 = vtanh.pop %v1171
      %v1476 = vtanh.pop %v1176
      %v1477 = vtanh.pop %v1179
      %v1478 = vtanh.pop %v1184
      %v1479 = vtanh.pop %v1187
      %v1480 = vtanh.pop %v1192
      %v1481 = vtanh.pop %v1195
      %v1482 = vtanh.pop %v1200
      %v1483 = vtanh.pop %v1203
      %v1484 = vtanh.pop %v1208
      %v1485 = vtanh.pop %v1211
      %v1486 = vtanh.pop %v1216
      %v1487 = vtanh.pop %v1219
      %v1488 = vtanh.pop %v1224
      %v1489 = vtanh.pop %v1227
      %v1490 = vtanh.pop %v1232
      %v1491 = vtanh.pop %v1235
      %v1492 = vtanh.pop %v1240
      %v1493 = vtanh.pop %v1243
      %v1494 = vtanh.pop %v1248
      %v1495 = vtanh.pop %v1251
      %v1496 = vtanh.pop %v1256
      %v1497 = vtanh.pop %v1259
      %v1498 = vtanh.pop %v1264
      %v1499 = vtanh.pop %v1267
      %v1500 = vtanh.pop %v1272
      %v1501 = vtanh.pop %v1275
      %v1502 = vtanh.pop %v1280
      %v1503 = vtanh.pop %v1283
      %v1504 = vtanh.pop %v1288
      %v1505 = vtanh.pop %v1291
      %v1506 = vtanh.pop %v1296
      %v1507 = vtanh.pop %v1299
      %v1508 = vtanh.pop %v1304
      %v1509 = vtanh.pop %v1307
      %v1510 = vtanh.pop %v1312
      %v1511 = vtanh.pop %v1315
      %v1512 = vtanh.pop %v1320
      %v1513 = vtanh.pop %v1323
      %v1514 = vtanh.pop %v1328
      %v1515 = vtanh.pop %v1331
      %v1516 = vtanh.pop %v1336
      %v1517 = vtanh.pop %v1339
      %v1518 = vtanh.pop %v1344
      %v1519 = vtanh.pop %v1347
      %v1520 = vtanh.pop %v1352
      %v1521 = vtanh.pop %v1355
      %v1522 = vtanh.pop %v1360
      %v1523 = vtanh.pop %v1363
      %v1524 = vtanh.pop %v1368
      %v1525 = vtanh.pop %v1371
      %v1526 = vtanh.pop %v1376
      %v1527 = vtanh.pop %v1379
      %v1528 = vtanh.pop %v1384
      %v1529 = vtanh.pop %v1387
      %v1530 = vtanh.pop %v1392
      %v1531 = vtanh.pop %v1395
      %v1532 = vtanh.pop %v1400
      %v1533 = vtanh.pop %v1403
      %v1534 = vpack.c.bf16 %v1407, %v1406
      %v1535 = vpack.c.bf16 %v1409, %v1408
      %v1536 = vpack.c.bf16 %v1411, %v1410
      %v1537 = vpack.c.bf16 %v1413, %v1412
      %v1538 = vpack.c.bf16 %v1415, %v1414
      %v1539 = vpack.c.bf16 %v1417, %v1416
      %v1540 = vpack.c.bf16 %v1419, %v1418
      %v1541 = vpack.c.bf16 %v1421, %v1420
      %v1542 = vpack.c.bf16 %v1423, %v1422
      %v1543 = vpack.c.bf16 %v1425, %v1424
      %v1544 = vpack.c.bf16 %v1427, %v1426
      %v1545 = vpack.c.bf16 %v1429, %v1428
      %v1546 = vpack.c.bf16 %v1431, %v1430
      %v1547 = vpack.c.bf16 %v1433, %v1432
      %v1548 = vpack.c.bf16 %v1435, %v1434
      %v1549 = vpack.c.bf16 %v1437, %v1436
      %v1550 = vpack.c.bf16 %v1439, %v1438
      %v1551 = vpack.c.bf16 %v1441, %v1440
      %v1552 = vpack.c.bf16 %v1443, %v1442
      %v1553 = vpack.c.bf16 %v1445, %v1444
      %v1554 = vpack.c.bf16 %v1447, %v1446
      %v1555 = vpack.c.bf16 %v1449, %v1448
      %v1556 = vpack.c.bf16 %v1451, %v1450
      %v1557 = vpack.c.bf16 %v1453, %v1452
      %v1558 = vpack.c.bf16 %v1455, %v1454
      %v1559 = vpack.c.bf16 %v1457, %v1456
      %v1560 = vpack.c.bf16 %v1459, %v1458
      %v1561 = vpack.c.bf16 %v1461, %v1460
      %v1562 = vpack.c.bf16 %v1463, %v1462
      %v1563 = vpack.c.bf16 %v1465, %v1464
      %v1564 = vpack.c.bf16 %v1467, %v1466
      %v1565 = vpack.c.bf16 %v1469, %v1468
      %v1566 = vpack.c.bf16 %v1471, %v1470
      %v1567 = vpack.c.bf16 %v1473, %v1472
      %v1568 = vpack.c.bf16 %v1475, %v1474
      %v1569 = vpack.c.bf16 %v1477, %v1476
      %v1570 = vpack.c.bf16 %v1479, %v1478
      %v1571 = vpack.c.bf16 %v1481, %v1480
      %v1572 = vpack.c.bf16 %v1483, %v1482
      %v1573 = vpack.c.bf16 %v1485, %v1484
      %v1574 = vpack.c.bf16 %v1487, %v1486
      %v1575 = vpack.c.bf16 %v1489, %v1488
      %v1576 = vpack.c.bf16 %v1491, %v1490
      %v1577 = vpack.c.bf16 %v1493, %v1492
      %v1578 = vpack.c.bf16 %v1495, %v1494
      %v1579 = vpack.c.bf16 %v1497, %v1496
      %v1580 = vpack.c.bf16 %v1499, %v1498
      %v1581 = vpack.c.bf16 %v1501, %v1500
      %v1582 = vpack.c.bf16 %v1503, %v1502
      %v1583 = vpack.c.bf16 %v1505, %v1504
      %v1584 = vpack.c.bf16 %v1507, %v1506
      %v1585 = vpack.c.bf16 %v1509, %v1508
      %v1586 = vpack.c.bf16 %v1511, %v1510
      %v1587 = vpack.c.bf16 %v1513, %v1512
      %v1588 = vpack.c.bf16 %v1515, %v1514
      %v1589 = vpack.c.bf16 %v1517, %v1516
      %v1590 = vpack.c.bf16 %v1519, %v1518
      %v1591 = vpack.c.bf16 %v1521, %v1520
      %v1592 = vpack.c.bf16 %v1523, %v1522
      %v1593 = vpack.c.bf16 %v1525, %v1524
      %v1594 = vpack.c.bf16 %v1527, %v1526
      %v1595 = vpack.c.bf16 %v1529, %v1528
      %v1596 = vpack.c.bf16 %v1531, %v1530
      %v1597 = vpack.c.bf16 %v1533, %v1532
      %v1662 = vunpack.c.l.b16 %v1534
      %v1663 = vunpack.c.h.b16 %v1534
      %v1664 = vunpack.c.l.b16 %v1535
      %v1665 = vunpack.c.h.b16 %v1535
      %v1666 = vunpack.c.l.b16 %v1536
      %v1667 = vunpack.c.h.b16 %v1536
      %v1668 = vunpack.c.l.b16 %v1537
      %v1669 = vunpack.c.h.b16 %v1537
      %v1670 = vunpack.c.l.b16 %v1538
      %v1671 = vunpack.c.h.b16 %v1538
      %v1672 = vunpack.c.l.b16 %v1539
      %v1673 = vunpack.c.h.b16 %v1539
      %v1674 = vunpack.c.l.b16 %v1540
      %v1675 = vunpack.c.h.b16 %v1540
      %v1676 = vunpack.c.l.b16 %v1541
      %v1677 = vunpack.c.h.b16 %v1541
      %v1678 = vunpack.c.l.b16 %v1542
      %v1679 = vunpack.c.h.b16 %v1542
      %v1680 = vunpack.c.l.b16 %v1543
      %v1681 = vunpack.c.h.b16 %v1543
      %v1682 = vunpack.c.l.b16 %v1544
      %v1683 = vunpack.c.h.b16 %v1544
      %v1684 = vunpack.c.l.b16 %v1545
      %v1685 = vunpack.c.h.b16 %v1545
      %v1686 = vunpack.c.l.b16 %v1546
      %v1687 = vunpack.c.h.b16 %v1546
      %v1688 = vunpack.c.l.b16 %v1547
      %v1689 = vunpack.c.h.b16 %v1547
      %v1690 = vunpack.c.l.b16 %v1548
      %v1691 = vunpack.c.h.b16 %v1548
      %v1692 = vunpack.c.l.b16 %v1549
      %v1693 = vunpack.c.h.b16 %v1549
      %v1694 = vunpack.c.l.b16 %v1550
      %v1695 = vunpack.c.h.b16 %v1550
      %v1696 = vunpack.c.l.b16 %v1551
      %v1697 = vunpack.c.h.b16 %v1551
      %v1698 = vunpack.c.l.b16 %v1552
      %v1699 = vunpack.c.h.b16 %v1552
      %v1700 = vunpack.c.l.b16 %v1553
      %v1701 = vunpack.c.h.b16 %v1553
      %v1702 = vunpack.c.l.b16 %v1554
      %v1703 = vunpack.c.h.b16 %v1554
      %v1704 = vunpack.c.l.b16 %v1555
      %v1705 = vunpack.c.h.b16 %v1555
      %v1706 = vunpack.c.l.b16 %v1556
      %v1707 = vunpack.c.h.b16 %v1556
      %v1708 = vunpack.c.l.b16 %v1557
      %v1709 = vunpack.c.h.b16 %v1557
      %v1710 = vunpack.c.l.b16 %v1558
      %v1711 = vunpack.c.h.b16 %v1558
      %v1712 = vunpack.c.l.b16 %v1559
      %v1713 = vunpack.c.h.b16 %v1559
      %v1714 = vunpack.c.l.b16 %v1560
      %v1715 = vunpack.c.h.b16 %v1560
      %v1716 = vunpack.c.l.b16 %v1561
      %v1717 = vunpack.c.h.b16 %v1561
      %v1718 = vunpack.c.l.b16 %v1562
      %v1719 = vunpack.c.h.b16 %v1562
      %v1720 = vunpack.c.l.b16 %v1563
      %v1721 = vunpack.c.h.b16 %v1563
      %v1722 = vunpack.c.l.b16 %v1564
      %v1723 = vunpack.c.h.b16 %v1564
      %v1724 = vunpack.c.l.b16 %v1565
      %v1725 = vunpack.c.h.b16 %v1565
      %v1726 = vunpack.c.l.b16 %v1566
      %v1727 = vunpack.c.h.b16 %v1566
      %v1728 = vunpack.c.l.b16 %v1567
      %v1729 = vunpack.c.h.b16 %v1567
      %v1730 = vunpack.c.l.b16 %v1568
      %v1731 = vunpack.c.h.b16 %v1568
      %v1732 = vunpack.c.l.b16 %v1569
      %v1733 = vunpack.c.h.b16 %v1569
      %v1734 = vunpack.c.l.b16 %v1570
      %v1735 = vunpack.c.h.b16 %v1570
      %v1736 = vunpack.c.l.b16 %v1571
      %v1737 = vunpack.c.h.b16 %v1571
      %v1738 = vunpack.c.l.b16 %v1572
      %v1739 = vunpack.c.h.b16 %v1572
      %v1740 = vunpack.c.l.b16 %v1573
      %v1741 = vunpack.c.h.b16 %v1573
      %v1742 = vunpack.c.l.b16 %v1574
      %v1743 = vunpack.c.h.b16 %v1574
      %v1744 = vunpack.c.l.b16 %v1575
      %v1745 = vunpack.c.h.b16 %v1575
      %v1746 = vunpack.c.l.b16 %v1576
      %v1747 = vunpack.c.h.b16 %v1576
      %v1748 = vunpack.c.l.b16 %v1577
      %v1749 = vunpack.c.h.b16 %v1577
      %v1750 = vunpack.c.l.b16 %v1578
      %v1751 = vunpack.c.h.b16 %v1578
      %v1752 = vunpack.c.l.b16 %v1579
      %v1753 = vunpack.c.h.b16 %v1579
      %v1754 = vunpack.c.l.b16 %v1580
      %v1755 = vunpack.c.h.b16 %v1580
      %v1756 = vunpack.c.l.b16 %v1581
      %v1757 = vunpack.c.h.b16 %v1581
      %v1758 = vunpack.c.l.b16 %v1582
      %v1759 = vunpack.c.h.b16 %v1582
      %v1760 = vunpack.c.l.b16 %v1583
      %v1761 = vunpack.c.h.b16 %v1583
      %v1762 = vunpack.c.l.b16 %v1584
      %v1763 = vunpack.c.h.b16 %v1584
      %v1764 = vunpack.c.l.b16 %v1585
      %v1765 = vunpack.c.h.b16 %v1585
      %v1766 = vunpack.c.l.b16 %v1586
      %v1767 = vunpack.c.h.b16 %v1586
      %v1768 = vunpack.c.l.b16 %v1587
      %v1769 = vunpack.c.h.b16 %v1587
      %v1770 = vunpack.c.l.b16 %v1588
      %v1771 = vunpack.c.h.b16 %v1588
      %v1772 = vunpack.c.l.b16 %v1589
      %v1773 = vunpack.c.h.b16 %v1589
      %v1774 = vunpack.c.l.b16 %v1590
      %v1775 = vunpack.c.h.b16 %v1590
      %v1776 = vunpack.c.l.b16 %v1591
      %v1777 = vunpack.c.h.b16 %v1591
      %v1778 = vunpack.c.l.b16 %v1592
      %v1779 = vunpack.c.h.b16 %v1592
      %v1780 = vunpack.c.l.b16 %v1593
      %v1781 = vunpack.c.h.b16 %v1593
      %v1782 = vunpack.c.l.b16 %v1594
      %v1783 = vunpack.c.h.b16 %v1594
      %v1784 = vunpack.c.l.b16 %v1595
      %v1785 = vunpack.c.h.b16 %v1595
      %v1786 = vunpack.c.l.b16 %v1596
      %v1787 = vunpack.c.h.b16 %v1596
      %v1788 = vunpack.c.l.b16 %v1597
      %v1789 = vunpack.c.h.b16 %v1597
      %v1790 = vpack.c.b16 %v1662, %v1662
      %v1791 = vpack.c.b16 %v1663, %v1663
      %v1792 = vpack.c.b16 %v1664, %v1664
      %v1793 = vpack.c.b16 %v1665, %v1665
      %v1794 = vpack.c.b16 %v1666, %v1666
      %v1795 = vpack.c.b16 %v1667, %v1667
      %v1796 = vpack.c.b16 %v1668, %v1668
      %v1797 = vpack.c.b16 %v1669, %v1669
      %v1798 = vpack.c.b16 %v1670, %v1670
      %v1799 = vpack.c.b16 %v1671, %v1671
      %v1800 = vpack.c.b16 %v1672, %v1672
      %v1801 = vpack.c.b16 %v1673, %v1673
      %v1802 = vpack.c.b16 %v1674, %v1674
      %v1803 = vpack.c.b16 %v1675, %v1675
      %v1804 = vpack.c.b16 %v1676, %v1676
      %v1805 = vpack.c.b16 %v1677, %v1677
      %v1806 = vpack.c.b16 %v1678, %v1678
      %v1807 = vpack.c.b16 %v1679, %v1679
      %v1808 = vpack.c.b16 %v1680, %v1680
      %v1809 = vpack.c.b16 %v1681, %v1681
      %v1810 = vpack.c.b16 %v1682, %v1682
      %v1811 = vpack.c.b16 %v1683, %v1683
      %v1812 = vpack.c.b16 %v1684, %v1684
      %v1813 = vpack.c.b16 %v1685, %v1685
      %v1814 = vpack.c.b16 %v1686, %v1686
      %v1815 = vpack.c.b16 %v1687, %v1687
      %v1816 = vpack.c.b16 %v1688, %v1688
      %v1817 = vpack.c.b16 %v1689, %v1689
      %v1818 = vpack.c.b16 %v1690, %v1690
      %v1819 = vpack.c.b16 %v1691, %v1691
      %v1820 = vpack.c.b16 %v1692, %v1692
      %v1821 = vpack.c.b16 %v1693, %v1693
      %v1822 = vpack.c.b16 %v1694, %v1694
      %v1823 = vpack.c.b16 %v1695, %v1695
      %v1824 = vpack.c.b16 %v1696, %v1696
      %v1825 = vpack.c.b16 %v1697, %v1697
      %v1826 = vpack.c.b16 %v1698, %v1698
      %v1827 = vpack.c.b16 %v1699, %v1699
      %v1828 = vpack.c.b16 %v1700, %v1700
      %v1829 = vpack.c.b16 %v1701, %v1701
      %v1830 = vpack.c.b16 %v1702, %v1702
      %v1831 = vpack.c.b16 %v1703, %v1703
      %v1832 = vpack.c.b16 %v1704, %v1704
      %v1833 = vpack.c.b16 %v1705, %v1705
      %v1834 = vpack.c.b16 %v1706, %v1706
      %v1835 = vpack.c.b16 %v1707, %v1707
      %v1836 = vpack.c.b16 %v1708, %v1708
      %v1837 = vpack.c.b16 %v1709, %v1709
      %v1838 = vpack.c.b16 %v1710, %v1710
      %v1839 = vpack.c.b16 %v1711, %v1711
      %v1840 = vpack.c.b16 %v1712, %v1712
      %v1841 = vpack.c.b16 %v1713, %v1713
      %v1842 = vpack.c.b16 %v1714, %v1714
      %v1843 = vpack.c.b16 %v1715, %v1715
      %v1844 = vpack.c.b16 %v1716, %v1716
      %v1845 = vpack.c.b16 %v1717, %v1717
      %v1846 = vpack.c.b16 %v1718, %v1718
      %v1847 = vpack.c.b16 %v1719, %v1719
      %v1848 = vpack.c.b16 %v1720, %v1720
      %v1849 = vpack.c.b16 %v1721, %v1721
      %v1850 = vpack.c.b16 %v1722, %v1722
      %v1851 = vpack.c.b16 %v1723, %v1723
      %v1852 = vpack.c.b16 %v1724, %v1724
      %v1853 = vpack.c.b16 %v1725, %v1725
      %v1854 = vpack.c.b16 %v1726, %v1726
      %v1855 = vpack.c.b16 %v1727, %v1727
      %v1856 = vpack.c.b16 %v1728, %v1728
      %v1857 = vpack.c.b16 %v1729, %v1729
      %v1858 = vpack.c.b16 %v1730, %v1730
      %v1859 = vpack.c.b16 %v1731, %v1731
      %v1860 = vpack.c.b16 %v1732, %v1732
      %v1861 = vpack.c.b16 %v1733, %v1733
      %v1862 = vpack.c.b16 %v1734, %v1734
      %v1863 = vpack.c.b16 %v1735, %v1735
      %v1864 = vpack.c.b16 %v1736, %v1736
      %v1865 = vpack.c.b16 %v1737, %v1737
      %v1866 = vpack.c.b16 %v1738, %v1738
      %v1867 = vpack.c.b16 %v1739, %v1739
      %v1868 = vpack.c.b16 %v1740, %v1740
      %v1869 = vpack.c.b16 %v1741, %v1741
      %v1870 = vpack.c.b16 %v1742, %v1742
      %v1871 = vpack.c.b16 %v1743, %v1743
      %v1872 = vpack.c.b16 %v1744, %v1744
      %v1873 = vpack.c.b16 %v1745, %v1745
      %v1874 = vpack.c.b16 %v1746, %v1746
      %v1875 = vpack.c.b16 %v1747, %v1747
      %v1876 = vpack.c.b16 %v1748, %v1748
      %v1877 = vpack.c.b16 %v1749, %v1749
      %v1878 = vpack.c.b16 %v1750, %v1750
      %v1879 = vpack.c.b16 %v1751, %v1751
      %v1880 = vpack.c.b16 %v1752, %v1752
      %v1881 = vpack.c.b16 %v1753, %v1753
      %v1882 = vpack.c.b16 %v1754, %v1754
      %v1883 = vpack.c.b16 %v1755, %v1755
      %v1884 = vpack.c.b16 %v1756, %v1756
      %v1885 = vpack.c.b16 %v1757, %v1757
      %v1886 = vpack.c.b16 %v1758, %v1758
      %v1887 = vpack.c.b16 %v1759, %v1759
      %v1888 = vpack.c.b16 %v1760, %v1760
      %v1889 = vpack.c.b16 %v1761, %v1761
      %v1890 = vpack.c.b16 %v1762, %v1762
      %v1891 = vpack.c.b16 %v1763, %v1763
      %v1892 = vpack.c.b16 %v1764, %v1764
      %v1893 = vpack.c.b16 %v1765, %v1765
      %v1894 = vpack.c.b16 %v1766, %v1766
      %v1895 = vpack.c.b16 %v1767, %v1767
      %v1896 = vpack.c.b16 %v1768, %v1768
      %v1897 = vpack.c.b16 %v1769, %v1769
      %v1898 = vpack.c.b16 %v1770, %v1770
      %v1899 = vpack.c.b16 %v1771, %v1771
      %v1900 = vpack.c.b16 %v1772, %v1772
      %v1901 = vpack.c.b16 %v1773, %v1773
      %v1902 = vpack.c.b16 %v1774, %v1774
      %v1903 = vpack.c.b16 %v1775, %v1775
      %v1904 = vpack.c.b16 %v1776, %v1776
      %v1905 = vpack.c.b16 %v1777, %v1777
      %v1906 = vpack.c.b16 %v1778, %v1778
      %v1907 = vpack.c.b16 %v1779, %v1779
      %v1908 = vpack.c.b16 %v1780, %v1780
      %v1909 = vpack.c.b16 %v1781, %v1781
      %v1910 = vpack.c.b16 %v1782, %v1782
      %v1911 = vpack.c.b16 %v1783, %v1783
      %v1912 = vpack.c.b16 %v1784, %v1784
      %v1913 = vpack.c.b16 %v1785, %v1785
      %v1914 = vpack.c.b16 %v1786, %v1786
      %v1915 = vpack.c.b16 %v1787, %v1787
      %v1916 = vpack.c.b16 %v1788, %v1788
      %v1917 = vpack.c.b16 %v1789, %v1789
      %2046 = vst [vmem:[%s201] sm:$0xf] %v1790
      %2047 = vst [vmem:[%s201 + $0x4] sm:$0xf] %v1791
      %2048 = vst [vmem:[%s201 + $0x8] sm:$0xf] %v1792
      %2049 = vst [vmem:[%s201 + $0xc] sm:$0xf] %v1793
      %2050 = vst [vmem:[%s201 + $0x10] sm:$0xf] %v1794
      %2051 = vst [vmem:[%s201 + $0x14] sm:$0xf] %v1795
      %2052 = vst [vmem:[%s201 + $0x18] sm:$0xf] %v1796
      %2053 = vst [vmem:[%s201 + $0x1c] sm:$0xf] %v1797
      %2054 = vst [vmem:[%s201 + $0x20] sm:$0xf] %v1798
      %2055 = vst [vmem:[%s201 + $0x24] sm:$0xf] %v1799
      %2056 = vst [vmem:[%s201 + $0x28] sm:$0xf] %v1800
      %2057 = vst [vmem:[%s201 + $0x2c] sm:$0xf] %v1801
      %2058 = vst [vmem:[%s201 + $0x30] sm:$0xf] %v1802
      %2059 = vst [vmem:[%s201 + $0x34] sm:$0xf] %v1803
      %2060 = vst [vmem:[%s201 + $0x38] sm:$0xf] %v1804
      %2061 = vst [vmem:[%s201 + $0x3c] sm:$0xf] %v1805
      %2062 = vst [vmem:[%s201 + $0x40] sm:$0xf] %v1806
      %2063 = vst [vmem:[%s201 + $0x44] sm:$0xf] %v1807
      %2064 = vst [vmem:[%s201 + $0x48] sm:$0xf] %v1808
      %2065 = vst [vmem:[%s201 + $0x4c] sm:$0xf] %v1809
      %2066 = vst [vmem:[%s201 + $0x50] sm:$0xf] %v1810
      %2067 = vst [vmem:[%s201 + $0x54] sm:$0xf] %v1811
      %2068 = vst [vmem:[%s201 + $0x58] sm:$0xf] %v1812
      %2069 = vst [vmem:[%s201 + $0x5c] sm:$0xf] %v1813
      %2070 = vst [vmem:[%s201 + $0x60] sm:$0xf] %v1814
      %2071 = vst [vmem:[%s201 + $0x64] sm:$0xf] %v1815
      %2072 = vst [vmem:[%s201 + $0x68] sm:$0xf] %v1816
      %2073 = vst [vmem:[%s201 + $0x6c] sm:$0xf] %v1817
      %2074 = vst [vmem:[%s201 + $0x70] sm:$0xf] %v1818
      %2075 = vst [vmem:[%s201 + $0x74] sm:$0xf] %v1819
      %2076 = vst [vmem:[%s201 + $0x78] sm:$0xf] %v1820
      %2077 = vst [vmem:[%s201 + $0x7c] sm:$0xf] %v1821
      %2078 = vst [vmem:[%s201 + $0x80] sm:$0xf] %v1822
      %2079 = vst [vmem:[%s201 + $0x84] sm:$0xf] %v1823
      %2080 = vst [vmem:[%s201 + $0x88] sm:$0xf] %v1824
      %2081 = vst [vmem:[%s201 + $0x8c] sm:$0xf] %v1825
      %2082 = vst [vmem:[%s201 + $0x90] sm:$0xf] %v1826
      %2083 = vst [vmem:[%s201 + $0x94] sm:$0xf] %v1827
      %2084 = vst [vmem:[%s201 + $0x98] sm:$0xf] %v1828
      %2085 = vst [vmem:[%s201 + $0x9c] sm:$0xf] %v1829
      %2086 = vst [vmem:[%s201 + $0xa0] sm:$0xf] %v1830
      %2087 = vst [vmem:[%s201 + $0xa4] sm:$0xf] %v1831
      %2088 = vst [vmem:[%s201 + $0xa8] sm:$0xf] %v1832
      %2089 = vst [vmem:[%s201 + $0xac] sm:$0xf] %v1833
      %2090 = vst [vmem:[%s201 + $0xb0] sm:$0xf] %v1834
      %2091 = vst [vmem:[%s201 + $0xb4] sm:$0xf] %v1835
      %2092 = vst [vmem:[%s201 + $0xb8] sm:$0xf] %v1836
      %2093 = vst [vmem:[%s201 + $0xbc] sm:$0xf] %v1837
      %2094 = vst [vmem:[%s201 + $0xc0] sm:$0xf] %v1838
      %2095 = vst [vmem:[%s201 + $0xc4] sm:$0xf] %v1839
      %2096 = vst [vmem:[%s201 + $0xc8] sm:$0xf] %v1840
      %2097 = vst [vmem:[%s201 + $0xcc] sm:$0xf] %v1841
      %2098 = vst [vmem:[%s201 + $0xd0] sm:$0xf] %v1842
      %2099 = vst [vmem:[%s201 + $0xd4] sm:$0xf] %v1843
      %2100 = vst [vmem:[%s201 + $0xd8] sm:$0xf] %v1844
      %2101 = vst [vmem:[%s201 + $0xdc] sm:$0xf] %v1845
      %2102 = vst [vmem:[%s201 + $0xe0] sm:$0xf] %v1846
      %2103 = vst [vmem:[%s201 + $0xe4] sm:$0xf] %v1847
      %2104 = vst [vmem:[%s201 + $0xe8] sm:$0xf] %v1848
      %2105 = vst [vmem:[%s201 + $0xec] sm:$0xf] %v1849
      %2106 = vst [vmem:[%s201 + $0xf0] sm:$0xf] %v1850
      %2107 = vst [vmem:[%s201 + $0xf4] sm:$0xf] %v1851
      %2108 = vst [vmem:[%s201 + $0xf8] sm:$0xf] %v1852
      %2109 = vst [vmem:[%s201 + $0xfc] sm:$0xf] %v1853
      %2110 = vst [vmem:[%s201 + $0x100] sm:$0xf] %v1854
      %2111 = vst [vmem:[%s201 + $0x104] sm:$0xf] %v1855
      %2112 = vst [vmem:[%s201 + $0x108] sm:$0xf] %v1856
      %2113 = vst [vmem:[%s201 + $0x10c] sm:$0xf] %v1857
      %2114 = vst [vmem:[%s201 + $0x110] sm:$0xf] %v1858
      %2115 = vst [vmem:[%s201 + $0x114] sm:$0xf] %v1859
      %2116 = vst [vmem:[%s201 + $0x118] sm:$0xf] %v1860
      %2117 = vst [vmem:[%s201 + $0x11c] sm:$0xf] %v1861
      %2118 = vst [vmem:[%s201 + $0x120] sm:$0xf] %v1862
      %2119 = vst [vmem:[%s201 + $0x124] sm:$0xf] %v1863
      %2120 = vst [vmem:[%s201 + $0x128] sm:$0xf] %v1864
      %2121 = vst [vmem:[%s201 + $0x12c] sm:$0xf] %v1865
      %2122 = vst [vmem:[%s201 + $0x130] sm:$0xf] %v1866
      %2123 = vst [vmem:[%s201 + $0x134] sm:$0xf] %v1867
      %2124 = vst [vmem:[%s201 + $0x138] sm:$0xf] %v1868
      %2125 = vst [vmem:[%s201 + $0x13c] sm:$0xf] %v1869
      %2126 = vst [vmem:[%s201 + $0x140] sm:$0xf] %v1870
      %2127 = vst [vmem:[%s201 + $0x144] sm:$0xf] %v1871
      %2128 = vst [vmem:[%s201 + $0x148] sm:$0xf] %v1872
      %2129 = vst [vmem:[%s201 + $0x14c] sm:$0xf] %v1873
      %2130 = vst [vmem:[%s201 + $0x150] sm:$0xf] %v1874
      %2131 = vst [vmem:[%s201 + $0x154] sm:$0xf] %v1875
      %2132 = vst [vmem:[%s201 + $0x158] sm:$0xf] %v1876
      %2133 = vst [vmem:[%s201 + $0x15c] sm:$0xf] %v1877
      %2134 = vst [vmem:[%s201 + $0x160] sm:$0xf] %v1878
      %2135 = vst [vmem:[%s201 + $0x164] sm:$0xf] %v1879
      %2136 = vst [vmem:[%s201 + $0x168] sm:$0xf] %v1880
      %2137 = vst [vmem:[%s201 + $0x16c] sm:$0xf] %v1881
      %2138 = vst [vmem:[%s201 + $0x170] sm:$0xf] %v1882
      %2139 = vst [vmem:[%s201 + $0x174] sm:$0xf] %v1883
      %2140 = vst [vmem:[%s201 + $0x178] sm:$0xf] %v1884
      %2141 = vst [vmem:[%s201 + $0x17c] sm:$0xf] %v1885
      %2142 = vst [vmem:[%s201 + $0x180] sm:$0xf] %v1886
      %2143 = vst [vmem:[%s201 + $0x184] sm:$0xf] %v1887
      %2144 = vst [vmem:[%s201 + $0x188] sm:$0xf] %v1888
      %2145 = vst [vmem:[%s201 + $0x18c] sm:$0xf] %v1889
      %2146 = vst [vmem:[%s201 + $0x190] sm:$0xf] %v1890
      %2147 = vst [vmem:[%s201 + $0x194] sm:$0xf] %v1891
      %2148 = vst [vmem:[%s201 + $0x198] sm:$0xf] %v1892
      %2149 = vst [vmem:[%s201 + $0x19c] sm:$0xf] %v1893
      %2150 = vst [vmem:[%s201 + $0x1a0] sm:$0xf] %v1894
      %2151 = vst [vmem:[%s201 + $0x1a4] sm:$0xf] %v1895
      %2152 = vst [vmem:[%s201 + $0x1a8] sm:$0xf] %v1896
      %2153 = vst [vmem:[%s201 + $0x1ac] sm:$0xf] %v1897
      %2154 = vst [vmem:[%s201 + $0x1b0] sm:$0xf] %v1898
      %2155 = vst [vmem:[%s201 + $0x1b4] sm:$0xf] %v1899
      %2156 = vst [vmem:[%s201 + $0x1b8] sm:$0xf] %v1900
      %2157 = vst [vmem:[%s201 + $0x1bc] sm:$0xf] %v1901
      %2158 = vst [vmem:[%s201 + $0x1c0] sm:$0xf] %v1902
      %2159 = vst [vmem:[%s201 + $0x1c4] sm:$0xf] %v1903
      %2160 = vst [vmem:[%s201 + $0x1c8] sm:$0xf] %v1904
      %2161 = vst [vmem:[%s201 + $0x1cc] sm:$0xf] %v1905
      %2162 = vst [vmem:[%s201 + $0x1d0] sm:$0xf] %v1906
      %2163 = vst [vmem:[%s201 + $0x1d4] sm:$0xf] %v1907
      %2164 = vst [vmem:[%s201 + $0x1d8] sm:$0xf] %v1908
      %2165 = vst [vmem:[%s201 + $0x1dc] sm:$0xf] %v1909
      %2166 = vst [vmem:[%s201 + $0x1e0] sm:$0xf] %v1910
      %2167 = vst [vmem:[%s201 + $0x1e4] sm:$0xf] %v1911
      %2168 = vst [vmem:[%s201 + $0x1e8] sm:$0xf] %v1912
      %2169 = vst [vmem:[%s201 + $0x1ec] sm:$0xf] %v1913
      %2170 = vst [vmem:[%s201 + $0x1f0] sm:$0xf] %v1914
      %2171 = vst [vmem:[%s201 + $0x1f4] sm:$0xf] %v1915
      %2172 = vst [vmem:[%s201 + $0x1f8] sm:$0xf] %v1916
      %2173 = vst [vmem:[%s201 + $0x1fc] sm:$0xf] %v1917
      %s2174 = smul.u32 128, %s18
      %p2175 = scmp.lt.s32.totalorder %s17, 3
      %s2176 = scalar_select %p2175, %s17, 3
      %p2177 = scmp.lt.s32.totalorder %s2174, 255
      %s2178 = scalar_select %p2177, %s2174, 255
      %s2179 = smul.addr %s2176, 256
      %s2180 = sadd.s32 %s2178, %s2179
      %s2181 = smul.addr %s2180, 4
      %s2182 = scalar_lea.vmem %s2, %s2181
      // Predicated region
      $region29: #{generator_forward.9} parent=27 // pred_check
        %p2183 = pneg %p99
      $region30: #{generator_forward.9} parent=27 // pred_check_branch
        %2185 = sbr.rel (%p2183) target = $region32
      $region31: #{generator_forward.9} parent=27 // pred_region
        %s2186 = smul.u32 128, %s18
      $region32: #{generator_forward.9} parent=27 // pred_fallthru
        _
    $region28: #{generator_forward.9} parent=5 // pred_fallthru
      _
    %p2187 = scmp.le.s32.totalorder 2, %s8
    // Predicated region
    $region33: #{generator_forward.9} parent=5 // pred_check
      %p2188 = pneg %p2187
    $region34: #{generator_forward.9} parent=5 // pred_check_branch
      %2190 = sbr.rel (%p2188) target = $region36
    $region35: #{generator_forward.9} parent=5 // pred_region
      %s2191 = ssub.s32 %s8, 2
      // Predicated region
      $region37: #{generator_forward.9} parent=35 // pred_check
        %p2192 = pneg %p105
      $region38: #{generator_forward.9} parent=35 // pred_check_branch
        %2194 = sbr.rel (%p2192) target = $region40
      $region39: #{generator_forward.9} parent=35 // pred_region
        %s2195 = smul.u32 128, %s20
        %p2196 = scmp.lt.s32.totalorder %s19, 3
        %s2197 = scalar_select %p2196, %s19, 3
        %p2198 = scmp.lt.s32.totalorder %s2195, 255
        %s2199 = scalar_select %p2198, %s2195, 255
        %s2200 = smul.addr %s2197, 256
        %s2201 = sadd.s32 %s2199, %s2200
        %s2202 = smul.addr %s2201, 4
        %s2203 = scalar_lea.vmem %s2, %s2202
      $region40: #{generator_forward.9} parent=35 // pred_fallthru
        _
    $region36: #{generator_forward.9} parent=5 // pred_fallthru
      _
  $region6: #{generator_forward.9} parent=0 // loop_footer
    %s12 = sadd.s32 1, %s8
  $region7: #{generator_forward.9} parent=0 // loop_footer_branch
    %7 = sbr.rel target = $region3
  $region8: #{generator_forward.9} parent=0 // loop_exit
    _

</llo_original>
